<compile_context>
chip_gen: v7x
topology: tpu7x:2x2x1
jax: 0.10.0
libtpu: 0.0.40
codegen_flags: <defaults>
</compile_context>

<pallas_src>
import functools

import jax
import jax.numpy as jnp
from jax.experimental import pallas as pl
from jax.experimental.pallas import tpu as pltpu


def _residual_cnn_kernel(x_ref, ln1w_ref, ln1b_ref, w1_ref, b1_ref,
                         ln2w_ref, ln2b_ref, w2_ref, b2_ref, out_ref,
                         xs_ref, *, k, cout, T, Bblk, eps):
    """Fused forward for one block of `Bblk` batch elements.

    x_ref, out_ref : (Bblk, C, F, T)  VMEM  (PyTorch NCHW block, unpadded)
    ln*_ref        : (F, 1)           VMEM  LayerNorm gamma / beta
    w*_ref         : (Cout*Cin*k*k,)  SMEM  conv weights, flat PyTorch OIHW
    b*_ref         : (Cout,)          SMEM  conv bias
    xs_ref         : (C, F, Lp)       VMEM  scratch: batch folded onto lanes,
                                            Lp = round_up(Bblk*T, 128)
    """
    _, C, F, _ = x_ref.shape
    Lp = xs_ref.shape[-1]
    p = k // 2
    n_valid = Bblk * T

    # ---- Fold the Bblk batch items onto the lane axis (VMEM -> VMEM). -----
    if Lp != n_valid:                 # lane padding exists: make it finite
        xs_ref[...] = jnp.zeros(xs_ref.shape, jnp.float32)
    for b in range(Bblk):
        for c in range(C):
            xs_ref[c, :, pl.ds(b * T, T)] = x_ref[b, c]

    # ---- Tap masks (built once, hoisted out of all loops). ----------------
    f_idx = jax.lax.broadcasted_iota(jnp.int32, (F, Lp), 0)
    l_idx = jax.lax.broadcasted_iota(jnp.int32, (F, Lp), 1)

    def lane_mask(dj):
        # Valid iff column t+dj stays inside its own length-T batch segment
        # (also guards the circular lane-roll wrap and batch cross-talk).
        m = None
        for s in range(Bblk):
            lo = s * T + (T - dj if dj > 0 else 0)
            hi = s * T + (T if dj > 0 else -dj)
            c = (l_idx < lo) | (l_idx >= hi)
            m = c if m is None else (m & c)
        return m

    def row_premask(di):
        # Zero the F rows that would wrap around in the sublane roll.
        return (f_idx >= di) if di > 0 else (f_idx < F + di)

    lane_masks = {dj: lane_mask(dj) for dj in range(-p, p + 1) if dj != 0}
    row_masks = {di: row_premask(di) for di in range(-p, p + 1) if di != 0}

    def lane_shift(v, dj):            # out[:, l] = v[:, l + dj] (in-segment)
        if dj == 0:
            return v
        s = pltpu.roll(v, shift=(-dj) % Lp, axis=1)      # lane roll (XLU)
        return jnp.where(lane_masks[dj], s, 0.0)

    def row_shift(v, di):             # out[f, :] = v[f + di, :], zero at edges
        if di == 0:
            return v
        s = jnp.where(row_masks[di], v, 0.0)             # pre-mask wrap rows
        return pltpu.roll(s, shift=(-di) % F, axis=0)    # sublane roll (XLU)

    # ---- LayerNorm(n_feats) + ReLU on (F, Lp) planes. ---------------------
    def layer_norm_relu(planes, g_ref, be_ref):
        g = g_ref[...]                # (F, 1), broadcasts along lanes
        be = be_ref[...]
        out = []
        for v in planes:
            mean = jnp.mean(v, axis=0, keepdims=True)
            cent = v - mean
            var = jnp.mean(cent * cent, axis=0, keepdims=True)
            out.append(jnp.maximum(
                cent * jax.lax.rsqrt(var + eps) * g + be, 0.0))
        return out

    # ---- kxk conv as unrolled VPU FMAs with factored, shared tap planes. --
    def conv2d(planes, w_ref_, b_ref_, add_bias):
        cin = len(planes)
        acc = [None] * cout
        for c in range(cin):
            for dj in range(-p, p + 1):
                s_dj = lane_shift(planes[c], dj)   # shared across di and o
                for di in range(-p, p + 1):
                    tap = row_shift(s_dj, di)      # shared across all o
                    i, j = di + p, dj + p
                    for o in range(cout):
                        w = w_ref_[((o * cin + c) * k + i) * k + j]  # SMEM
                        term = w * tap
                        acc[o] = term if acc[o] is None else acc[o] + term
        if add_bias:
            return [acc[o] + b_ref_[o] for o in range(cout)]
        return acc

    h = layer_norm_relu([xs_ref[c] for c in range(C)], ln1w_ref, ln1b_ref)
    # dropout1: identity (inference mode).
    # conv1 bias skipped: a per-output-channel constant is exactly removed by
    # LayerNorm2's mean subtraction over n_feats (b1_ref intentionally unused).
    h = conv2d(h, w1_ref, b1_ref, add_bias=False)

    h = layer_norm_relu(h, ln2w_ref, ln2b_ref)
    # dropout2: identity (inference mode).
    h = conv2d(h, w2_ref, b2_ref, add_bias=True)

    # ---- Unfold lanes back to (Bblk, C, F, T) + residual add. -------------
    for o in range(cout):
        xs_ref[o] = h[o]              # stage through VMEM; frees h's vregs
    for b in range(Bblk):
        for o in range(cout):
            out_ref[b, o] = xs_ref[o, :, pl.ds(b * T, T)] + x_ref[b, o]


def _pick_batch_block(B, C, F, T, *, itemsize=4, target_bytes=4 * 2**20):
    """Largest divisor of B whose (Bblk, C, F, T) block fits the byte budget."""
    per_batch = max(1, C * F * T * itemsize)
    best = 1
    for d in range(1, B + 1):
        if B % d == 0 and d * per_batch <= target_bytes:
            best = d
    return best


def residual_cnn_forward(x_nchw, params, *, kernel_size):
    """x_nchw: (B, C, n_feats, time) float32, PyTorch NCHW convention."""
    B, C, F, T = x_nchw.shape
    k = kernel_size
    O = params["w1"].shape[0]
    assert O == C, "residual add requires in_channels == out_channels"

    Bblk = _pick_batch_block(B, C, F, T)
    nb = B // Bblk
    LANE = 128
    Lp = ((Bblk * T + LANE - 1) // LANE) * LANE

    x = x_nchw.astype(jnp.float32)
    w1 = params["w1"].reshape(-1).astype(jnp.float32)    # flat OIHW
    w2 = params["w2"].reshape(-1).astype(jnp.float32)
    b1 = params["b1"].astype(jnp.float32)
    b2 = params["b2"].astype(jnp.float32)
    ln1w = params["ln1_w"].reshape(F, 1).astype(jnp.float32)
    ln1b = params["ln1_b"].reshape(F, 1).astype(jnp.float32)
    ln2w = params["ln2_w"].reshape(F, 1).astype(jnp.float32)
    ln2b = params["ln2_b"].reshape(F, 1).astype(jnp.float32)

    kernel = functools.partial(_residual_cnn_kernel, k=k, cout=O, T=T,
                               Bblk=Bblk, eps=1e-5)

    vmem = pl.BlockSpec(memory_space=pltpu.MemorySpace.VMEM)
    smem = pl.BlockSpec(memory_space=pltpu.MemorySpace.SMEM)
    block = pl.BlockSpec((Bblk, C, F, T), lambda g: (g, 0, 0, 0))

    block_bytes = Bblk * C * F * T * 4
    scratch_bytes = C * F * Lp * 4
    est = 4 * block_bytes + scratch_bytes + 2 * 2**20   # in+out, double-buffered
    vmem_limit = int(min(max(2 * est, 16 * 2**20), 48 * 2**20))

    out = pl.pallas_call(
        kernel,
        out_shape=jax.ShapeDtypeStruct((B, C, F, T), jnp.float32),
        grid=(nb,),
        in_specs=[block, vmem, vmem, smem, smem, vmem, vmem, smem, smem],
        out_specs=block,
        scratch_shapes=[pltpu.VMEM((C, F, Lp), jnp.float32)],
        compiler_params=pltpu.CompilerParams(
            dimension_semantics=("parallel",),
            vmem_limit_bytes=vmem_limit),
    )(x, ln1w, ln1b, w1, b1, ln2w, ln2b, w2, b2)
    return out


def _reference(x, params, k):
    """Pure-JAX reference (NCHW), mirrors the PyTorch forward in eval mode."""
    p = k // 2
    eps = 1e-5

    def ln(v, w, b):
        vt = jnp.transpose(v, (0, 1, 3, 2))           # (B, C, T, F)
        m = vt.mean(-1, keepdims=True)
        var = ((vt - m) ** 2).mean(-1, keepdims=True)
        out = (vt - m) / jnp.sqrt(var + eps) * w + b
        return jnp.transpose(out, (0, 1, 3, 2))

    def conv(v, w, b):
        y = jax.lax.conv_general_dilated(
            v, w, (1, 1), [(p, p), (p, p)],
            dimension_numbers=("NCHW", "OIHW", "NCHW"))
        return y + b[None, :, None, None]

    res = x
    h = jnp.maximum(ln(x, params["ln1_w"], params["ln1_b"]), 0.0)
    h = conv(h, params["w1"], params["b1"])
    h = jnp.maximum(ln(h, params["ln2_w"], params["ln2_b"]), 0.0)
    h = conv(h, params["w2"], params["b2"])
    return h + res


if __name__ == "__main__":
    # ResidualCNN(in_channels=4, out_channels=4, kernel=3, stride=1,
    #             dropout=0.0, n_feats=16); input x: (B=2, C=4, n_feats=16, time=16)
    B, C, F, T, K = 2, 4, 16, 16, 3

    key = jax.random.PRNGKey(0)
    k1, k2, k3, k4, k5, k6, k7, k8, kx = jax.random.split(key, 9)
    params = {
        "w1": 0.1 * jax.random.normal(k1, (C, C, K, K), jnp.float32),
        "b1": 0.1 * jax.random.normal(k2, (C,), jnp.float32),
        "w2": 0.1 * jax.random.normal(k3, (C, C, K, K), jnp.float32),
        "b2": 0.1 * jax.random.normal(k4, (C,), jnp.float32),
        "ln1_w": 1.0 + 0.1 * jax.random.normal(k5, (F,), jnp.float32),
        "ln1_b": 0.1 * jax.random.normal(k6, (F,), jnp.float32),
        "ln2_w": 1.0 + 0.1 * jax.random.normal(k7, (F,), jnp.float32),
        "ln2_b": 0.1 * jax.random.normal(k8, (F,), jnp.float32),
    }

    x = jax.random.normal(kx, (B, C, F, T), jnp.float32)

    out = jax.block_until_ready(residual_cnn_forward(x, params, kernel_size=K))
    ref = jax.block_until_ready(_reference(x, params, K))

    assert out.shape == (B, C, F, T)
    assert jnp.allclose(out, ref, atol=1e-4, rtol=1e-4), (
        float(jnp.max(jnp.abs(out - ref))))
    print("KERNEL_OK")
</pallas_src>

<mosaic_0001>
module attributes {stable_mosaic.version = 11 : i64} {
  func.func @_residual_cnn_kernel(%arg0: i32, %arg1: memref<2x4x16x16xf32, #tpu.memory_space<vmem>>, %arg2: memref<16x1xf32, #tpu.memory_space<vmem>>, %arg3: memref<16x1xf32, #tpu.memory_space<vmem>>, %arg4: memref<144xf32, #tpu.memory_space<smem>>, %arg5: memref<4xf32, #tpu.memory_space<smem>>, %arg6: memref<16x1xf32, #tpu.memory_space<vmem>>, %arg7: memref<16x1xf32, #tpu.memory_space<vmem>>, %arg8: memref<144xf32, #tpu.memory_space<smem>>, %arg9: memref<4xf32, #tpu.memory_space<smem>>, %arg10: memref<2x4x16x16xf32, #tpu.memory_space<vmem>>, %arg11: memref<4x16x128xf32, #tpu.memory_space<vmem>>) attributes {dimension_semantics = [#tpu.dimension_semantics<parallel>], iteration_bounds = array<i64: 1>, scalar_prefetch = 0 : i64, scratch_operands = 1 : i64, tpu.core_type = #tpu.core_type<tc>, window_params = [{transform_indices = @transform_0, window_bounds = array<i64: 2, 4, 16, 16>}, {pipeline_mode = #tpu.pipeline_mode<synchronous>, transform_indices = @transform_1, window_bounds = array<i64: 16, 1>}, {pipeline_mode = #tpu.pipeline_mode<synchronous>, transform_indices = @transform_2, window_bounds = array<i64: 16, 1>}, {transform_indices = @transform_3, window_bounds = array<i64: 144>}, {transform_indices = @transform_4, window_bounds = array<i64: 4>}, {pipeline_mode = #tpu.pipeline_mode<synchronous>, transform_indices = @transform_5, window_bounds = array<i64: 16, 1>}, {pipeline_mode = #tpu.pipeline_mode<synchronous>, transform_indices = @transform_6, window_bounds = array<i64: 16, 1>}, {transform_indices = @transform_7, window_bounds = array<i64: 144>}, {transform_indices = @transform_8, window_bounds = array<i64: 4>}, {transform_indices = @transform_9, window_bounds = array<i64: 2, 4, 16, 16>}]} {
    %cst = arith.constant 0.000000e+00 : f32
    %0 = vector.broadcast %cst : f32 to vector<4x16x128xf32>
    %c0 = arith.constant 0 : index
    %c0_0 = arith.constant 0 : index
    %c0_1 = arith.constant 0 : index
    %1 = vector.load %arg11[%c0, %c0_0, %c0_1] : memref<4x16x128xf32, #tpu.memory_space<vmem>>, vector<4x16x128xf32>
    tpu.vector_store %arg11[%c0, %c0_0, %c0_1], %0 {strides = array<i32>} : memref<4x16x128xf32, #tpu.memory_space<vmem>>, vector<4x16x128xf32>,
    %c0_2 = arith.constant 0 : index
    %c0_3 = arith.constant 0 : index
    %c0_4 = arith.constant 0 : index
    %c0_5 = arith.constant 0 : index
    %2 = vector.load %arg1[%c0_2, %c0_3, %c0_4, %c0_5] : memref<2x4x16x16xf32, #tpu.memory_space<vmem>>, vector<1x1x16x16xf32>
    %3 = vector.shape_cast %2 : vector<1x1x16x16xf32> to vector<16x16xf32>
    %c0_6 = arith.constant 0 : index
    %c0_7 = arith.constant 0 : index
    %c0_8 = arith.constant 0 : index
    %4 = vector.load %arg11[%c0_6, %c0_7, %c0_8] : memref<4x16x128xf32, #tpu.memory_space<vmem>>, vector<1x16x16xf32>
    %5 = vector.shape_cast %4 : vector<1x16x16xf32> to vector<16x16xf32>
    %6 = vector.shape_cast %3 : vector<16x16xf32> to vector<1x16x16xf32>
    tpu.vector_store %arg11[%c0_6, %c0_7, %c0_8], %6 {strides = array<i32>} : memref<4x16x128xf32, #tpu.memory_space<vmem>>, vector<1x16x16xf32>,
    %c0_9 = arith.constant 0 : index
    %c1 = arith.constant 1 : index
    %c0_10 = arith.constant 0 : index
    %c0_11 = arith.constant 0 : index
    %7 = vector.load %arg1[%c0_9, %c1, %c0_10, %c0_11] : memref<2x4x16x16xf32, #tpu.memory_space<vmem>>, vector<1x1x16x16xf32>
    %8 = vector.shape_cast %7 : vector<1x1x16x16xf32> to vector<16x16xf32>
    %c1_12 = arith.constant 1 : index
    %c0_13 = arith.constant 0 : index
    %c0_14 = arith.constant 0 : index
    %9 = vector.load %arg11[%c1_12, %c0_13, %c0_14] : memref<4x16x128xf32, #tpu.memory_space<vmem>>, vector<1x16x16xf32>
    %10 = vector.shape_cast %9 : vector<1x16x16xf32> to vector<16x16xf32>
    %11 = vector.shape_cast %8 : vector<16x16xf32> to vector<1x16x16xf32>
    tpu.vector_store %arg11[%c1_12, %c0_13, %c0_14], %11 {strides = array<i32>} : memref<4x16x128xf32, #tpu.memory_space<vmem>>, vector<1x16x16xf32>,
    %c0_15 = arith.constant 0 : index
    %c2 = arith.constant 2 : index
    %c0_16 = arith.constant 0 : index
    %c0_17 = arith.constant 0 : index
    %12 = vector.load %arg1[%c0_15, %c2, %c0_16, %c0_17] : memref<2x4x16x16xf32, #tpu.memory_space<vmem>>, vector<1x1x16x16xf32>
    %13 = vector.shape_cast %12 : vector<1x1x16x16xf32> to vector<16x16xf32>
    %c2_18 = arith.constant 2 : index
    %c0_19 = arith.constant 0 : index
    %c0_20 = arith.constant 0 : index
    %14 = vector.load %arg11[%c2_18, %c0_19, %c0_20] : memref<4x16x128xf32, #tpu.memory_space<vmem>>, vector<1x16x16xf32>
    %15 = vector.shape_cast %14 : vector<1x16x16xf32> to vector<16x16xf32>
    %16 = vector.shape_cast %13 : vector<16x16xf32> to vector<1x16x16xf32>
    tpu.vector_store %arg11[%c2_18, %c0_19, %c0_20], %16 {strides = array<i32>} : memref<4x16x128xf32, #tpu.memory_space<vmem>>, vector<1x16x16xf32>,
    %c0_21 = arith.constant 0 : index
    %c3 = arith.constant 3 : index
    %c0_22 = arith.constant 0 : index
    %c0_23 = arith.constant 0 : index
    %17 = vector.load %arg1[%c0_21, %c3, %c0_22, %c0_23] : memref<2x4x16x16xf32, #tpu.memory_space<vmem>>, vector<1x1x16x16xf32>
    %18 = vector.shape_cast %17 : vector<1x1x16x16xf32> to vector<16x16xf32>
    %c3_24 = arith.constant 3 : index
    %c0_25 = arith.constant 0 : index
    %c0_26 = arith.constant 0 : index
    %19 = vector.load %arg11[%c3_24, %c0_25, %c0_26] : memref<4x16x128xf32, #tpu.memory_space<vmem>>, vector<1x16x16xf32>
    %20 = vector.shape_cast %19 : vector<1x16x16xf32> to vector<16x16xf32>
    %21 = vector.shape_cast %18 : vector<16x16xf32> to vector<1x16x16xf32>
    tpu.vector_store %arg11[%c3_24, %c0_25, %c0_26], %21 {strides = array<i32>} : memref<4x16x128xf32, #tpu.memory_space<vmem>>, vector<1x16x16xf32>,
    %c1_27 = arith.constant 1 : index
    %c0_28 = arith.constant 0 : index
    %c0_29 = arith.constant 0 : index
    %c0_30 = arith.constant 0 : index
    %22 = vector.load %arg1[%c1_27, %c0_28, %c0_29, %c0_30] : memref<2x4x16x16xf32, #tpu.memory_space<vmem>>, vector<1x1x16x16xf32>
    %23 = vector.shape_cast %22 : vector<1x1x16x16xf32> to vector<16x16xf32>
    %c0_31 = arith.constant 0 : index
    %c0_32 = arith.constant 0 : index
    %c16 = arith.constant 16 : index
    %24 = vector.load %arg11[%c0_31, %c0_32, %c16] : memref<4x16x128xf32, #tpu.memory_space<vmem>>, vector<1x16x16xf32>
    %25 = vector.shape_cast %24 : vector<1x16x16xf32> to vector<16x16xf32>
    %26 = vector.shape_cast %23 : vector<16x16xf32> to vector<1x16x16xf32>
    tpu.vector_store %arg11[%c0_31, %c0_32, %c16], %26 {strides = array<i32>} : memref<4x16x128xf32, #tpu.memory_space<vmem>>, vector<1x16x16xf32>,
    %c1_33 = arith.constant 1 : index
    %c1_34 = arith.constant 1 : index
    %c0_35 = arith.constant 0 : index
    %c0_36 = arith.constant 0 : index
    %27 = vector.load %arg1[%c1_33, %c1_34, %c0_35, %c0_36] : memref<2x4x16x16xf32, #tpu.memory_space<vmem>>, vector<1x1x16x16xf32>
    %28 = vector.shape_cast %27 : vector<1x1x16x16xf32> to vector<16x16xf32>
    %c1_37 = arith.constant 1 : index
    %c0_38 = arith.constant 0 : index
    %c16_39 = arith.constant 16 : index
    %29 = vector.load %arg11[%c1_37, %c0_38, %c16_39] : memref<4x16x128xf32, #tpu.memory_space<vmem>>, vector<1x16x16xf32>
    %30 = vector.shape_cast %29 : vector<1x16x16xf32> to vector<16x16xf32>
    %31 = vector.shape_cast %28 : vector<16x16xf32> to vector<1x16x16xf32>
    tpu.vector_store %arg11[%c1_37, %c0_38, %c16_39], %31 {strides = array<i32>} : memref<4x16x128xf32, #tpu.memory_space<vmem>>, vector<1x16x16xf32>,
    %c1_40 = arith.constant 1 : index
    %c2_41 = arith.constant 2 : index
    %c0_42 = arith.constant 0 : index
    %c0_43 = arith.constant 0 : index
    %32 = vector.load %arg1[%c1_40, %c2_41, %c0_42, %c0_43] : memref<2x4x16x16xf32, #tpu.memory_space<vmem>>, vector<1x1x16x16xf32>
    %33 = vector.shape_cast %32 : vector<1x1x16x16xf32> to vector<16x16xf32>
    %c2_44 = arith.constant 2 : index
    %c0_45 = arith.constant 0 : index
    %c16_46 = arith.constant 16 : index
    %34 = vector.load %arg11[%c2_44, %c0_45, %c16_46] : memref<4x16x128xf32, #tpu.memory_space<vmem>>, vector<1x16x16xf32>
    %35 = vector.shape_cast %34 : vector<1x16x16xf32> to vector<16x16xf32>
    %36 = vector.shape_cast %33 : vector<16x16xf32> to vector<1x16x16xf32>
    tpu.vector_store %arg11[%c2_44, %c0_45, %c16_46], %36 {strides = array<i32>} : memref<4x16x128xf32, #tpu.memory_space<vmem>>, vector<1x16x16xf32>,
    %c1_47 = arith.constant 1 : index
    %c3_48 = arith.constant 3 : index
    %c0_49 = arith.constant 0 : index
    %c0_50 = arith.constant 0 : index
    %37 = vector.load %arg1[%c1_47, %c3_48, %c0_49, %c0_50] : memref<2x4x16x16xf32, #tpu.memory_space<vmem>>, vector<1x1x16x16xf32>
    %38 = vector.shape_cast %37 : vector<1x1x16x16xf32> to vector<16x16xf32>
    %c3_51 = arith.constant 3 : index
    %c0_52 = arith.constant 0 : index
    %c16_53 = arith.constant 16 : index
    %39 = vector.load %arg11[%c3_51, %c0_52, %c16_53] : memref<4x16x128xf32, #tpu.memory_space<vmem>>, vector<1x16x16xf32>
    %40 = vector.shape_cast %39 : vector<1x16x16xf32> to vector<16x16xf32>
    %41 = vector.shape_cast %38 : vector<16x16xf32> to vector<1x16x16xf32>
    tpu.vector_store %arg11[%c3_51, %c0_52, %c16_53], %41 {strides = array<i32>} : memref<4x16x128xf32, #tpu.memory_space<vmem>>, vector<1x16x16xf32>,
    %42 = tpu.iota {dimensions = array<i32: 0>} : vector<16x128xi32>
    %43 = tpu.iota {dimensions = array<i32: 1>} : vector<16x128xi32>
    %c0_i32 = arith.constant 0 : i32
    %44 = vector.broadcast %c0_i32 : i32 to vector<16x128xi32>
    %45 = arith.cmpi slt, %43, %44 : vector<16x128xi32>
    %c1_i32 = arith.constant 1 : i32
    %46 = vector.broadcast %c1_i32 : i32 to vector<16x128xi32>
    %47 = arith.cmpi sge, %43, %46 : vector<16x128xi32>
    %48 = arith.ori %45, %47 : vector<16x128xi1>
    %c16_i32 = arith.constant 16 : i32
    %49 = vector.broadcast %c16_i32 : i32 to vector<16x128xi32>
    %50 = arith.cmpi slt, %43, %49 : vector<16x128xi32>
    %c17_i32 = arith.constant 17 : i32
    %51 = vector.broadcast %c17_i32 : i32 to vector<16x128xi32>
    %52 = arith.cmpi sge, %43, %51 : vector<16x128xi32>
    %53 = arith.ori %50, %52 : vector<16x128xi1>
    %54 = arith.andi %48, %53 : vector<16x128xi1>
    %c15_i32 = arith.constant 15 : i32
    %55 = vector.broadcast %c15_i32 : i32 to vector<16x128xi32>
    %56 = arith.cmpi slt, %43, %55 : vector<16x128xi32>
    %c16_i32_54 = arith.constant 16 : i32
    %57 = vector.broadcast %c16_i32_54 : i32 to vector<16x128xi32>
    %58 = arith.cmpi sge, %43, %57 : vector<16x128xi32>
    %59 = arith.ori %56, %58 : vector<16x128xi1>
    %c31_i32 = arith.constant 31 : i32
    %60 = vector.broadcast %c31_i32 : i32 to vector<16x128xi32>
    %61 = arith.cmpi slt, %43, %60 : vector<16x128xi32>
    %c32_i32 = arith.constant 32 : i32
    %62 = vector.broadcast %c32_i32 : i32 to vector<16x128xi32>
    %63 = arith.cmpi sge, %43, %62 : vector<16x128xi32>
    %64 = arith.ori %61, %63 : vector<16x128xi1>
    %65 = arith.andi %59, %64 : vector<16x128xi1>
    %c15_i32_55 = arith.constant 15 : i32
    %66 = vector.broadcast %c15_i32_55 : i32 to vector<16x128xi32>
    %67 = arith.cmpi slt, %42, %66 : vector<16x128xi32>
    %c1_i32_56 = arith.constant 1 : i32
    %68 = vector.broadcast %c1_i32_56 : i32 to vector<16x128xi32>
    %69 = arith.cmpi sge, %42, %68 : vector<16x128xi32>
    %c0_57 = arith.constant 0 : index
    %c0_58 = arith.constant 0 : index
    %c0_59 = arith.constant 0 : index
    %70 = vector.load %arg11[%c0_57, %c0_58, %c0_59] : memref<4x16x128xf32, #tpu.memory_space<vmem>>, vector<1x16x128xf32>
    %71 = vector.shape_cast %70 : vector<1x16x128xf32> to vector<16x128xf32>
    %c1_60 = arith.constant 1 : index
    %c0_61 = arith.constant 0 : index
    %c0_62 = arith.constant 0 : index
    %72 = vector.load %arg11[%c1_60, %c0_61, %c0_62] : memref<4x16x128xf32, #tpu.memory_space<vmem>>, vector<1x16x128xf32>
    %73 = vector.shape_cast %72 : vector<1x16x128xf32> to vector<16x128xf32>
    %c2_63 = arith.constant 2 : index
    %c0_64 = arith.constant 0 : index
    %c0_65 = arith.constant 0 : index
    %74 = vector.load %arg11[%c2_63, %c0_64, %c0_65] : memref<4x16x128xf32, #tpu.memory_space<vmem>>, vector<1x16x128xf32>
    %75 = vector.shape_cast %74 : vector<1x16x128xf32> to vector<16x128xf32>
    %c3_66 = arith.constant 3 : index
    %c0_67 = arith.constant 0 : index
    %c0_68 = arith.constant 0 : index
    %76 = vector.load %arg11[%c3_66, %c0_67, %c0_68] : memref<4x16x128xf32, #tpu.memory_space<vmem>>, vector<1x16x128xf32>
    %77 = vector.shape_cast %76 : vector<1x16x128xf32> to vector<16x128xf32>
    %c0_69 = arith.constant 0 : index
    %c0_70 = arith.constant 0 : index
    %78 = vector.load %arg2[%c0_69, %c0_70] : memref<16x1xf32, #tpu.memory_space<vmem>>, vector<16x1xf32>
    %c0_71 = arith.constant 0 : index
    %c0_72 = arith.constant 0 : index
    %79 = vector.load %arg3[%c0_71, %c0_72] : memref<16x1xf32, #tpu.memory_space<vmem>>, vector<16x1xf32>
    %cst_73 = arith.constant dense<0.000000e+00> : vector<128xf32>
    %80 = vector.multi_reduction <add>, %71, %cst_73 [0] : vector<16x128xf32> to vector<128xf32>
    %81 = vector.shape_cast %80 : vector<128xf32> to vector<1x128xf32>
    %cst_74 = arith.constant 1.600000e+01 : f32
    %82 = vector.broadcast %cst_74 : f32 to vector<1x128xf32>
    %83 = arith.divf %81, %82 : vector<1x128xf32>
    %84 = vector.broadcast %83 : vector<1x128xf32> to vector<16x128xf32>
    %85 = arith.subf %71, %84 : vector<16x128xf32>
    %86 = arith.mulf %85, %85 : vector<16x128xf32>
    %cst_75 = arith.constant dense<0.000000e+00> : vector<128xf32>
    %87 = vector.multi_reduction <add>, %86, %cst_75 [0] : vector<16x128xf32> to vector<128xf32>
    %88 = vector.shape_cast %87 : vector<128xf32> to vector<1x128xf32>
    %cst_76 = arith.constant 1.600000e+01 : f32
    %89 = vector.broadcast %cst_76 : f32 to vector<1x128xf32>
    %90 = arith.divf %88, %89 : vector<1x128xf32>
    %cst_77 = arith.constant 9.99999974E-6 : f32
    %91 = vector.broadcast %cst_77 : f32 to vector<1x128xf32>
    %92 = arith.addf %90, %91 : vector<1x128xf32>
    %93 = math.rsqrt %92 : vector<1x128xf32>
    %94 = vector.broadcast %93 : vector<1x128xf32> to vector<16x128xf32>
    %95 = arith.mulf %85, %94 : vector<16x128xf32>
    %96 = vector.broadcast %78 : vector<16x1xf32> to vector<16x128xf32>
    %97 = arith.mulf %95, %96 : vector<16x128xf32>
    %98 = vector.broadcast %79 : vector<16x1xf32> to vector<16x128xf32>
    %99 = arith.addf %97, %98 : vector<16x128xf32>
    %cst_78 = arith.constant 0.000000e+00 : f32
    %100 = vector.broadcast %cst_78 : f32 to vector<16x128xf32>
    %101 = arith.maximumf %99, %100 : vector<16x128xf32>
    %cst_79 = arith.constant dense<0.000000e+00> : vector<128xf32>
    %102 = vector.multi_reduction <add>, %73, %cst_79 [0] : vector<16x128xf32> to vector<128xf32>
    %103 = vector.shape_cast %102 : vector<128xf32> to vector<1x128xf32>
    %cst_80 = arith.constant 1.600000e+01 : f32
    %104 = vector.broadcast %cst_80 : f32 to vector<1x128xf32>
    %105 = arith.divf %103, %104 : vector<1x128xf32>
    %106 = vector.broadcast %105 : vector<1x128xf32> to vector<16x128xf32>
    %107 = arith.subf %73, %106 : vector<16x128xf32>
    %108 = arith.mulf %107, %107 : vector<16x128xf32>
    %cst_81 = arith.constant dense<0.000000e+00> : vector<128xf32>
    %109 = vector.multi_reduction <add>, %108, %cst_81 [0] : vector<16x128xf32> to vector<128xf32>
    %110 = vector.shape_cast %109 : vector<128xf32> to vector<1x128xf32>
    %cst_82 = arith.constant 1.600000e+01 : f32
    %111 = vector.broadcast %cst_82 : f32 to vector<1x128xf32>
    %112 = arith.divf %110, %111 : vector<1x128xf32>
    %cst_83 = arith.constant 9.99999974E-6 : f32
    %113 = vector.broadcast %cst_83 : f32 to vector<1x128xf32>
    %114 = arith.addf %112, %113 : vector<1x128xf32>
    %115 = math.rsqrt %114 : vector<1x128xf32>
    %116 = vector.broadcast %115 : vector<1x128xf32> to vector<16x128xf32>
    %117 = arith.mulf %107, %116 : vector<16x128xf32>
    %118 = vector.broadcast %78 : vector<16x1xf32> to vector<16x128xf32>
    %119 = arith.mulf %117, %118 : vector<16x128xf32>
    %120 = vector.broadcast %79 : vector<16x1xf32> to vector<16x128xf32>
    %121 = arith.addf %119, %120 : vector<16x128xf32>
    %cst_84 = arith.constant 0.000000e+00 : f32
    %122 = vector.broadcast %cst_84 : f32 to vector<16x128xf32>
    %123 = arith.maximumf %121, %122 : vector<16x128xf32>
    %cst_85 = arith.constant dense<0.000000e+00> : vector<128xf32>
    %124 = vector.multi_reduction <add>, %75, %cst_85 [0] : vector<16x128xf32> to vector<128xf32>
    %125 = vector.shape_cast %124 : vector<128xf32> to vector<1x128xf32>
    %cst_86 = arith.constant 1.600000e+01 : f32
    %126 = vector.broadcast %cst_86 : f32 to vector<1x128xf32>
    %127 = arith.divf %125, %126 : vector<1x128xf32>
    %128 = vector.broadcast %127 : vector<1x128xf32> to vector<16x128xf32>
    %129 = arith.subf %75, %128 : vector<16x128xf32>
    %130 = arith.mulf %129, %129 : vector<16x128xf32>
    %cst_87 = arith.constant dense<0.000000e+00> : vector<128xf32>
    %131 = vector.multi_reduction <add>, %130, %cst_87 [0] : vector<16x128xf32> to vector<128xf32>
    %132 = vector.shape_cast %131 : vector<128xf32> to vector<1x128xf32>
    %cst_88 = arith.constant 1.600000e+01 : f32
    %133 = vector.broadcast %cst_88 : f32 to vector<1x128xf32>
    %134 = arith.divf %132, %133 : vector<1x128xf32>
    %cst_89 = arith.constant 9.99999974E-6 : f32
    %135 = vector.broadcast %cst_89 : f32 to vector<1x128xf32>
    %136 = arith.addf %134, %135 : vector<1x128xf32>
    %137 = math.rsqrt %136 : vector<1x128xf32>
    %138 = vector.broadcast %137 : vector<1x128xf32> to vector<16x128xf32>
    %139 = arith.mulf %129, %138 : vector<16x128xf32>
    %140 = vector.broadcast %78 : vector<16x1xf32> to vector<16x128xf32>
    %141 = arith.mulf %139, %140 : vector<16x128xf32>
    %142 = vector.broadcast %79 : vector<16x1xf32> to vector<16x128xf32>
    %143 = arith.addf %141, %142 : vector<16x128xf32>
    %cst_90 = arith.constant 0.000000e+00 : f32
    %144 = vector.broadcast %cst_90 : f32 to vector<16x128xf32>
    %145 = arith.maximumf %143, %144 : vector<16x128xf32>
    %cst_91 = arith.constant dense<0.000000e+00> : vector<128xf32>
    %146 = vector.multi_reduction <add>, %77, %cst_91 [0] : vector<16x128xf32> to vector<128xf32>
    %147 = vector.shape_cast %146 : vector<128xf32> to vector<1x128xf32>
    %cst_92 = arith.constant 1.600000e+01 : f32
    %148 = vector.broadcast %cst_92 : f32 to vector<1x128xf32>
    %149 = arith.divf %147, %148 : vector<1x128xf32>
    %150 = vector.broadcast %149 : vector<1x128xf32> to vector<16x128xf32>
    %151 = arith.subf %77, %150 : vector<16x128xf32>
    %152 = arith.mulf %151, %151 : vector<16x128xf32>
    %cst_93 = arith.constant dense<0.000000e+00> : vector<128xf32>
    %153 = vector.multi_reduction <add>, %152, %cst_93 [0] : vector<16x128xf32> to vector<128xf32>
    %154 = vector.shape_cast %153 : vector<128xf32> to vector<1x128xf32>
    %cst_94 = arith.constant 1.600000e+01 : f32
    %155 = vector.broadcast %cst_94 : f32 to vector<1x128xf32>
    %156 = arith.divf %154, %155 : vector<1x128xf32>
    %cst_95 = arith.constant 9.99999974E-6 : f32
    %157 = vector.broadcast %cst_95 : f32 to vector<1x128xf32>
    %158 = arith.addf %156, %157 : vector<1x128xf32>
    %159 = math.rsqrt %158 : vector<1x128xf32>
    %160 = vector.broadcast %159 : vector<1x128xf32> to vector<16x128xf32>
    %161 = arith.mulf %151, %160 : vector<16x128xf32>
    %162 = vector.broadcast %78 : vector<16x1xf32> to vector<16x128xf32>
    %163 = arith.mulf %161, %162 : vector<16x128xf32>
    %164 = vector.broadcast %79 : vector<16x1xf32> to vector<16x128xf32>
    %165 = arith.addf %163, %164 : vector<16x128xf32>
    %cst_96 = arith.constant 0.000000e+00 : f32
    %166 = vector.broadcast %cst_96 : f32 to vector<16x128xf32>
    %167 = arith.maximumf %165, %166 : vector<16x128xf32>
    %c1_i32_97 = arith.constant 1 : i32
    %168 = tpu.dynamic_rotate %101 by %c1_i32_97 dim 1 : vector<16x128xf32>, i32 -> vector<16x128xf32>
    %cst_98 = arith.constant 0.000000e+00 : f32
    %169 = vector.broadcast %cst_98 : f32 to vector<16x128xf32>
    %170 = arith.select %54, %168, %169 : vector<16x128xi1>, vector<16x128xf32>
    %cst_99 = arith.constant 0.000000e+00 : f32
    %171 = vector.broadcast %cst_99 : f32 to vector<16x128xf32>
    %172 = arith.select %67, %170, %171 : vector<16x128xi1>, vector<16x128xf32>
    %c1_i32_100 = arith.constant 1 : i32
    %173 = tpu.dynamic_rotate %172 by %c1_i32_100 dim 0 : vector<16x128xf32>, i32 -> vector<16x128xf32>
    %c0_101 = arith.constant 0 : index
    %174 = memref.load %arg4[%c0_101] : memref<144xf32, #tpu.memory_space<smem>>
    %175 = vector.broadcast %174 : f32 to vector<16x128xf32>
    %176 = arith.mulf %175, %173 : vector<16x128xf32>
    %c36 = arith.constant 36 : index
    %177 = memref.load %arg4[%c36] : memref<144xf32, #tpu.memory_space<smem>>
    %178 = vector.broadcast %177 : f32 to vector<16x128xf32>
    %179 = arith.mulf %178, %173 : vector<16x128xf32>
    %c72 = arith.constant 72 : index
    %180 = memref.load %arg4[%c72] : memref<144xf32, #tpu.memory_space<smem>>
    %181 = vector.broadcast %180 : f32 to vector<16x128xf32>
    %182 = arith.mulf %181, %173 : vector<16x128xf32>
    %c108 = arith.constant 108 : index
    %183 = memref.load %arg4[%c108] : memref<144xf32, #tpu.memory_space<smem>>
    %184 = vector.broadcast %183 : f32 to vector<16x128xf32>
    %185 = arith.mulf %184, %173 : vector<16x128xf32>
    %c3_102 = arith.constant 3 : index
    %186 = memref.load %arg4[%c3_102] : memref<144xf32, #tpu.memory_space<smem>>
    %187 = vector.broadcast %186 : f32 to vector<16x128xf32>
    %188 = arith.mulf %187, %170 : vector<16x128xf32>
    %189 = arith.addf %176, %188 : vector<16x128xf32>
    %c39 = arith.constant 39 : index
    %190 = memref.load %arg4[%c39] : memref<144xf32, #tpu.memory_space<smem>>
    %191 = vector.broadcast %190 : f32 to vector<16x128xf32>
    %192 = arith.mulf %191, %170 : vector<16x128xf32>
    %193 = arith.addf %179, %192 : vector<16x128xf32>
    %c75 = arith.constant 75 : index
    %194 = memref.load %arg4[%c75] : memref<144xf32, #tpu.memory_space<smem>>
    %195 = vector.broadcast %194 : f32 to vector<16x128xf32>
    %196 = arith.mulf %195, %170 : vector<16x128xf32>
    %197 = arith.addf %182, %196 : vector<16x128xf32>
    %c111 = arith.constant 111 : index
    %198 = memref.load %arg4[%c111] : memref<144xf32, #tpu.memory_space<smem>>
    %199 = vector.broadcast %198 : f32 to vector<16x128xf32>
    %200 = arith.mulf %199, %170 : vector<16x128xf32>
    %201 = arith.addf %185, %200 : vector<16x128xf32>
    %cst_103 = arith.constant 0.000000e+00 : f32
    %202 = vector.broadcast %cst_103 : f32 to vector<16x128xf32>
    %203 = arith.select %69, %170, %202 : vector<16x128xi1>, vector<16x128xf32>
    %c15_i32_104 = arith.constant 15 : i32
    %204 = tpu.dynamic_rotate %203 by %c15_i32_104 dim 0 : vector<16x128xf32>, i32 -> vector<16x128xf32>
    %c6 = arith.constant 6 : index
    %205 = memref.load %arg4[%c6] : memref<144xf32, #tpu.memory_space<smem>>
    %206 = vector.broadcast %205 : f32 to vector<16x128xf32>
    %207 = arith.mulf %206, %204 : vector<16x128xf32>
    %208 = arith.addf %189, %207 : vector<16x128xf32>
    %c42 = arith.constant 42 : index
    %209 = memref.load %arg4[%c42] : memref<144xf32, #tpu.memory_space<smem>>
    %210 = vector.broadcast %209 : f32 to vector<16x128xf32>
    %211 = arith.mulf %210, %204 : vector<16x128xf32>
    %212 = arith.addf %193, %211 : vector<16x128xf32>
    %c78 = arith.constant 78 : index
    %213 = memref.load %arg4[%c78] : memref<144xf32, #tpu.memory_space<smem>>
    %214 = vector.broadcast %213 : f32 to vector<16x128xf32>
    %215 = arith.mulf %214, %204 : vector<16x128xf32>
    %216 = arith.addf %197, %215 : vector<16x128xf32>
    %c114 = arith.constant 114 : index
    %217 = memref.load %arg4[%c114] : memref<144xf32, #tpu.memory_space<smem>>
    %218 = vector.broadcast %217 : f32 to vector<16x128xf32>
    %219 = arith.mulf %218, %204 : vector<16x128xf32>
    %220 = arith.addf %201, %219 : vector<16x128xf32>
    %cst_105 = arith.constant 0.000000e+00 : f32
    %221 = vector.broadcast %cst_105 : f32 to vector<16x128xf32>
    %222 = arith.select %67, %101, %221 : vector<16x128xi1>, vector<16x128xf32>
    %c1_i32_106 = arith.constant 1 : i32
    %223 = tpu.dynamic_rotate %222 by %c1_i32_106 dim 0 : vector<16x128xf32>, i32 -> vector<16x128xf32>
    %c1_107 = arith.constant 1 : index
    %224 = memref.load %arg4[%c1_107] : memref<144xf32, #tpu.memory_space<smem>>
    %225 = vector.broadcast %224 : f32 to vector<16x128xf32>
    %226 = arith.mulf %225, %223 : vector<16x128xf32>
    %227 = arith.addf %208, %226 : vector<16x128xf32>
    %c37 = arith.constant 37 : index
    %228 = memref.load %arg4[%c37] : memref<144xf32, #tpu.memory_space<smem>>
    %229 = vector.broadcast %228 : f32 to vector<16x128xf32>
    %230 = arith.mulf %229, %223 : vector<16x128xf32>
    %231 = arith.addf %212, %230 : vector<16x128xf32>
    %c73 = arith.constant 73 : index
    %232 = memref.load %arg4[%c73] : memref<144xf32, #tpu.memory_space<smem>>
    %233 = vector.broadcast %232 : f32 to vector<16x128xf32>
    %234 = arith.mulf %233, %223 : vector<16x128xf32>
    %235 = arith.addf %216, %234 : vector<16x128xf32>
    %c109 = arith.constant 109 : index
    %236 = memref.load %arg4[%c109] : memref<144xf32, #tpu.memory_space<smem>>
    %237 = vector.broadcast %236 : f32 to vector<16x128xf32>
    %238 = arith.mulf %237, %223 : vector<16x128xf32>
    %239 = arith.addf %220, %238 : vector<16x128xf32>
    %c4 = arith.constant 4 : index
    %240 = memref.load %arg4[%c4] : memref<144xf32, #tpu.memory_space<smem>>
    %241 = vector.broadcast %240 : f32 to vector<16x128xf32>
    %242 = arith.mulf %241, %101 : vector<16x128xf32>
    %243 = arith.addf %227, %242 : vector<16x128xf32>
    %c40 = arith.constant 40 : index
    %244 = memref.load %arg4[%c40] : memref<144xf32, #tpu.memory_space<smem>>
    %245 = vector.broadcast %244 : f32 to vector<16x128xf32>
    %246 = arith.mulf %245, %101 : vector<16x128xf32>
    %247 = arith.addf %231, %246 : vector<16x128xf32>
    %c76 = arith.constant 76 : index
    %248 = memref.load %arg4[%c76] : memref<144xf32, #tpu.memory_space<smem>>
    %249 = vector.broadcast %248 : f32 to vector<16x128xf32>
    %250 = arith.mulf %249, %101 : vector<16x128xf32>
    %251 = arith.addf %235, %250 : vector<16x128xf32>
    %c112 = arith.constant 112 : index
    %252 = memref.load %arg4[%c112] : memref<144xf32, #tpu.memory_space<smem>>
    %253 = vector.broadcast %252 : f32 to vector<16x128xf32>
    %254 = arith.mulf %253, %101 : vector<16x128xf32>
    %255 = arith.addf %239, %254 : vector<16x128xf32>
    %cst_108 = arith.constant 0.000000e+00 : f32
    %256 = vector.broadcast %cst_108 : f32 to vector<16x128xf32>
    %257 = arith.select %69, %101, %256 : vector<16x128xi1>, vector<16x128xf32>
    %c15_i32_109 = arith.constant 15 : i32
    %258 = tpu.dynamic_rotate %257 by %c15_i32_109 dim 0 : vector<16x128xf32>, i32 -> vector<16x128xf32>
    %c7 = arith.constant 7 : index
    %259 = memref.load %arg4[%c7] : memref<144xf32, #tpu.memory_space<smem>>
    %260 = vector.broadcast %259 : f32 to vector<16x128xf32>
    %261 = arith.mulf %260, %258 : vector<16x128xf32>
    %262 = arith.addf %243, %261 : vector<16x128xf32>
    %c43 = arith.constant 43 : index
    %263 = memref.load %arg4[%c43] : memref<144xf32, #tpu.memory_space<smem>>
    %264 = vector.broadcast %263 : f32 to vector<16x128xf32>
    %265 = arith.mulf %264, %258 : vector<16x128xf32>
    %266 = arith.addf %247, %265 : vector<16x128xf32>
    %c79 = arith.constant 79 : index
    %267 = memref.load %arg4[%c79] : memref<144xf32, #tpu.memory_space<smem>>
    %268 = vector.broadcast %267 : f32 to vector<16x128xf32>
    %269 = arith.mulf %268, %258 : vector<16x128xf32>
    %270 = arith.addf %251, %269 : vector<16x128xf32>
    %c115 = arith.constant 115 : index
    %271 = memref.load %arg4[%c115] : memref<144xf32, #tpu.memory_space<smem>>
    %272 = vector.broadcast %271 : f32 to vector<16x128xf32>
    %273 = arith.mulf %272, %258 : vector<16x128xf32>
    %274 = arith.addf %255, %273 : vector<16x128xf32>
    %c127_i32 = arith.constant 127 : i32
    %275 = tpu.dynamic_rotate %101 by %c127_i32 dim 1 : vector<16x128xf32>, i32 -> vector<16x128xf32>
    %cst_110 = arith.constant 0.000000e+00 : f32
    %276 = vector.broadcast %cst_110 : f32 to vector<16x128xf32>
    %277 = arith.select %65, %275, %276 : vector<16x128xi1>, vector<16x128xf32>
    %cst_111 = arith.constant 0.000000e+00 : f32
    %278 = vector.broadcast %cst_111 : f32 to vector<16x128xf32>
    %279 = arith.select %67, %277, %278 : vector<16x128xi1>, vector<16x128xf32>
    %c1_i32_112 = arith.constant 1 : i32
    %280 = tpu.dynamic_rotate %279 by %c1_i32_112 dim 0 : vector<16x128xf32>, i32 -> vector<16x128xf32>
    %c2_113 = arith.constant 2 : index
    %281 = memref.load %arg4[%c2_113] : memref<144xf32, #tpu.memory_space<smem>>
    %282 = vector.broadcast %281 : f32 to vector<16x128xf32>
    %283 = arith.mulf %282, %280 : vector<16x128xf32>
    %284 = arith.addf %262, %283 : vector<16x128xf32>
    %c38 = arith.constant 38 : index
    %285 = memref.load %arg4[%c38] : memref<144xf32, #tpu.memory_space<smem>>
    %286 = vector.broadcast %285 : f32 to vector<16x128xf32>
    %287 = arith.mulf %286, %280 : vector<16x128xf32>
    %288 = arith.addf %266, %287 : vector<16x128xf32>
    %c74 = arith.constant 74 : index
    %289 = memref.load %arg4[%c74] : memref<144xf32, #tpu.memory_space<smem>>
    %290 = vector.broadcast %289 : f32 to vector<16x128xf32>
    %291 = arith.mulf %290, %280 : vector<16x128xf32>
    %292 = arith.addf %270, %291 : vector<16x128xf32>
    %c110 = arith.constant 110 : index
    %293 = memref.load %arg4[%c110] : memref<144xf32, #tpu.memory_space<smem>>
    %294 = vector.broadcast %293 : f32 to vector<16x128xf32>
    %295 = arith.mulf %294, %280 : vector<16x128xf32>
    %296 = arith.addf %274, %295 : vector<16x128xf32>
    %c5 = arith.constant 5 : index
    %297 = memref.load %arg4[%c5] : memref<144xf32, #tpu.memory_space<smem>>
    %298 = vector.broadcast %297 : f32 to vector<16x128xf32>
    %299 = arith.mulf %298, %277 : vector<16x128xf32>
    %300 = arith.addf %284, %299 : vector<16x128xf32>
    %c41 = arith.constant 41 : index
    %301 = memref.load %arg4[%c41] : memref<144xf32, #tpu.memory_space<smem>>
    %302 = vector.broadcast %301 : f32 to vector<16x128xf32>
    %303 = arith.mulf %302, %277 : vector<16x128xf32>
    %304 = arith.addf %288, %303 : vector<16x128xf32>
    %c77 = arith.constant 77 : index
    %305 = memref.load %arg4[%c77] : memref<144xf32, #tpu.memory_space<smem>>
    %306 = vector.broadcast %305 : f32 to vector<16x128xf32>
    %307 = arith.mulf %306, %277 : vector<16x128xf32>
    %308 = arith.addf %292, %307 : vector<16x128xf32>
    %c113 = arith.constant 113 : index
    %309 = memref.load %arg4[%c113] : memref<144xf32, #tpu.memory_space<smem>>
    %310 = vector.broadcast %309 : f32 to vector<16x128xf32>
    %311 = arith.mulf %310, %277 : vector<16x128xf32>
    %312 = arith.addf %296, %311 : vector<16x128xf32>
    %cst_114 = arith.constant 0.000000e+00 : f32
    %313 = vector.broadcast %cst_114 : f32 to vector<16x128xf32>
    %314 = arith.select %69, %277, %313 : vector<16x128xi1>, vector<16x128xf32>
    %c15_i32_115 = arith.constant 15 : i32
    %315 = tpu.dynamic_rotate %314 by %c15_i32_115 dim 0 : vector<16x128xf32>, i32 -> vector<16x128xf32>
    %c8 = arith.constant 8 : index
    %316 = memref.load %arg4[%c8] : memref<144xf32, #tpu.memory_space<smem>>
    %317 = vector.broadcast %316 : f32 to vector<16x128xf32>
    %318 = arith.mulf %317, %315 : vector<16x128xf32>
    %319 = arith.addf %300, %318 : vector<16x128xf32>
    %c44 = arith.constant 44 : index
    %320 = memref.load %arg4[%c44] : memref<144xf32, #tpu.memory_space<smem>>
    %321 = vector.broadcast %320 : f32 to vector<16x128xf32>
    %322 = arith.mulf %321, %315 : vector<16x128xf32>
    %323 = arith.addf %304, %322 : vector<16x128xf32>
    %c80 = arith.constant 80 : index
    %324 = memref.load %arg4[%c80] : memref<144xf32, #tpu.memory_space<smem>>
    %325 = vector.broadcast %324 : f32 to vector<16x128xf32>
    %326 = arith.mulf %325, %315 : vector<16x128xf32>
    %327 = arith.addf %308, %326 : vector<16x128xf32>
    %c116 = arith.constant 116 : index
    %328 = memref.load %arg4[%c116] : memref<144xf32, #tpu.memory_space<smem>>
    %329 = vector.broadcast %328 : f32 to vector<16x128xf32>
    %330 = arith.mulf %329, %315 : vector<16x128xf32>
    %331 = arith.addf %312, %330 : vector<16x128xf32>
    %c1_i32_116 = arith.constant 1 : i32
    %332 = tpu.dynamic_rotate %123 by %c1_i32_116 dim 1 : vector<16x128xf32>, i32 -> vector<16x128xf32>
    %cst_117 = arith.constant 0.000000e+00 : f32
    %333 = vector.broadcast %cst_117 : f32 to vector<16x128xf32>
    %334 = arith.select %54, %332, %333 : vector<16x128xi1>, vector<16x128xf32>
    %cst_118 = arith.constant 0.000000e+00 : f32
    %335 = vector.broadcast %cst_118 : f32 to vector<16x128xf32>
    %336 = arith.select %67, %334, %335 : vector<16x128xi1>, vector<16x128xf32>
    %c1_i32_119 = arith.constant 1 : i32
    %337 = tpu.dynamic_rotate %336 by %c1_i32_119 dim 0 : vector<16x128xf32>, i32 -> vector<16x128xf32>
    %c9 = arith.constant 9 : index
    %338 = memref.load %arg4[%c9] : memref<144xf32, #tpu.memory_space<smem>>
    %339 = vector.broadcast %338 : f32 to vector<16x128xf32>
    %340 = arith.mulf %339, %337 : vector<16x128xf32>
    %341 = arith.addf %319, %340 : vector<16x128xf32>
    %c45 = arith.constant 45 : index
    %342 = memref.load %arg4[%c45] : memref<144xf32, #tpu.memory_space<smem>>
    %343 = vector.broadcast %342 : f32 to vector<16x128xf32>
    %344 = arith.mulf %343, %337 : vector<16x128xf32>
    %345 = arith.addf %323, %344 : vector<16x128xf32>
    %c81 = arith.constant 81 : index
    %346 = memref.load %arg4[%c81] : memref<144xf32, #tpu.memory_space<smem>>
    %347 = vector.broadcast %346 : f32 to vector<16x128xf32>
    %348 = arith.mulf %347, %337 : vector<16x128xf32>
    %349 = arith.addf %327, %348 : vector<16x128xf32>
    %c117 = arith.constant 117 : index
    %350 = memref.load %arg4[%c117] : memref<144xf32, #tpu.memory_space<smem>>
    %351 = vector.broadcast %350 : f32 to vector<16x128xf32>
    %352 = arith.mulf %351, %337 : vector<16x128xf32>
    %353 = arith.addf %331, %352 : vector<16x128xf32>
    %c12 = arith.constant 12 : index
    %354 = memref.load %arg4[%c12] : memref<144xf32, #tpu.memory_space<smem>>
    %355 = vector.broadcast %354 : f32 to vector<16x128xf32>
    %356 = arith.mulf %355, %334 : vector<16x128xf32>
    %357 = arith.addf %341, %356 : vector<16x128xf32>
    %c48 = arith.constant 48 : index
    %358 = memref.load %arg4[%c48] : memref<144xf32, #tpu.memory_space<smem>>
    %359 = vector.broadcast %358 : f32 to vector<16x128xf32>
    %360 = arith.mulf %359, %334 : vector<16x128xf32>
    %361 = arith.addf %345, %360 : vector<16x128xf32>
    %c84 = arith.constant 84 : index
    %362 = memref.load %arg4[%c84] : memref<144xf32, #tpu.memory_space<smem>>
    %363 = vector.broadcast %362 : f32 to vector<16x128xf32>
    %364 = arith.mulf %363, %334 : vector<16x128xf32>
    %365 = arith.addf %349, %364 : vector<16x128xf32>
    %c120 = arith.constant 120 : index
    %366 = memref.load %arg4[%c120] : memref<144xf32, #tpu.memory_space<smem>>
    %367 = vector.broadcast %366 : f32 to vector<16x128xf32>
    %368 = arith.mulf %367, %334 : vector<16x128xf32>
    %369 = arith.addf %353, %368 : vector<16x128xf32>
    %cst_120 = arith.constant 0.000000e+00 : f32
    %370 = vector.broadcast %cst_120 : f32 to vector<16x128xf32>
    %371 = arith.select %69, %334, %370 : vector<16x128xi1>, vector<16x128xf32>
    %c15_i32_121 = arith.constant 15 : i32
    %372 = tpu.dynamic_rotate %371 by %c15_i32_121 dim 0 : vector<16x128xf32>, i32 -> vector<16x128xf32>
    %c15 = arith.constant 15 : index
    %373 = memref.load %arg4[%c15] : memref<144xf32, #tpu.memory_space<smem>>
    %374 = vector.broadcast %373 : f32 to vector<16x128xf32>
    %375 = arith.mulf %374, %372 : vector<16x128xf32>
    %376 = arith.addf %357, %375 : vector<16x128xf32>
    %c51 = arith.constant 51 : index
    %377 = memref.load %arg4[%c51] : memref<144xf32, #tpu.memory_space<smem>>
    %378 = vector.broadcast %377 : f32 to vector<16x128xf32>
    %379 = arith.mulf %378, %372 : vector<16x128xf32>
    %380 = arith.addf %361, %379 : vector<16x128xf32>
    %c87 = arith.constant 87 : index
    %381 = memref.load %arg4[%c87] : memref<144xf32, #tpu.memory_space<smem>>
    %382 = vector.broadcast %381 : f32 to vector<16x128xf32>
    %383 = arith.mulf %382, %372 : vector<16x128xf32>
    %384 = arith.addf %365, %383 : vector<16x128xf32>
    %c123 = arith.constant 123 : index
    %385 = memref.load %arg4[%c123] : memref<144xf32, #tpu.memory_space<smem>>
    %386 = vector.broadcast %385 : f32 to vector<16x128xf32>
    %387 = arith.mulf %386, %372 : vector<16x128xf32>
    %388 = arith.addf %369, %387 : vector<16x128xf32>
    %cst_122 = arith.constant 0.000000e+00 : f32
    %389 = vector.broadcast %cst_122 : f32 to vector<16x128xf32>
    %390 = arith.select %67, %123, %389 : vector<16x128xi1>, vector<16x128xf32>
    %c1_i32_123 = arith.constant 1 : i32
    %391 = tpu.dynamic_rotate %390 by %c1_i32_123 dim 0 : vector<16x128xf32>, i32 -> vector<16x128xf32>
    %c10 = arith.constant 10 : index
    %392 = memref.load %arg4[%c10] : memref<144xf32, #tpu.memory_space<smem>>
    %393 = vector.broadcast %392 : f32 to vector<16x128xf32>
    %394 = arith.mulf %393, %391 : vector<16x128xf32>
    %395 = arith.addf %376, %394 : vector<16x128xf32>
    %c46 = arith.constant 46 : index
    %396 = memref.load %arg4[%c46] : memref<144xf32, #tpu.memory_space<smem>>
    %397 = vector.broadcast %396 : f32 to vector<16x128xf32>
    %398 = arith.mulf %397, %391 : vector<16x128xf32>
    %399 = arith.addf %380, %398 : vector<16x128xf32>
    %c82 = arith.constant 82 : index
    %400 = memref.load %arg4[%c82] : memref<144xf32, #tpu.memory_space<smem>>
    %401 = vector.broadcast %400 : f32 to vector<16x128xf32>
    %402 = arith.mulf %401, %391 : vector<16x128xf32>
    %403 = arith.addf %384, %402 : vector<16x128xf32>
    %c118 = arith.constant 118 : index
    %404 = memref.load %arg4[%c118] : memref<144xf32, #tpu.memory_space<smem>>
    %405 = vector.broadcast %404 : f32 to vector<16x128xf32>
    %406 = arith.mulf %405, %391 : vector<16x128xf32>
    %407 = arith.addf %388, %406 : vector<16x128xf32>
    %c13 = arith.constant 13 : index
    %408 = memref.load %arg4[%c13] : memref<144xf32, #tpu.memory_space<smem>>
    %409 = vector.broadcast %408 : f32 to vector<16x128xf32>
    %410 = arith.mulf %409, %123 : vector<16x128xf32>
    %411 = arith.addf %395, %410 : vector<16x128xf32>
    %c49 = arith.constant 49 : index
    %412 = memref.load %arg4[%c49] : memref<144xf32, #tpu.memory_space<smem>>
    %413 = vector.broadcast %412 : f32 to vector<16x128xf32>
    %414 = arith.mulf %413, %123 : vector<16x128xf32>
    %415 = arith.addf %399, %414 : vector<16x128xf32>
    %c85 = arith.constant 85 : index
    %416 = memref.load %arg4[%c85] : memref<144xf32, #tpu.memory_space<smem>>
    %417 = vector.broadcast %416 : f32 to vector<16x128xf32>
    %418 = arith.mulf %417, %123 : vector<16x128xf32>
    %419 = arith.addf %403, %418 : vector<16x128xf32>
    %c121 = arith.constant 121 : index
    %420 = memref.load %arg4[%c121] : memref<144xf32, #tpu.memory_space<smem>>
    %421 = vector.broadcast %420 : f32 to vector<16x128xf32>
    %422 = arith.mulf %421, %123 : vector<16x128xf32>
    %423 = arith.addf %407, %422 : vector<16x128xf32>
    %cst_124 = arith.constant 0.000000e+00 : f32
    %424 = vector.broadcast %cst_124 : f32 to vector<16x128xf32>
    %425 = arith.select %69, %123, %424 : vector<16x128xi1>, vector<16x128xf32>
    %c15_i32_125 = arith.constant 15 : i32
    %426 = tpu.dynamic_rotate %425 by %c15_i32_125 dim 0 : vector<16x128xf32>, i32 -> vector<16x128xf32>
    %c16_126 = arith.constant 16 : index
    %427 = memref.load %arg4[%c16_126] : memref<144xf32, #tpu.memory_space<smem>>
    %428 = vector.broadcast %427 : f32 to vector<16x128xf32>
    %429 = arith.mulf %428, %426 : vector<16x128xf32>
    %430 = arith.addf %411, %429 : vector<16x128xf32>
    %c52 = arith.constant 52 : index
    %431 = memref.load %arg4[%c52] : memref<144xf32, #tpu.memory_space<smem>>
    %432 = vector.broadcast %431 : f32 to vector<16x128xf32>
    %433 = arith.mulf %432, %426 : vector<16x128xf32>
    %434 = arith.addf %415, %433 : vector<16x128xf32>
    %c88 = arith.constant 88 : index
    %435 = memref.load %arg4[%c88] : memref<144xf32, #tpu.memory_space<smem>>
    %436 = vector.broadcast %435 : f32 to vector<16x128xf32>
    %437 = arith.mulf %436, %426 : vector<16x128xf32>
    %438 = arith.addf %419, %437 : vector<16x128xf32>
    %c124 = arith.constant 124 : index
    %439 = memref.load %arg4[%c124] : memref<144xf32, #tpu.memory_space<smem>>
    %440 = vector.broadcast %439 : f32 to vector<16x128xf32>
    %441 = arith.mulf %440, %426 : vector<16x128xf32>
    %442 = arith.addf %423, %441 : vector<16x128xf32>
    %c127_i32_127 = arith.constant 127 : i32
    %443 = tpu.dynamic_rotate %123 by %c127_i32_127 dim 1 : vector<16x128xf32>, i32 -> vector<16x128xf32>
    %cst_128 = arith.constant 0.000000e+00 : f32
    %444 = vector.broadcast %cst_128 : f32 to vector<16x128xf32>
    %445 = arith.select %65, %443, %444 : vector<16x128xi1>, vector<16x128xf32>
    %cst_129 = arith.constant 0.000000e+00 : f32
    %446 = vector.broadcast %cst_129 : f32 to vector<16x128xf32>
    %447 = arith.select %67, %445, %446 : vector<16x128xi1>, vector<16x128xf32>
    %c1_i32_130 = arith.constant 1 : i32
    %448 = tpu.dynamic_rotate %447 by %c1_i32_130 dim 0 : vector<16x128xf32>, i32 -> vector<16x128xf32>
    %c11 = arith.constant 11 : index
    %449 = memref.load %arg4[%c11] : memref<144xf32, #tpu.memory_space<smem>>
    %450 = vector.broadcast %449 : f32 to vector<16x128xf32>
    %451 = arith.mulf %450, %448 : vector<16x128xf32>
    %452 = arith.addf %430, %451 : vector<16x128xf32>
    %c47 = arith.constant 47 : index
    %453 = memref.load %arg4[%c47] : memref<144xf32, #tpu.memory_space<smem>>
    %454 = vector.broadcast %453 : f32 to vector<16x128xf32>
    %455 = arith.mulf %454, %448 : vector<16x128xf32>
    %456 = arith.addf %434, %455 : vector<16x128xf32>
    %c83 = arith.constant 83 : index
    %457 = memref.load %arg4[%c83] : memref<144xf32, #tpu.memory_space<smem>>
    %458 = vector.broadcast %457 : f32 to vector<16x128xf32>
    %459 = arith.mulf %458, %448 : vector<16x128xf32>
    %460 = arith.addf %438, %459 : vector<16x128xf32>
    %c119 = arith.constant 119 : index
    %461 = memref.load %arg4[%c119] : memref<144xf32, #tpu.memory_space<smem>>
    %462 = vector.broadcast %461 : f32 to vector<16x128xf32>
    %463 = arith.mulf %462, %448 : vector<16x128xf32>
    %464 = arith.addf %442, %463 : vector<16x128xf32>
    %c14 = arith.constant 14 : index
    %465 = memref.load %arg4[%c14] : memref<144xf32, #tpu.memory_space<smem>>
    %466 = vector.broadcast %465 : f32 to vector<16x128xf32>
    %467 = arith.mulf %466, %445 : vector<16x128xf32>
    %468 = arith.addf %452, %467 : vector<16x128xf32>
    %c50 = arith.constant 50 : index
    %469 = memref.load %arg4[%c50] : memref<144xf32, #tpu.memory_space<smem>>
    %470 = vector.broadcast %469 : f32 to vector<16x128xf32>
    %471 = arith.mulf %470, %445 : vector<16x128xf32>
    %472 = arith.addf %456, %471 : vector<16x128xf32>
    %c86 = arith.constant 86 : index
    %473 = memref.load %arg4[%c86] : memref<144xf32, #tpu.memory_space<smem>>
    %474 = vector.broadcast %473 : f32 to vector<16x128xf32>
    %475 = arith.mulf %474, %445 : vector<16x128xf32>
    %476 = arith.addf %460, %475 : vector<16x128xf32>
    %c122 = arith.constant 122 : index
    %477 = memref.load %arg4[%c122] : memref<144xf32, #tpu.memory_space<smem>>
    %478 = vector.broadcast %477 : f32 to vector<16x128xf32>
    %479 = arith.mulf %478, %445 : vector<16x128xf32>
    %480 = arith.addf %464, %479 : vector<16x128xf32>
    %cst_131 = arith.constant 0.000000e+00 : f32
    %481 = vector.broadcast %cst_131 : f32 to vector<16x128xf32>
    %482 = arith.select %69, %445, %481 : vector<16x128xi1>, vector<16x128xf32>
    %c15_i32_132 = arith.constant 15 : i32
    %483 = tpu.dynamic_rotate %482 by %c15_i32_132 dim 0 : vector<16x128xf32>, i32 -> vector<16x128xf32>
    %c17 = arith.constant 17 : index
    %484 = memref.load %arg4[%c17] : memref<144xf32, #tpu.memory_space<smem>>
    %485 = vector.broadcast %484 : f32 to vector<16x128xf32>
    %486 = arith.mulf %485, %483 : vector<16x128xf32>
    %487 = arith.addf %468, %486 : vector<16x128xf32>
    %c53 = arith.constant 53 : index
    %488 = memref.load %arg4[%c53] : memref<144xf32, #tpu.memory_space<smem>>
    %489 = vector.broadcast %488 : f32 to vector<16x128xf32>
    %490 = arith.mulf %489, %483 : vector<16x128xf32>
    %491 = arith.addf %472, %490 : vector<16x128xf32>
    %c89 = arith.constant 89 : index
    %492 = memref.load %arg4[%c89] : memref<144xf32, #tpu.memory_space<smem>>
    %493 = vector.broadcast %492 : f32 to vector<16x128xf32>
    %494 = arith.mulf %493, %483 : vector<16x128xf32>
    %495 = arith.addf %476, %494 : vector<16x128xf32>
    %c125 = arith.constant 125 : index
    %496 = memref.load %arg4[%c125] : memref<144xf32, #tpu.memory_space<smem>>
    %497 = vector.broadcast %496 : f32 to vector<16x128xf32>
    %498 = arith.mulf %497, %483 : vector<16x128xf32>
    %499 = arith.addf %480, %498 : vector<16x128xf32>
    %c1_i32_133 = arith.constant 1 : i32
    %500 = tpu.dynamic_rotate %145 by %c1_i32_133 dim 1 : vector<16x128xf32>, i32 -> vector<16x128xf32>
    %cst_134 = arith.constant 0.000000e+00 : f32
    %501 = vector.broadcast %cst_134 : f32 to vector<16x128xf32>
    %502 = arith.select %54, %500, %501 : vector<16x128xi1>, vector<16x128xf32>
    %cst_135 = arith.constant 0.000000e+00 : f32
    %503 = vector.broadcast %cst_135 : f32 to vector<16x128xf32>
    %504 = arith.select %67, %502, %503 : vector<16x128xi1>, vector<16x128xf32>
    %c1_i32_136 = arith.constant 1 : i32
    %505 = tpu.dynamic_rotate %504 by %c1_i32_136 dim 0 : vector<16x128xf32>, i32 -> vector<16x128xf32>
    %c18 = arith.constant 18 : index
    %506 = memref.load %arg4[%c18] : memref<144xf32, #tpu.memory_space<smem>>
    %507 = vector.broadcast %506 : f32 to vector<16x128xf32>
    %508 = arith.mulf %507, %505 : vector<16x128xf32>
    %509 = arith.addf %487, %508 : vector<16x128xf32>
    %c54 = arith.constant 54 : index
    %510 = memref.load %arg4[%c54] : memref<144xf32, #tpu.memory_space<smem>>
    %511 = vector.broadcast %510 : f32 to vector<16x128xf32>
    %512 = arith.mulf %511, %505 : vector<16x128xf32>
    %513 = arith.addf %491, %512 : vector<16x128xf32>
    %c90 = arith.constant 90 : index
    %514 = memref.load %arg4[%c90] : memref<144xf32, #tpu.memory_space<smem>>
    %515 = vector.broadcast %514 : f32 to vector<16x128xf32>
    %516 = arith.mulf %515, %505 : vector<16x128xf32>
    %517 = arith.addf %495, %516 : vector<16x128xf32>
    %c126 = arith.constant 126 : index
    %518 = memref.load %arg4[%c126] : memref<144xf32, #tpu.memory_space<smem>>
    %519 = vector.broadcast %518 : f32 to vector<16x128xf32>
    %520 = arith.mulf %519, %505 : vector<16x128xf32>
    %521 = arith.addf %499, %520 : vector<16x128xf32>
    %c21 = arith.constant 21 : index
    %522 = memref.load %arg4[%c21] : memref<144xf32, #tpu.memory_space<smem>>
    %523 = vector.broadcast %522 : f32 to vector<16x128xf32>
    %524 = arith.mulf %523, %502 : vector<16x128xf32>
    %525 = arith.addf %509, %524 : vector<16x128xf32>
    %c57 = arith.constant 57 : index
    %526 = memref.load %arg4[%c57] : memref<144xf32, #tpu.memory_space<smem>>
    %527 = vector.broadcast %526 : f32 to vector<16x128xf32>
    %528 = arith.mulf %527, %502 : vector<16x128xf32>
    %529 = arith.addf %513, %528 : vector<16x128xf32>
    %c93 = arith.constant 93 : index
    %530 = memref.load %arg4[%c93] : memref<144xf32, #tpu.memory_space<smem>>
    %531 = vector.broadcast %530 : f32 to vector<16x128xf32>
    %532 = arith.mulf %531, %502 : vector<16x128xf32>
    %533 = arith.addf %517, %532 : vector<16x128xf32>
    %c129 = arith.constant 129 : index
    %534 = memref.load %arg4[%c129] : memref<144xf32, #tpu.memory_space<smem>>
    %535 = vector.broadcast %534 : f32 to vector<16x128xf32>
    %536 = arith.mulf %535, %502 : vector<16x128xf32>
    %537 = arith.addf %521, %536 : vector<16x128xf32>
    %cst_137 = arith.constant 0.000000e+00 : f32
    %538 = vector.broadcast %cst_137 : f32 to vector<16x128xf32>
    %539 = arith.select %69, %502, %538 : vector<16x128xi1>, vector<16x128xf32>
    %c15_i32_138 = arith.constant 15 : i32
    %540 = tpu.dynamic_rotate %539 by %c15_i32_138 dim 0 : vector<16x128xf32>, i32 -> vector<16x128xf32>
    %c24 = arith.constant 24 : index
    %541 = memref.load %arg4[%c24] : memref<144xf32, #tpu.memory_space<smem>>
    %542 = vector.broadcast %541 : f32 to vector<16x128xf32>
    %543 = arith.mulf %542, %540 : vector<16x128xf32>
    %544 = arith.addf %525, %543 : vector<16x128xf32>
    %c60 = arith.constant 60 : index
    %545 = memref.load %arg4[%c60] : memref<144xf32, #tpu.memory_space<smem>>
    %546 = vector.broadcast %545 : f32 to vector<16x128xf32>
    %547 = arith.mulf %546, %540 : vector<16x128xf32>
    %548 = arith.addf %529, %547 : vector<16x128xf32>
    %c96 = arith.constant 96 : index
    %549 = memref.load %arg4[%c96] : memref<144xf32, #tpu.memory_space<smem>>
    %550 = vector.broadcast %549 : f32 to vector<16x128xf32>
    %551 = arith.mulf %550, %540 : vector<16x128xf32>
    %552 = arith.addf %533, %551 : vector<16x128xf32>
    %c132 = arith.constant 132 : index
    %553 = memref.load %arg4[%c132] : memref<144xf32, #tpu.memory_space<smem>>
    %554 = vector.broadcast %553 : f32 to vector<16x128xf32>
    %555 = arith.mulf %554, %540 : vector<16x128xf32>
    %556 = arith.addf %537, %555 : vector<16x128xf32>
    %cst_139 = arith.constant 0.000000e+00 : f32
    %557 = vector.broadcast %cst_139 : f32 to vector<16x128xf32>
    %558 = arith.select %67, %145, %557 : vector<16x128xi1>, vector<16x128xf32>
    %c1_i32_140 = arith.constant 1 : i32
    %559 = tpu.dynamic_rotate %558 by %c1_i32_140 dim 0 : vector<16x128xf32>, i32 -> vector<16x128xf32>
    %c19 = arith.constant 19 : index
    %560 = memref.load %arg4[%c19] : memref<144xf32, #tpu.memory_space<smem>>
    %561 = vector.broadcast %560 : f32 to vector<16x128xf32>
    %562 = arith.mulf %561, %559 : vector<16x128xf32>
    %563 = arith.addf %544, %562 : vector<16x128xf32>
    %c55 = arith.constant 55 : index
    %564 = memref.load %arg4[%c55] : memref<144xf32, #tpu.memory_space<smem>>
    %565 = vector.broadcast %564 : f32 to vector<16x128xf32>
    %566 = arith.mulf %565, %559 : vector<16x128xf32>
    %567 = arith.addf %548, %566 : vector<16x128xf32>
    %c91 = arith.constant 91 : index
    %568 = memref.load %arg4[%c91] : memref<144xf32, #tpu.memory_space<smem>>
    %569 = vector.broadcast %568 : f32 to vector<16x128xf32>
    %570 = arith.mulf %569, %559 : vector<16x128xf32>
    %571 = arith.addf %552, %570 : vector<16x128xf32>
    %c127 = arith.constant 127 : index
    %572 = memref.load %arg4[%c127] : memref<144xf32, #tpu.memory_space<smem>>
    %573 = vector.broadcast %572 : f32 to vector<16x128xf32>
    %574 = arith.mulf %573, %559 : vector<16x128xf32>
    %575 = arith.addf %556, %574 : vector<16x128xf32>
    %c22 = arith.constant 22 : index
    %576 = memref.load %arg4[%c22] : memref<144xf32, #tpu.memory_space<smem>>
    %577 = vector.broadcast %576 : f32 to vector<16x128xf32>
    %578 = arith.mulf %577, %145 : vector<16x128xf32>
    %579 = arith.addf %563, %578 : vector<16x128xf32>
    %c58 = arith.constant 58 : index
    %580 = memref.load %arg4[%c58] : memref<144xf32, #tpu.memory_space<smem>>
    %581 = vector.broadcast %580 : f32 to vector<16x128xf32>
    %582 = arith.mulf %581, %145 : vector<16x128xf32>
    %583 = arith.addf %567, %582 : vector<16x128xf32>
    %c94 = arith.constant 94 : index
    %584 = memref.load %arg4[%c94] : memref<144xf32, #tpu.memory_space<smem>>
    %585 = vector.broadcast %584 : f32 to vector<16x128xf32>
    %586 = arith.mulf %585, %145 : vector<16x128xf32>
    %587 = arith.addf %571, %586 : vector<16x128xf32>
    %c130 = arith.constant 130 : index
    %588 = memref.load %arg4[%c130] : memref<144xf32, #tpu.memory_space<smem>>
    %589 = vector.broadcast %588 : f32 to vector<16x128xf32>
    %590 = arith.mulf %589, %145 : vector<16x128xf32>
    %591 = arith.addf %575, %590 : vector<16x128xf32>
    %cst_141 = arith.constant 0.000000e+00 : f32
    %592 = vector.broadcast %cst_141 : f32 to vector<16x128xf32>
    %593 = arith.select %69, %145, %592 : vector<16x128xi1>, vector<16x128xf32>
    %c15_i32_142 = arith.constant 15 : i32
    %594 = tpu.dynamic_rotate %593 by %c15_i32_142 dim 0 : vector<16x128xf32>, i32 -> vector<16x128xf32>
    %c25 = arith.constant 25 : index
    %595 = memref.load %arg4[%c25] : memref<144xf32, #tpu.memory_space<smem>>
    %596 = vector.broadcast %595 : f32 to vector<16x128xf32>
    %597 = arith.mulf %596, %594 : vector<16x128xf32>
    %598 = arith.addf %579, %597 : vector<16x128xf32>
    %c61 = arith.constant 61 : index
    %599 = memref.load %arg4[%c61] : memref<144xf32, #tpu.memory_space<smem>>
    %600 = vector.broadcast %599 : f32 to vector<16x128xf32>
    %601 = arith.mulf %600, %594 : vector<16x128xf32>
    %602 = arith.addf %583, %601 : vector<16x128xf32>
    %c97 = arith.constant 97 : index
    %603 = memref.load %arg4[%c97] : memref<144xf32, #tpu.memory_space<smem>>
    %604 = vector.broadcast %603 : f32 to vector<16x128xf32>
    %605 = arith.mulf %604, %594 : vector<16x128xf32>
    %606 = arith.addf %587, %605 : vector<16x128xf32>
    %c133 = arith.constant 133 : index
    %607 = memref.load %arg4[%c133] : memref<144xf32, #tpu.memory_space<smem>>
    %608 = vector.broadcast %607 : f32 to vector<16x128xf32>
    %609 = arith.mulf %608, %594 : vector<16x128xf32>
    %610 = arith.addf %591, %609 : vector<16x128xf32>
    %c127_i32_143 = arith.constant 127 : i32
    %611 = tpu.dynamic_rotate %145 by %c127_i32_143 dim 1 : vector<16x128xf32>, i32 -> vector<16x128xf32>
    %cst_144 = arith.constant 0.000000e+00 : f32
    %612 = vector.broadcast %cst_144 : f32 to vector<16x128xf32>
    %613 = arith.select %65, %611, %612 : vector<16x128xi1>, vector<16x128xf32>
    %cst_145 = arith.constant 0.000000e+00 : f32
    %614 = vector.broadcast %cst_145 : f32 to vector<16x128xf32>
    %615 = arith.select %67, %613, %614 : vector<16x128xi1>, vector<16x128xf32>
    %c1_i32_146 = arith.constant 1 : i32
    %616 = tpu.dynamic_rotate %615 by %c1_i32_146 dim 0 : vector<16x128xf32>, i32 -> vector<16x128xf32>
    %c20 = arith.constant 20 : index
    %617 = memref.load %arg4[%c20] : memref<144xf32, #tpu.memory_space<smem>>
    %618 = vector.broadcast %617 : f32 to vector<16x128xf32>
    %619 = arith.mulf %618, %616 : vector<16x128xf32>
    %620 = arith.addf %598, %619 : vector<16x128xf32>
    %c56 = arith.constant 56 : index
    %621 = memref.load %arg4[%c56] : memref<144xf32, #tpu.memory_space<smem>>
    %622 = vector.broadcast %621 : f32 to vector<16x128xf32>
    %623 = arith.mulf %622, %616 : vector<16x128xf32>
    %624 = arith.addf %602, %623 : vector<16x128xf32>
    %c92 = arith.constant 92 : index
    %625 = memref.load %arg4[%c92] : memref<144xf32, #tpu.memory_space<smem>>
    %626 = vector.broadcast %625 : f32 to vector<16x128xf32>
    %627 = arith.mulf %626, %616 : vector<16x128xf32>
    %628 = arith.addf %606, %627 : vector<16x128xf32>
    %c128 = arith.constant 128 : index
    %629 = memref.load %arg4[%c128] : memref<144xf32, #tpu.memory_space<smem>>
    %630 = vector.broadcast %629 : f32 to vector<16x128xf32>
    %631 = arith.mulf %630, %616 : vector<16x128xf32>
    %632 = arith.addf %610, %631 : vector<16x128xf32>
    %c23 = arith.constant 23 : index
    %633 = memref.load %arg4[%c23] : memref<144xf32, #tpu.memory_space<smem>>
    %634 = vector.broadcast %633 : f32 to vector<16x128xf32>
    %635 = arith.mulf %634, %613 : vector<16x128xf32>
    %636 = arith.addf %620, %635 : vector<16x128xf32>
    %c59 = arith.constant 59 : index
    %637 = memref.load %arg4[%c59] : memref<144xf32, #tpu.memory_space<smem>>
    %638 = vector.broadcast %637 : f32 to vector<16x128xf32>
    %639 = arith.mulf %638, %613 : vector<16x128xf32>
    %640 = arith.addf %624, %639 : vector<16x128xf32>
    %c95 = arith.constant 95 : index
    %641 = memref.load %arg4[%c95] : memref<144xf32, #tpu.memory_space<smem>>
    %642 = vector.broadcast %641 : f32 to vector<16x128xf32>
    %643 = arith.mulf %642, %613 : vector<16x128xf32>
    %644 = arith.addf %628, %643 : vector<16x128xf32>
    %c131 = arith.constant 131 : index
    %645 = memref.load %arg4[%c131] : memref<144xf32, #tpu.memory_space<smem>>
    %646 = vector.broadcast %645 : f32 to vector<16x128xf32>
    %647 = arith.mulf %646, %613 : vector<16x128xf32>
    %648 = arith.addf %632, %647 : vector<16x128xf32>
    %cst_147 = arith.constant 0.000000e+00 : f32
    %649 = vector.broadcast %cst_147 : f32 to vector<16x128xf32>
    %650 = arith.select %69, %613, %649 : vector<16x128xi1>, vector<16x128xf32>
    %c15_i32_148 = arith.constant 15 : i32
    %651 = tpu.dynamic_rotate %650 by %c15_i32_148 dim 0 : vector<16x128xf32>, i32 -> vector<16x128xf32>
    %c26 = arith.constant 26 : index
    %652 = memref.load %arg4[%c26] : memref<144xf32, #tpu.memory_space<smem>>
    %653 = vector.broadcast %652 : f32 to vector<16x128xf32>
    %654 = arith.mulf %653, %651 : vector<16x128xf32>
    %655 = arith.addf %636, %654 : vector<16x128xf32>
    %c62 = arith.constant 62 : index
    %656 = memref.load %arg4[%c62] : memref<144xf32, #tpu.memory_space<smem>>
    %657 = vector.broadcast %656 : f32 to vector<16x128xf32>
    %658 = arith.mulf %657, %651 : vector<16x128xf32>
    %659 = arith.addf %640, %658 : vector<16x128xf32>
    %c98 = arith.constant 98 : index
    %660 = memref.load %arg4[%c98] : memref<144xf32, #tpu.memory_space<smem>>
    %661 = vector.broadcast %660 : f32 to vector<16x128xf32>
    %662 = arith.mulf %661, %651 : vector<16x128xf32>
    %663 = arith.addf %644, %662 : vector<16x128xf32>
    %c134 = arith.constant 134 : index
    %664 = memref.load %arg4[%c134] : memref<144xf32, #tpu.memory_space<smem>>
    %665 = vector.broadcast %664 : f32 to vector<16x128xf32>
    %666 = arith.mulf %665, %651 : vector<16x128xf32>
    %667 = arith.addf %648, %666 : vector<16x128xf32>
    %c1_i32_149 = arith.constant 1 : i32
    %668 = tpu.dynamic_rotate %167 by %c1_i32_149 dim 1 : vector<16x128xf32>, i32 -> vector<16x128xf32>
    %cst_150 = arith.constant 0.000000e+00 : f32
    %669 = vector.broadcast %cst_150 : f32 to vector<16x128xf32>
    %670 = arith.select %54, %668, %669 : vector<16x128xi1>, vector<16x128xf32>
    %cst_151 = arith.constant 0.000000e+00 : f32
    %671 = vector.broadcast %cst_151 : f32 to vector<16x128xf32>
    %672 = arith.select %67, %670, %671 : vector<16x128xi1>, vector<16x128xf32>
    %c1_i32_152 = arith.constant 1 : i32
    %673 = tpu.dynamic_rotate %672 by %c1_i32_152 dim 0 : vector<16x128xf32>, i32 -> vector<16x128xf32>
    %c27 = arith.constant 27 : index
    %674 = memref.load %arg4[%c27] : memref<144xf32, #tpu.memory_space<smem>>
    %675 = vector.broadcast %674 : f32 to vector<16x128xf32>
    %676 = arith.mulf %675, %673 : vector<16x128xf32>
    %677 = arith.addf %655, %676 : vector<16x128xf32>
    %c63 = arith.constant 63 : index
    %678 = memref.load %arg4[%c63] : memref<144xf32, #tpu.memory_space<smem>>
    %679 = vector.broadcast %678 : f32 to vector<16x128xf32>
    %680 = arith.mulf %679, %673 : vector<16x128xf32>
    %681 = arith.addf %659, %680 : vector<16x128xf32>
    %c99 = arith.constant 99 : index
    %682 = memref.load %arg4[%c99] : memref<144xf32, #tpu.memory_space<smem>>
    %683 = vector.broadcast %682 : f32 to vector<16x128xf32>
    %684 = arith.mulf %683, %673 : vector<16x128xf32>
    %685 = arith.addf %663, %684 : vector<16x128xf32>
    %c135 = arith.constant 135 : index
    %686 = memref.load %arg4[%c135] : memref<144xf32, #tpu.memory_space<smem>>
    %687 = vector.broadcast %686 : f32 to vector<16x128xf32>
    %688 = arith.mulf %687, %673 : vector<16x128xf32>
    %689 = arith.addf %667, %688 : vector<16x128xf32>
    %c30 = arith.constant 30 : index
    %690 = memref.load %arg4[%c30] : memref<144xf32, #tpu.memory_space<smem>>
    %691 = vector.broadcast %690 : f32 to vector<16x128xf32>
    %692 = arith.mulf %691, %670 : vector<16x128xf32>
    %693 = arith.addf %677, %692 : vector<16x128xf32>
    %c66 = arith.constant 66 : index
    %694 = memref.load %arg4[%c66] : memref<144xf32, #tpu.memory_space<smem>>
    %695 = vector.broadcast %694 : f32 to vector<16x128xf32>
    %696 = arith.mulf %695, %670 : vector<16x128xf32>
    %697 = arith.addf %681, %696 : vector<16x128xf32>
    %c102 = arith.constant 102 : index
    %698 = memref.load %arg4[%c102] : memref<144xf32, #tpu.memory_space<smem>>
    %699 = vector.broadcast %698 : f32 to vector<16x128xf32>
    %700 = arith.mulf %699, %670 : vector<16x128xf32>
    %701 = arith.addf %685, %700 : vector<16x128xf32>
    %c138 = arith.constant 138 : index
    %702 = memref.load %arg4[%c138] : memref<144xf32, #tpu.memory_space<smem>>
    %703 = vector.broadcast %702 : f32 to vector<16x128xf32>
    %704 = arith.mulf %703, %670 : vector<16x128xf32>
    %705 = arith.addf %689, %704 : vector<16x128xf32>
    %cst_153 = arith.constant 0.000000e+00 : f32
    %706 = vector.broadcast %cst_153 : f32 to vector<16x128xf32>
    %707 = arith.select %69, %670, %706 : vector<16x128xi1>, vector<16x128xf32>
    %c15_i32_154 = arith.constant 15 : i32
    %708 = tpu.dynamic_rotate %707 by %c15_i32_154 dim 0 : vector<16x128xf32>, i32 -> vector<16x128xf32>
    %c33 = arith.constant 33 : index
    %709 = memref.load %arg4[%c33] : memref<144xf32, #tpu.memory_space<smem>>
    %710 = vector.broadcast %709 : f32 to vector<16x128xf32>
    %711 = arith.mulf %710, %708 : vector<16x128xf32>
    %712 = arith.addf %693, %711 : vector<16x128xf32>
    %c69 = arith.constant 69 : index
    %713 = memref.load %arg4[%c69] : memref<144xf32, #tpu.memory_space<smem>>
    %714 = vector.broadcast %713 : f32 to vector<16x128xf32>
    %715 = arith.mulf %714, %708 : vector<16x128xf32>
    %716 = arith.addf %697, %715 : vector<16x128xf32>
    %c105 = arith.constant 105 : index
    %717 = memref.load %arg4[%c105] : memref<144xf32, #tpu.memory_space<smem>>
    %718 = vector.broadcast %717 : f32 to vector<16x128xf32>
    %719 = arith.mulf %718, %708 : vector<16x128xf32>
    %720 = arith.addf %701, %719 : vector<16x128xf32>
    %c141 = arith.constant 141 : index
    %721 = memref.load %arg4[%c141] : memref<144xf32, #tpu.memory_space<smem>>
    %722 = vector.broadcast %721 : f32 to vector<16x128xf32>
    %723 = arith.mulf %722, %708 : vector<16x128xf32>
    %724 = arith.addf %705, %723 : vector<16x128xf32>
    %cst_155 = arith.constant 0.000000e+00 : f32
    %725 = vector.broadcast %cst_155 : f32 to vector<16x128xf32>
    %726 = arith.select %67, %167, %725 : vector<16x128xi1>, vector<16x128xf32>
    %c1_i32_156 = arith.constant 1 : i32
    %727 = tpu.dynamic_rotate %726 by %c1_i32_156 dim 0 : vector<16x128xf32>, i32 -> vector<16x128xf32>
    %c28 = arith.constant 28 : index
    %728 = memref.load %arg4[%c28] : memref<144xf32, #tpu.memory_space<smem>>
    %729 = vector.broadcast %728 : f32 to vector<16x128xf32>
    %730 = arith.mulf %729, %727 : vector<16x128xf32>
    %731 = arith.addf %712, %730 : vector<16x128xf32>
    %c64 = arith.constant 64 : index
    %732 = memref.load %arg4[%c64] : memref<144xf32, #tpu.memory_space<smem>>
    %733 = vector.broadcast %732 : f32 to vector<16x128xf32>
    %734 = arith.mulf %733, %727 : vector<16x128xf32>
    %735 = arith.addf %716, %734 : vector<16x128xf32>
    %c100 = arith.constant 100 : index
    %736 = memref.load %arg4[%c100] : memref<144xf32, #tpu.memory_space<smem>>
    %737 = vector.broadcast %736 : f32 to vector<16x128xf32>
    %738 = arith.mulf %737, %727 : vector<16x128xf32>
    %739 = arith.addf %720, %738 : vector<16x128xf32>
    %c136 = arith.constant 136 : index
    %740 = memref.load %arg4[%c136] : memref<144xf32, #tpu.memory_space<smem>>
    %741 = vector.broadcast %740 : f32 to vector<16x128xf32>
    %742 = arith.mulf %741, %727 : vector<16x128xf32>
    %743 = arith.addf %724, %742 : vector<16x128xf32>
    %c31 = arith.constant 31 : index
    %744 = memref.load %arg4[%c31] : memref<144xf32, #tpu.memory_space<smem>>
    %745 = vector.broadcast %744 : f32 to vector<16x128xf32>
    %746 = arith.mulf %745, %167 : vector<16x128xf32>
    %747 = arith.addf %731, %746 : vector<16x128xf32>
    %c67 = arith.constant 67 : index
    %748 = memref.load %arg4[%c67] : memref<144xf32, #tpu.memory_space<smem>>
    %749 = vector.broadcast %748 : f32 to vector<16x128xf32>
    %750 = arith.mulf %749, %167 : vector<16x128xf32>
    %751 = arith.addf %735, %750 : vector<16x128xf32>
    %c103 = arith.constant 103 : index
    %752 = memref.load %arg4[%c103] : memref<144xf32, #tpu.memory_space<smem>>
    %753 = vector.broadcast %752 : f32 to vector<16x128xf32>
    %754 = arith.mulf %753, %167 : vector<16x128xf32>
    %755 = arith.addf %739, %754 : vector<16x128xf32>
    %c139 = arith.constant 139 : index
    %756 = memref.load %arg4[%c139] : memref<144xf32, #tpu.memory_space<smem>>
    %757 = vector.broadcast %756 : f32 to vector<16x128xf32>
    %758 = arith.mulf %757, %167 : vector<16x128xf32>
    %759 = arith.addf %743, %758 : vector<16x128xf32>
    %cst_157 = arith.constant 0.000000e+00 : f32
    %760 = vector.broadcast %cst_157 : f32 to vector<16x128xf32>
    %761 = arith.select %69, %167, %760 : vector<16x128xi1>, vector<16x128xf32>
    %c15_i32_158 = arith.constant 15 : i32
    %762 = tpu.dynamic_rotate %761 by %c15_i32_158 dim 0 : vector<16x128xf32>, i32 -> vector<16x128xf32>
    %c34 = arith.constant 34 : index
    %763 = memref.load %arg4[%c34] : memref<144xf32, #tpu.memory_space<smem>>
    %764 = vector.broadcast %763 : f32 to vector<16x128xf32>
    %765 = arith.mulf %764, %762 : vector<16x128xf32>
    %766 = arith.addf %747, %765 : vector<16x128xf32>
    %c70 = arith.constant 70 : index
    %767 = memref.load %arg4[%c70] : memref<144xf32, #tpu.memory_space<smem>>
    %768 = vector.broadcast %767 : f32 to vector<16x128xf32>
    %769 = arith.mulf %768, %762 : vector<16x128xf32>
    %770 = arith.addf %751, %769 : vector<16x128xf32>
    %c106 = arith.constant 106 : index
    %771 = memref.load %arg4[%c106] : memref<144xf32, #tpu.memory_space<smem>>
    %772 = vector.broadcast %771 : f32 to vector<16x128xf32>
    %773 = arith.mulf %772, %762 : vector<16x128xf32>
    %774 = arith.addf %755, %773 : vector<16x128xf32>
    %c142 = arith.constant 142 : index
    %775 = memref.load %arg4[%c142] : memref<144xf32, #tpu.memory_space<smem>>
    %776 = vector.broadcast %775 : f32 to vector<16x128xf32>
    %777 = arith.mulf %776, %762 : vector<16x128xf32>
    %778 = arith.addf %759, %777 : vector<16x128xf32>
    %c127_i32_159 = arith.constant 127 : i32
    %779 = tpu.dynamic_rotate %167 by %c127_i32_159 dim 1 : vector<16x128xf32>, i32 -> vector<16x128xf32>
    %cst_160 = arith.constant 0.000000e+00 : f32
    %780 = vector.broadcast %cst_160 : f32 to vector<16x128xf32>
    %781 = arith.select %65, %779, %780 : vector<16x128xi1>, vector<16x128xf32>
    %cst_161 = arith.constant 0.000000e+00 : f32
    %782 = vector.broadcast %cst_161 : f32 to vector<16x128xf32>
    %783 = arith.select %67, %781, %782 : vector<16x128xi1>, vector<16x128xf32>
    %c1_i32_162 = arith.constant 1 : i32
    %784 = tpu.dynamic_rotate %783 by %c1_i32_162 dim 0 : vector<16x128xf32>, i32 -> vector<16x128xf32>
    %c29 = arith.constant 29 : index
    %785 = memref.load %arg4[%c29] : memref<144xf32, #tpu.memory_space<smem>>
    %786 = vector.broadcast %785 : f32 to vector<16x128xf32>
    %787 = arith.mulf %786, %784 : vector<16x128xf32>
    %788 = arith.addf %766, %787 : vector<16x128xf32>
    %c65 = arith.constant 65 : index
    %789 = memref.load %arg4[%c65] : memref<144xf32, #tpu.memory_space<smem>>
    %790 = vector.broadcast %789 : f32 to vector<16x128xf32>
    %791 = arith.mulf %790, %784 : vector<16x128xf32>
    %792 = arith.addf %770, %791 : vector<16x128xf32>
    %c101 = arith.constant 101 : index
    %793 = memref.load %arg4[%c101] : memref<144xf32, #tpu.memory_space<smem>>
    %794 = vector.broadcast %793 : f32 to vector<16x128xf32>
    %795 = arith.mulf %794, %784 : vector<16x128xf32>
    %796 = arith.addf %774, %795 : vector<16x128xf32>
    %c137 = arith.constant 137 : index
    %797 = memref.load %arg4[%c137] : memref<144xf32, #tpu.memory_space<smem>>
    %798 = vector.broadcast %797 : f32 to vector<16x128xf32>
    %799 = arith.mulf %798, %784 : vector<16x128xf32>
    %800 = arith.addf %778, %799 : vector<16x128xf32>
    %c32 = arith.constant 32 : index
    %801 = memref.load %arg4[%c32] : memref<144xf32, #tpu.memory_space<smem>>
    %802 = vector.broadcast %801 : f32 to vector<16x128xf32>
    %803 = arith.mulf %802, %781 : vector<16x128xf32>
    %804 = arith.addf %788, %803 : vector<16x128xf32>
    %c68 = arith.constant 68 : index
    %805 = memref.load %arg4[%c68] : memref<144xf32, #tpu.memory_space<smem>>
    %806 = vector.broadcast %805 : f32 to vector<16x128xf32>
    %807 = arith.mulf %806, %781 : vector<16x128xf32>
    %808 = arith.addf %792, %807 : vector<16x128xf32>
    %c104 = arith.constant 104 : index
    %809 = memref.load %arg4[%c104] : memref<144xf32, #tpu.memory_space<smem>>
    %810 = vector.broadcast %809 : f32 to vector<16x128xf32>
    %811 = arith.mulf %810, %781 : vector<16x128xf32>
    %812 = arith.addf %796, %811 : vector<16x128xf32>
    %c140 = arith.constant 140 : index
    %813 = memref.load %arg4[%c140] : memref<144xf32, #tpu.memory_space<smem>>
    %814 = vector.broadcast %813 : f32 to vector<16x128xf32>
    %815 = arith.mulf %814, %781 : vector<16x128xf32>
    %816 = arith.addf %800, %815 : vector<16x128xf32>
    %cst_163 = arith.constant 0.000000e+00 : f32
    %817 = vector.broadcast %cst_163 : f32 to vector<16x128xf32>
    %818 = arith.select %69, %781, %817 : vector<16x128xi1>, vector<16x128xf32>
    %c15_i32_164 = arith.constant 15 : i32
    %819 = tpu.dynamic_rotate %818 by %c15_i32_164 dim 0 : vector<16x128xf32>, i32 -> vector<16x128xf32>
    %c35 = arith.constant 35 : index
    %820 = memref.load %arg4[%c35] : memref<144xf32, #tpu.memory_space<smem>>
    %821 = vector.broadcast %820 : f32 to vector<16x128xf32>
    %822 = arith.mulf %821, %819 : vector<16x128xf32>
    %823 = arith.addf %804, %822 : vector<16x128xf32>
    %c71 = arith.constant 71 : index
    %824 = memref.load %arg4[%c71] : memref<144xf32, #tpu.memory_space<smem>>
    %825 = vector.broadcast %824 : f32 to vector<16x128xf32>
    %826 = arith.mulf %825, %819 : vector<16x128xf32>
    %827 = arith.addf %808, %826 : vector<16x128xf32>
    %c107 = arith.constant 107 : index
    %828 = memref.load %arg4[%c107] : memref<144xf32, #tpu.memory_space<smem>>
    %829 = vector.broadcast %828 : f32 to vector<16x128xf32>
    %830 = arith.mulf %829, %819 : vector<16x128xf32>
    %831 = arith.addf %812, %830 : vector<16x128xf32>
    %c143 = arith.constant 143 : index
    %832 = memref.load %arg4[%c143] : memref<144xf32, #tpu.memory_space<smem>>
    %833 = vector.broadcast %832 : f32 to vector<16x128xf32>
    %834 = arith.mulf %833, %819 : vector<16x128xf32>
    %835 = arith.addf %816, %834 : vector<16x128xf32>
    %c0_165 = arith.constant 0 : index
    %c0_166 = arith.constant 0 : index
    %836 = vector.load %arg6[%c0_165, %c0_166] : memref<16x1xf32, #tpu.memory_space<vmem>>, vector<16x1xf32>
    %c0_167 = arith.constant 0 : index
    %c0_168 = arith.constant 0 : index
    %837 = vector.load %arg7[%c0_167, %c0_168] : memref<16x1xf32, #tpu.memory_space<vmem>>, vector<16x1xf32>
    %cst_169 = arith.constant dense<0.000000e+00> : vector<128xf32>
    %838 = vector.multi_reduction <add>, %823, %cst_169 [0] : vector<16x128xf32> to vector<128xf32>
    %839 = vector.shape_cast %838 : vector<128xf32> to vector<1x128xf32>
    %cst_170 = arith.constant 1.600000e+01 : f32
    %840 = vector.broadcast %cst_170 : f32 to vector<1x128xf32>
    %841 = arith.divf %839, %840 : vector<1x128xf32>
    %842 = vector.broadcast %841 : vector<1x128xf32> to vector<16x128xf32>
    %843 = arith.subf %823, %842 : vector<16x128xf32>
    %844 = arith.mulf %843, %843 : vector<16x128xf32>
    %cst_171 = arith.constant dense<0.000000e+00> : vector<128xf32>
    %845 = vector.multi_reduction <add>, %844, %cst_171 [0] : vector<16x128xf32> to vector<128xf32>
    %846 = vector.shape_cast %845 : vector<128xf32> to vector<1x128xf32>
    %cst_172 = arith.constant 1.600000e+01 : f32
    %847 = vector.broadcast %cst_172 : f32 to vector<1x128xf32>
    %848 = arith.divf %846, %847 : vector<1x128xf32>
    %cst_173 = arith.constant 9.99999974E-6 : f32
    %849 = vector.broadcast %cst_173 : f32 to vector<1x128xf32>
    %850 = arith.addf %848, %849 : vector<1x128xf32>
    %851 = math.rsqrt %850 : vector<1x128xf32>
    %852 = vector.broadcast %851 : vector<1x128xf32> to vector<16x128xf32>
    %853 = arith.mulf %843, %852 : vector<16x128xf32>
    %854 = vector.broadcast %836 : vector<16x1xf32> to vector<16x128xf32>
    %855 = arith.mulf %853, %854 : vector<16x128xf32>
    %856 = vector.broadcast %837 : vector<16x1xf32> to vector<16x128xf32>
    %857 = arith.addf %855, %856 : vector<16x128xf32>
    %cst_174 = arith.constant 0.000000e+00 : f32
    %858 = vector.broadcast %cst_174 : f32 to vector<16x128xf32>
    %859 = arith.maximumf %857, %858 : vector<16x128xf32>
    %cst_175 = arith.constant dense<0.000000e+00> : vector<128xf32>
    %860 = vector.multi_reduction <add>, %827, %cst_175 [0] : vector<16x128xf32> to vector<128xf32>
    %861 = vector.shape_cast %860 : vector<128xf32> to vector<1x128xf32>
    %cst_176 = arith.constant 1.600000e+01 : f32
    %862 = vector.broadcast %cst_176 : f32 to vector<1x128xf32>
    %863 = arith.divf %861, %862 : vector<1x128xf32>
    %864 = vector.broadcast %863 : vector<1x128xf32> to vector<16x128xf32>
    %865 = arith.subf %827, %864 : vector<16x128xf32>
    %866 = arith.mulf %865, %865 : vector<16x128xf32>
    %cst_177 = arith.constant dense<0.000000e+00> : vector<128xf32>
    %867 = vector.multi_reduction <add>, %866, %cst_177 [0] : vector<16x128xf32> to vector<128xf32>
    %868 = vector.shape_cast %867 : vector<128xf32> to vector<1x128xf32>
    %cst_178 = arith.constant 1.600000e+01 : f32
    %869 = vector.broadcast %cst_178 : f32 to vector<1x128xf32>
    %870 = arith.divf %868, %869 : vector<1x128xf32>
    %cst_179 = arith.constant 9.99999974E-6 : f32
    %871 = vector.broadcast %cst_179 : f32 to vector<1x128xf32>
    %872 = arith.addf %870, %871 : vector<1x128xf32>
    %873 = math.rsqrt %872 : vector<1x128xf32>
    %874 = vector.broadcast %873 : vector<1x128xf32> to vector<16x128xf32>
    %875 = arith.mulf %865, %874 : vector<16x128xf32>
    %876 = vector.broadcast %836 : vector<16x1xf32> to vector<16x128xf32>
    %877 = arith.mulf %875, %876 : vector<16x128xf32>
    %878 = vector.broadcast %837 : vector<16x1xf32> to vector<16x128xf32>
    %879 = arith.addf %877, %878 : vector<16x128xf32>
    %cst_180 = arith.constant 0.000000e+00 : f32
    %880 = vector.broadcast %cst_180 : f32 to vector<16x128xf32>
    %881 = arith.maximumf %879, %880 : vector<16x128xf32>
    %cst_181 = arith.constant dense<0.000000e+00> : vector<128xf32>
    %882 = vector.multi_reduction <add>, %831, %cst_181 [0] : vector<16x128xf32> to vector<128xf32>
    %883 = vector.shape_cast %882 : vector<128xf32> to vector<1x128xf32>
    %cst_182 = arith.constant 1.600000e+01 : f32
    %884 = vector.broadcast %cst_182 : f32 to vector<1x128xf32>
    %885 = arith.divf %883, %884 : vector<1x128xf32>
    %886 = vector.broadcast %885 : vector<1x128xf32> to vector<16x128xf32>
    %887 = arith.subf %831, %886 : vector<16x128xf32>
    %888 = arith.mulf %887, %887 : vector<16x128xf32>
    %cst_183 = arith.constant dense<0.000000e+00> : vector<128xf32>
    %889 = vector.multi_reduction <add>, %888, %cst_183 [0] : vector<16x128xf32> to vector<128xf32>
    %890 = vector.shape_cast %889 : vector<128xf32> to vector<1x128xf32>
    %cst_184 = arith.constant 1.600000e+01 : f32
    %891 = vector.broadcast %cst_184 : f32 to vector<1x128xf32>
    %892 = arith.divf %890, %891 : vector<1x128xf32>
    %cst_185 = arith.constant 9.99999974E-6 : f32
    %893 = vector.broadcast %cst_185 : f32 to vector<1x128xf32>
    %894 = arith.addf %892, %893 : vector<1x128xf32>
    %895 = math.rsqrt %894 : vector<1x128xf32>
    %896 = vector.broadcast %895 : vector<1x128xf32> to vector<16x128xf32>
    %897 = arith.mulf %887, %896 : vector<16x128xf32>
    %898 = vector.broadcast %836 : vector<16x1xf32> to vector<16x128xf32>
    %899 = arith.mulf %897, %898 : vector<16x128xf32>
    %900 = vector.broadcast %837 : vector<16x1xf32> to vector<16x128xf32>
    %901 = arith.addf %899, %900 : vector<16x128xf32>
    %cst_186 = arith.constant 0.000000e+00 : f32
    %902 = vector.broadcast %cst_186 : f32 to vector<16x128xf32>
    %903 = arith.maximumf %901, %902 : vector<16x128xf32>
    %cst_187 = arith.constant dense<0.000000e+00> : vector<128xf32>
    %904 = vector.multi_reduction <add>, %835, %cst_187 [0] : vector<16x128xf32> to vector<128xf32>
    %905 = vector.shape_cast %904 : vector<128xf32> to vector<1x128xf32>
    %cst_188 = arith.constant 1.600000e+01 : f32
    %906 = vector.broadcast %cst_188 : f32 to vector<1x128xf32>
    %907 = arith.divf %905, %906 : vector<1x128xf32>
    %908 = vector.broadcast %907 : vector<1x128xf32> to vector<16x128xf32>
    %909 = arith.subf %835, %908 : vector<16x128xf32>
    %910 = arith.mulf %909, %909 : vector<16x128xf32>
    %cst_189 = arith.constant dense<0.000000e+00> : vector<128xf32>
    %911 = vector.multi_reduction <add>, %910, %cst_189 [0] : vector<16x128xf32> to vector<128xf32>
    %912 = vector.shape_cast %911 : vector<128xf32> to vector<1x128xf32>
    %cst_190 = arith.constant 1.600000e+01 : f32
    %913 = vector.broadcast %cst_190 : f32 to vector<1x128xf32>
    %914 = arith.divf %912, %913 : vector<1x128xf32>
    %cst_191 = arith.constant 9.99999974E-6 : f32
    %915 = vector.broadcast %cst_191 : f32 to vector<1x128xf32>
    %916 = arith.addf %914, %915 : vector<1x128xf32>
    %917 = math.rsqrt %916 : vector<1x128xf32>
    %918 = vector.broadcast %917 : vector<1x128xf32> to vector<16x128xf32>
    %919 = arith.mulf %909, %918 : vector<16x128xf32>
    %920 = vector.broadcast %836 : vector<16x1xf32> to vector<16x128xf32>
    %921 = arith.mulf %919, %920 : vector<16x128xf32>
    %922 = vector.broadcast %837 : vector<16x1xf32> to vector<16x128xf32>
    %923 = arith.addf %921, %922 : vector<16x128xf32>
    %cst_192 = arith.constant 0.000000e+00 : f32
    %924 = vector.broadcast %cst_192 : f32 to vector<16x128xf32>
    %925 = arith.maximumf %923, %924 : vector<16x128xf32>
    %c1_i32_193 = arith.constant 1 : i32
    %926 = tpu.dynamic_rotate %859 by %c1_i32_193 dim 1 : vector<16x128xf32>, i32 -> vector<16x128xf32>
    %cst_194 = arith.constant 0.000000e+00 : f32
    %927 = vector.broadcast %cst_194 : f32 to vector<16x128xf32>
    %928 = arith.select %54, %926, %927 : vector<16x128xi1>, vector<16x128xf32>
    %cst_195 = arith.constant 0.000000e+00 : f32
    %929 = vector.broadcast %cst_195 : f32 to vector<16x128xf32>
    %930 = arith.select %67, %928, %929 : vector<16x128xi1>, vector<16x128xf32>
    %c1_i32_196 = arith.constant 1 : i32
    %931 = tpu.dynamic_rotate %930 by %c1_i32_196 dim 0 : vector<16x128xf32>, i32 -> vector<16x128xf32>
    %c0_197 = arith.constant 0 : index
    %932 = memref.load %arg8[%c0_197] : memref<144xf32, #tpu.memory_space<smem>>
    %933 = vector.broadcast %932 : f32 to vector<16x128xf32>
    %934 = arith.mulf %933, %931 : vector<16x128xf32>
    %c36_198 = arith.constant 36 : index
    %935 = memref.load %arg8[%c36_198] : memref<144xf32, #tpu.memory_space<smem>>
    %936 = vector.broadcast %935 : f32 to vector<16x128xf32>
    %937 = arith.mulf %936, %931 : vector<16x128xf32>
    %c72_199 = arith.constant 72 : index
    %938 = memref.load %arg8[%c72_199] : memref<144xf32, #tpu.memory_space<smem>>
    %939 = vector.broadcast %938 : f32 to vector<16x128xf32>
    %940 = arith.mulf %939, %931 : vector<16x128xf32>
    %c108_200 = arith.constant 108 : index
    %941 = memref.load %arg8[%c108_200] : memref<144xf32, #tpu.memory_space<smem>>
    %942 = vector.broadcast %941 : f32 to vector<16x128xf32>
    %943 = arith.mulf %942, %931 : vector<16x128xf32>
    %c3_201 = arith.constant 3 : index
    %944 = memref.load %arg8[%c3_201] : memref<144xf32, #tpu.memory_space<smem>>
    %945 = vector.broadcast %944 : f32 to vector<16x128xf32>
    %946 = arith.mulf %945, %928 : vector<16x128xf32>
    %947 = arith.addf %934, %946 : vector<16x128xf32>
    %c39_202 = arith.constant 39 : index
    %948 = memref.load %arg8[%c39_202] : memref<144xf32, #tpu.memory_space<smem>>
    %949 = vector.broadcast %948 : f32 to vector<16x128xf32>
    %950 = arith.mulf %949, %928 : vector<16x128xf32>
    %951 = arith.addf %937, %950 : vector<16x128xf32>
    %c75_203 = arith.constant 75 : index
    %952 = memref.load %arg8[%c75_203] : memref<144xf32, #tpu.memory_space<smem>>
    %953 = vector.broadcast %952 : f32 to vector<16x128xf32>
    %954 = arith.mulf %953, %928 : vector<16x128xf32>
    %955 = arith.addf %940, %954 : vector<16x128xf32>
    %c111_204 = arith.constant 111 : index
    %956 = memref.load %arg8[%c111_204] : memref<144xf32, #tpu.memory_space<smem>>
    %957 = vector.broadcast %956 : f32 to vector<16x128xf32>
    %958 = arith.mulf %957, %928 : vector<16x128xf32>
    %959 = arith.addf %943, %958 : vector<16x128xf32>
    %cst_205 = arith.constant 0.000000e+00 : f32
    %960 = vector.broadcast %cst_205 : f32 to vector<16x128xf32>
    %961 = arith.select %69, %928, %960 : vector<16x128xi1>, vector<16x128xf32>
    %c15_i32_206 = arith.constant 15 : i32
    %962 = tpu.dynamic_rotate %961 by %c15_i32_206 dim 0 : vector<16x128xf32>, i32 -> vector<16x128xf32>
    %c6_207 = arith.constant 6 : index
    %963 = memref.load %arg8[%c6_207] : memref<144xf32, #tpu.memory_space<smem>>
    %964 = vector.broadcast %963 : f32 to vector<16x128xf32>
    %965 = arith.mulf %964, %962 : vector<16x128xf32>
    %966 = arith.addf %947, %965 : vector<16x128xf32>
    %c42_208 = arith.constant 42 : index
    %967 = memref.load %arg8[%c42_208] : memref<144xf32, #tpu.memory_space<smem>>
    %968 = vector.broadcast %967 : f32 to vector<16x128xf32>
    %969 = arith.mulf %968, %962 : vector<16x128xf32>
    %970 = arith.addf %951, %969 : vector<16x128xf32>
    %c78_209 = arith.constant 78 : index
    %971 = memref.load %arg8[%c78_209] : memref<144xf32, #tpu.memory_space<smem>>
    %972 = vector.broadcast %971 : f32 to vector<16x128xf32>
    %973 = arith.mulf %972, %962 : vector<16x128xf32>
    %974 = arith.addf %955, %973 : vector<16x128xf32>
    %c114_210 = arith.constant 114 : index
    %975 = memref.load %arg8[%c114_210] : memref<144xf32, #tpu.memory_space<smem>>
    %976 = vector.broadcast %975 : f32 to vector<16x128xf32>
    %977 = arith.mulf %976, %962 : vector<16x128xf32>
    %978 = arith.addf %959, %977 : vector<16x128xf32>
    %cst_211 = arith.constant 0.000000e+00 : f32
    %979 = vector.broadcast %cst_211 : f32 to vector<16x128xf32>
    %980 = arith.select %67, %859, %979 : vector<16x128xi1>, vector<16x128xf32>
    %c1_i32_212 = arith.constant 1 : i32
    %981 = tpu.dynamic_rotate %980 by %c1_i32_212 dim 0 : vector<16x128xf32>, i32 -> vector<16x128xf32>
    %c1_213 = arith.constant 1 : index
    %982 = memref.load %arg8[%c1_213] : memref<144xf32, #tpu.memory_space<smem>>
    %983 = vector.broadcast %982 : f32 to vector<16x128xf32>
    %984 = arith.mulf %983, %981 : vector<16x128xf32>
    %985 = arith.addf %966, %984 : vector<16x128xf32>
    %c37_214 = arith.constant 37 : index
    %986 = memref.load %arg8[%c37_214] : memref<144xf32, #tpu.memory_space<smem>>
    %987 = vector.broadcast %986 : f32 to vector<16x128xf32>
    %988 = arith.mulf %987, %981 : vector<16x128xf32>
    %989 = arith.addf %970, %988 : vector<16x128xf32>
    %c73_215 = arith.constant 73 : index
    %990 = memref.load %arg8[%c73_215] : memref<144xf32, #tpu.memory_space<smem>>
    %991 = vector.broadcast %990 : f32 to vector<16x128xf32>
    %992 = arith.mulf %991, %981 : vector<16x128xf32>
    %993 = arith.addf %974, %992 : vector<16x128xf32>
    %c109_216 = arith.constant 109 : index
    %994 = memref.load %arg8[%c109_216] : memref<144xf32, #tpu.memory_space<smem>>
    %995 = vector.broadcast %994 : f32 to vector<16x128xf32>
    %996 = arith.mulf %995, %981 : vector<16x128xf32>
    %997 = arith.addf %978, %996 : vector<16x128xf32>
    %c4_217 = arith.constant 4 : index
    %998 = memref.load %arg8[%c4_217] : memref<144xf32, #tpu.memory_space<smem>>
    %999 = vector.broadcast %998 : f32 to vector<16x128xf32>
    %1000 = arith.mulf %999, %859 : vector<16x128xf32>
    %1001 = arith.addf %985, %1000 : vector<16x128xf32>
    %c40_218 = arith.constant 40 : index
    %1002 = memref.load %arg8[%c40_218] : memref<144xf32, #tpu.memory_space<smem>>
    %1003 = vector.broadcast %1002 : f32 to vector<16x128xf32>
    %1004 = arith.mulf %1003, %859 : vector<16x128xf32>
    %1005 = arith.addf %989, %1004 : vector<16x128xf32>
    %c76_219 = arith.constant 76 : index
    %1006 = memref.load %arg8[%c76_219] : memref<144xf32, #tpu.memory_space<smem>>
    %1007 = vector.broadcast %1006 : f32 to vector<16x128xf32>
    %1008 = arith.mulf %1007, %859 : vector<16x128xf32>
    %1009 = arith.addf %993, %1008 : vector<16x128xf32>
    %c112_220 = arith.constant 112 : index
    %1010 = memref.load %arg8[%c112_220] : memref<144xf32, #tpu.memory_space<smem>>
    %1011 = vector.broadcast %1010 : f32 to vector<16x128xf32>
    %1012 = arith.mulf %1011, %859 : vector<16x128xf32>
    %1013 = arith.addf %997, %1012 : vector<16x128xf32>
    %cst_221 = arith.constant 0.000000e+00 : f32
    %1014 = vector.broadcast %cst_221 : f32 to vector<16x128xf32>
    %1015 = arith.select %69, %859, %1014 : vector<16x128xi1>, vector<16x128xf32>
    %c15_i32_222 = arith.constant 15 : i32
    %1016 = tpu.dynamic_rotate %1015 by %c15_i32_222 dim 0 : vector<16x128xf32>, i32 -> vector<16x128xf32>
    %c7_223 = arith.constant 7 : index
    %1017 = memref.load %arg8[%c7_223] : memref<144xf32, #tpu.memory_space<smem>>
    %1018 = vector.broadcast %1017 : f32 to vector<16x128xf32>
    %1019 = arith.mulf %1018, %1016 : vector<16x128xf32>
    %1020 = arith.addf %1001, %1019 : vector<16x128xf32>
    %c43_224 = arith.constant 43 : index
    %1021 = memref.load %arg8[%c43_224] : memref<144xf32, #tpu.memory_space<smem>>
    %1022 = vector.broadcast %1021 : f32 to vector<16x128xf32>
    %1023 = arith.mulf %1022, %1016 : vector<16x128xf32>
    %1024 = arith.addf %1005, %1023 : vector<16x128xf32>
    %c79_225 = arith.constant 79 : index
    %1025 = memref.load %arg8[%c79_225] : memref<144xf32, #tpu.memory_space<smem>>
    %1026 = vector.broadcast %1025 : f32 to vector<16x128xf32>
    %1027 = arith.mulf %1026, %1016 : vector<16x128xf32>
    %1028 = arith.addf %1009, %1027 : vector<16x128xf32>
    %c115_226 = arith.constant 115 : index
    %1029 = memref.load %arg8[%c115_226] : memref<144xf32, #tpu.memory_space<smem>>
    %1030 = vector.broadcast %1029 : f32 to vector<16x128xf32>
    %1031 = arith.mulf %1030, %1016 : vector<16x128xf32>
    %1032 = arith.addf %1013, %1031 : vector<16x128xf32>
    %c127_i32_227 = arith.constant 127 : i32
    %1033 = tpu.dynamic_rotate %859 by %c127_i32_227 dim 1 : vector<16x128xf32>, i32 -> vector<16x128xf32>
    %cst_228 = arith.constant 0.000000e+00 : f32
    %1034 = vector.broadcast %cst_228 : f32 to vector<16x128xf32>
    %1035 = arith.select %65, %1033, %1034 : vector<16x128xi1>, vector<16x128xf32>
    %cst_229 = arith.constant 0.000000e+00 : f32
    %1036 = vector.broadcast %cst_229 : f32 to vector<16x128xf32>
    %1037 = arith.select %67, %1035, %1036 : vector<16x128xi1>, vector<16x128xf32>
    %c1_i32_230 = arith.constant 1 : i32
    %1038 = tpu.dynamic_rotate %1037 by %c1_i32_230 dim 0 : vector<16x128xf32>, i32 -> vector<16x128xf32>
    %c2_231 = arith.constant 2 : index
    %1039 = memref.load %arg8[%c2_231] : memref<144xf32, #tpu.memory_space<smem>>
    %1040 = vector.broadcast %1039 : f32 to vector<16x128xf32>
    %1041 = arith.mulf %1040, %1038 : vector<16x128xf32>
    %1042 = arith.addf %1020, %1041 : vector<16x128xf32>
    %c38_232 = arith.constant 38 : index
    %1043 = memref.load %arg8[%c38_232] : memref<144xf32, #tpu.memory_space<smem>>
    %1044 = vector.broadcast %1043 : f32 to vector<16x128xf32>
    %1045 = arith.mulf %1044, %1038 : vector<16x128xf32>
    %1046 = arith.addf %1024, %1045 : vector<16x128xf32>
    %c74_233 = arith.constant 74 : index
    %1047 = memref.load %arg8[%c74_233] : memref<144xf32, #tpu.memory_space<smem>>
    %1048 = vector.broadcast %1047 : f32 to vector<16x128xf32>
    %1049 = arith.mulf %1048, %1038 : vector<16x128xf32>
    %1050 = arith.addf %1028, %1049 : vector<16x128xf32>
    %c110_234 = arith.constant 110 : index
    %1051 = memref.load %arg8[%c110_234] : memref<144xf32, #tpu.memory_space<smem>>
    %1052 = vector.broadcast %1051 : f32 to vector<16x128xf32>
    %1053 = arith.mulf %1052, %1038 : vector<16x128xf32>
    %1054 = arith.addf %1032, %1053 : vector<16x128xf32>
    %c5_235 = arith.constant 5 : index
    %1055 = memref.load %arg8[%c5_235] : memref<144xf32, #tpu.memory_space<smem>>
    %1056 = vector.broadcast %1055 : f32 to vector<16x128xf32>
    %1057 = arith.mulf %1056, %1035 : vector<16x128xf32>
    %1058 = arith.addf %1042, %1057 : vector<16x128xf32>
    %c41_236 = arith.constant 41 : index
    %1059 = memref.load %arg8[%c41_236] : memref<144xf32, #tpu.memory_space<smem>>
    %1060 = vector.broadcast %1059 : f32 to vector<16x128xf32>
    %1061 = arith.mulf %1060, %1035 : vector<16x128xf32>
    %1062 = arith.addf %1046, %1061 : vector<16x128xf32>
    %c77_237 = arith.constant 77 : index
    %1063 = memref.load %arg8[%c77_237] : memref<144xf32, #tpu.memory_space<smem>>
    %1064 = vector.broadcast %1063 : f32 to vector<16x128xf32>
    %1065 = arith.mulf %1064, %1035 : vector<16x128xf32>
    %1066 = arith.addf %1050, %1065 : vector<16x128xf32>
    %c113_238 = arith.constant 113 : index
    %1067 = memref.load %arg8[%c113_238] : memref<144xf32, #tpu.memory_space<smem>>
    %1068 = vector.broadcast %1067 : f32 to vector<16x128xf32>
    %1069 = arith.mulf %1068, %1035 : vector<16x128xf32>
    %1070 = arith.addf %1054, %1069 : vector<16x128xf32>
    %cst_239 = arith.constant 0.000000e+00 : f32
    %1071 = vector.broadcast %cst_239 : f32 to vector<16x128xf32>
    %1072 = arith.select %69, %1035, %1071 : vector<16x128xi1>, vector<16x128xf32>
    %c15_i32_240 = arith.constant 15 : i32
    %1073 = tpu.dynamic_rotate %1072 by %c15_i32_240 dim 0 : vector<16x128xf32>, i32 -> vector<16x128xf32>
    %c8_241 = arith.constant 8 : index
    %1074 = memref.load %arg8[%c8_241] : memref<144xf32, #tpu.memory_space<smem>>
    %1075 = vector.broadcast %1074 : f32 to vector<16x128xf32>
    %1076 = arith.mulf %1075, %1073 : vector<16x128xf32>
    %1077 = arith.addf %1058, %1076 : vector<16x128xf32>
    %c44_242 = arith.constant 44 : index
    %1078 = memref.load %arg8[%c44_242] : memref<144xf32, #tpu.memory_space<smem>>
    %1079 = vector.broadcast %1078 : f32 to vector<16x128xf32>
    %1080 = arith.mulf %1079, %1073 : vector<16x128xf32>
    %1081 = arith.addf %1062, %1080 : vector<16x128xf32>
    %c80_243 = arith.constant 80 : index
    %1082 = memref.load %arg8[%c80_243] : memref<144xf32, #tpu.memory_space<smem>>
    %1083 = vector.broadcast %1082 : f32 to vector<16x128xf32>
    %1084 = arith.mulf %1083, %1073 : vector<16x128xf32>
    %1085 = arith.addf %1066, %1084 : vector<16x128xf32>
    %c116_244 = arith.constant 116 : index
    %1086 = memref.load %arg8[%c116_244] : memref<144xf32, #tpu.memory_space<smem>>
    %1087 = vector.broadcast %1086 : f32 to vector<16x128xf32>
    %1088 = arith.mulf %1087, %1073 : vector<16x128xf32>
    %1089 = arith.addf %1070, %1088 : vector<16x128xf32>
    %c1_i32_245 = arith.constant 1 : i32
    %1090 = tpu.dynamic_rotate %881 by %c1_i32_245 dim 1 : vector<16x128xf32>, i32 -> vector<16x128xf32>
    %cst_246 = arith.constant 0.000000e+00 : f32
    %1091 = vector.broadcast %cst_246 : f32 to vector<16x128xf32>
    %1092 = arith.select %54, %1090, %1091 : vector<16x128xi1>, vector<16x128xf32>
    %cst_247 = arith.constant 0.000000e+00 : f32
    %1093 = vector.broadcast %cst_247 : f32 to vector<16x128xf32>
    %1094 = arith.select %67, %1092, %1093 : vector<16x128xi1>, vector<16x128xf32>
    %c1_i32_248 = arith.constant 1 : i32
    %1095 = tpu.dynamic_rotate %1094 by %c1_i32_248 dim 0 : vector<16x128xf32>, i32 -> vector<16x128xf32>
    %c9_249 = arith.constant 9 : index
    %1096 = memref.load %arg8[%c9_249] : memref<144xf32, #tpu.memory_space<smem>>
    %1097 = vector.broadcast %1096 : f32 to vector<16x128xf32>
    %1098 = arith.mulf %1097, %1095 : vector<16x128xf32>
    %1099 = arith.addf %1077, %1098 : vector<16x128xf32>
    %c45_250 = arith.constant 45 : index
    %1100 = memref.load %arg8[%c45_250] : memref<144xf32, #tpu.memory_space<smem>>
    %1101 = vector.broadcast %1100 : f32 to vector<16x128xf32>
    %1102 = arith.mulf %1101, %1095 : vector<16x128xf32>
    %1103 = arith.addf %1081, %1102 : vector<16x128xf32>
    %c81_251 = arith.constant 81 : index
    %1104 = memref.load %arg8[%c81_251] : memref<144xf32, #tpu.memory_space<smem>>
    %1105 = vector.broadcast %1104 : f32 to vector<16x128xf32>
    %1106 = arith.mulf %1105, %1095 : vector<16x128xf32>
    %1107 = arith.addf %1085, %1106 : vector<16x128xf32>
    %c117_252 = arith.constant 117 : index
    %1108 = memref.load %arg8[%c117_252] : memref<144xf32, #tpu.memory_space<smem>>
    %1109 = vector.broadcast %1108 : f32 to vector<16x128xf32>
    %1110 = arith.mulf %1109, %1095 : vector<16x128xf32>
    %1111 = arith.addf %1089, %1110 : vector<16x128xf32>
    %c12_253 = arith.constant 12 : index
    %1112 = memref.load %arg8[%c12_253] : memref<144xf32, #tpu.memory_space<smem>>
    %1113 = vector.broadcast %1112 : f32 to vector<16x128xf32>
    %1114 = arith.mulf %1113, %1092 : vector<16x128xf32>
    %1115 = arith.addf %1099, %1114 : vector<16x128xf32>
    %c48_254 = arith.constant 48 : index
    %1116 = memref.load %arg8[%c48_254] : memref<144xf32, #tpu.memory_space<smem>>
    %1117 = vector.broadcast %1116 : f32 to vector<16x128xf32>
    %1118 = arith.mulf %1117, %1092 : vector<16x128xf32>
    %1119 = arith.addf %1103, %1118 : vector<16x128xf32>
    %c84_255 = arith.constant 84 : index
    %1120 = memref.load %arg8[%c84_255] : memref<144xf32, #tpu.memory_space<smem>>
    %1121 = vector.broadcast %1120 : f32 to vector<16x128xf32>
    %1122 = arith.mulf %1121, %1092 : vector<16x128xf32>
    %1123 = arith.addf %1107, %1122 : vector<16x128xf32>
    %c120_256 = arith.constant 120 : index
    %1124 = memref.load %arg8[%c120_256] : memref<144xf32, #tpu.memory_space<smem>>
    %1125 = vector.broadcast %1124 : f32 to vector<16x128xf32>
    %1126 = arith.mulf %1125, %1092 : vector<16x128xf32>
    %1127 = arith.addf %1111, %1126 : vector<16x128xf32>
    %cst_257 = arith.constant 0.000000e+00 : f32
    %1128 = vector.broadcast %cst_257 : f32 to vector<16x128xf32>
    %1129 = arith.select %69, %1092, %1128 : vector<16x128xi1>, vector<16x128xf32>
    %c15_i32_258 = arith.constant 15 : i32
    %1130 = tpu.dynamic_rotate %1129 by %c15_i32_258 dim 0 : vector<16x128xf32>, i32 -> vector<16x128xf32>
    %c15_259 = arith.constant 15 : index
    %1131 = memref.load %arg8[%c15_259] : memref<144xf32, #tpu.memory_space<smem>>
    %1132 = vector.broadcast %1131 : f32 to vector<16x128xf32>
    %1133 = arith.mulf %1132, %1130 : vector<16x128xf32>
    %1134 = arith.addf %1115, %1133 : vector<16x128xf32>
    %c51_260 = arith.constant 51 : index
    %1135 = memref.load %arg8[%c51_260] : memref<144xf32, #tpu.memory_space<smem>>
    %1136 = vector.broadcast %1135 : f32 to vector<16x128xf32>
    %1137 = arith.mulf %1136, %1130 : vector<16x128xf32>
    %1138 = arith.addf %1119, %1137 : vector<16x128xf32>
    %c87_261 = arith.constant 87 : index
    %1139 = memref.load %arg8[%c87_261] : memref<144xf32, #tpu.memory_space<smem>>
    %1140 = vector.broadcast %1139 : f32 to vector<16x128xf32>
    %1141 = arith.mulf %1140, %1130 : vector<16x128xf32>
    %1142 = arith.addf %1123, %1141 : vector<16x128xf32>
    %c123_262 = arith.constant 123 : index
    %1143 = memref.load %arg8[%c123_262] : memref<144xf32, #tpu.memory_space<smem>>
    %1144 = vector.broadcast %1143 : f32 to vector<16x128xf32>
    %1145 = arith.mulf %1144, %1130 : vector<16x128xf32>
    %1146 = arith.addf %1127, %1145 : vector<16x128xf32>
    %cst_263 = arith.constant 0.000000e+00 : f32
    %1147 = vector.broadcast %cst_263 : f32 to vector<16x128xf32>
    %1148 = arith.select %67, %881, %1147 : vector<16x128xi1>, vector<16x128xf32>
    %c1_i32_264 = arith.constant 1 : i32
    %1149 = tpu.dynamic_rotate %1148 by %c1_i32_264 dim 0 : vector<16x128xf32>, i32 -> vector<16x128xf32>
    %c10_265 = arith.constant 10 : index
    %1150 = memref.load %arg8[%c10_265] : memref<144xf32, #tpu.memory_space<smem>>
    %1151 = vector.broadcast %1150 : f32 to vector<16x128xf32>
    %1152 = arith.mulf %1151, %1149 : vector<16x128xf32>
    %1153 = arith.addf %1134, %1152 : vector<16x128xf32>
    %c46_266 = arith.constant 46 : index
    %1154 = memref.load %arg8[%c46_266] : memref<144xf32, #tpu.memory_space<smem>>
    %1155 = vector.broadcast %1154 : f32 to vector<16x128xf32>
    %1156 = arith.mulf %1155, %1149 : vector<16x128xf32>
    %1157 = arith.addf %1138, %1156 : vector<16x128xf32>
    %c82_267 = arith.constant 82 : index
    %1158 = memref.load %arg8[%c82_267] : memref<144xf32, #tpu.memory_space<smem>>
    %1159 = vector.broadcast %1158 : f32 to vector<16x128xf32>
    %1160 = arith.mulf %1159, %1149 : vector<16x128xf32>
    %1161 = arith.addf %1142, %1160 : vector<16x128xf32>
    %c118_268 = arith.constant 118 : index
    %1162 = memref.load %arg8[%c118_268] : memref<144xf32, #tpu.memory_space<smem>>
    %1163 = vector.broadcast %1162 : f32 to vector<16x128xf32>
    %1164 = arith.mulf %1163, %1149 : vector<16x128xf32>
    %1165 = arith.addf %1146, %1164 : vector<16x128xf32>
    %c13_269 = arith.constant 13 : index
    %1166 = memref.load %arg8[%c13_269] : memref<144xf32, #tpu.memory_space<smem>>
    %1167 = vector.broadcast %1166 : f32 to vector<16x128xf32>
    %1168 = arith.mulf %1167, %881 : vector<16x128xf32>
    %1169 = arith.addf %1153, %1168 : vector<16x128xf32>
    %c49_270 = arith.constant 49 : index
    %1170 = memref.load %arg8[%c49_270] : memref<144xf32, #tpu.memory_space<smem>>
    %1171 = vector.broadcast %1170 : f32 to vector<16x128xf32>
    %1172 = arith.mulf %1171, %881 : vector<16x128xf32>
    %1173 = arith.addf %1157, %1172 : vector<16x128xf32>
    %c85_271 = arith.constant 85 : index
    %1174 = memref.load %arg8[%c85_271] : memref<144xf32, #tpu.memory_space<smem>>
    %1175 = vector.broadcast %1174 : f32 to vector<16x128xf32>
    %1176 = arith.mulf %1175, %881 : vector<16x128xf32>
    %1177 = arith.addf %1161, %1176 : vector<16x128xf32>
    %c121_272 = arith.constant 121 : index
    %1178 = memref.load %arg8[%c121_272] : memref<144xf32, #tpu.memory_space<smem>>
    %1179 = vector.broadcast %1178 : f32 to vector<16x128xf32>
    %1180 = arith.mulf %1179, %881 : vector<16x128xf32>
    %1181 = arith.addf %1165, %1180 : vector<16x128xf32>
    %cst_273 = arith.constant 0.000000e+00 : f32
    %1182 = vector.broadcast %cst_273 : f32 to vector<16x128xf32>
    %1183 = arith.select %69, %881, %1182 : vector<16x128xi1>, vector<16x128xf32>
    %c15_i32_274 = arith.constant 15 : i32
    %1184 = tpu.dynamic_rotate %1183 by %c15_i32_274 dim 0 : vector<16x128xf32>, i32 -> vector<16x128xf32>
    %c16_275 = arith.constant 16 : index
    %1185 = memref.load %arg8[%c16_275] : memref<144xf32, #tpu.memory_space<smem>>
    %1186 = vector.broadcast %1185 : f32 to vector<16x128xf32>
    %1187 = arith.mulf %1186, %1184 : vector<16x128xf32>
    %1188 = arith.addf %1169, %1187 : vector<16x128xf32>
    %c52_276 = arith.constant 52 : index
    %1189 = memref.load %arg8[%c52_276] : memref<144xf32, #tpu.memory_space<smem>>
    %1190 = vector.broadcast %1189 : f32 to vector<16x128xf32>
    %1191 = arith.mulf %1190, %1184 : vector<16x128xf32>
    %1192 = arith.addf %1173, %1191 : vector<16x128xf32>
    %c88_277 = arith.constant 88 : index
    %1193 = memref.load %arg8[%c88_277] : memref<144xf32, #tpu.memory_space<smem>>
    %1194 = vector.broadcast %1193 : f32 to vector<16x128xf32>
    %1195 = arith.mulf %1194, %1184 : vector<16x128xf32>
    %1196 = arith.addf %1177, %1195 : vector<16x128xf32>
    %c124_278 = arith.constant 124 : index
    %1197 = memref.load %arg8[%c124_278] : memref<144xf32, #tpu.memory_space<smem>>
    %1198 = vector.broadcast %1197 : f32 to vector<16x128xf32>
    %1199 = arith.mulf %1198, %1184 : vector<16x128xf32>
    %1200 = arith.addf %1181, %1199 : vector<16x128xf32>
    %c127_i32_279 = arith.constant 127 : i32
    %1201 = tpu.dynamic_rotate %881 by %c127_i32_279 dim 1 : vector<16x128xf32>, i32 -> vector<16x128xf32>
    %cst_280 = arith.constant 0.000000e+00 : f32
    %1202 = vector.broadcast %cst_280 : f32 to vector<16x128xf32>
    %1203 = arith.select %65, %1201, %1202 : vector<16x128xi1>, vector<16x128xf32>
    %cst_281 = arith.constant 0.000000e+00 : f32
    %1204 = vector.broadcast %cst_281 : f32 to vector<16x128xf32>
    %1205 = arith.select %67, %1203, %1204 : vector<16x128xi1>, vector<16x128xf32>
    %c1_i32_282 = arith.constant 1 : i32
    %1206 = tpu.dynamic_rotate %1205 by %c1_i32_282 dim 0 : vector<16x128xf32>, i32 -> vector<16x128xf32>
    %c11_283 = arith.constant 11 : index
    %1207 = memref.load %arg8[%c11_283] : memref<144xf32, #tpu.memory_space<smem>>
    %1208 = vector.broadcast %1207 : f32 to vector<16x128xf32>
    %1209 = arith.mulf %1208, %1206 : vector<16x128xf32>
    %1210 = arith.addf %1188, %1209 : vector<16x128xf32>
    %c47_284 = arith.constant 47 : index
    %1211 = memref.load %arg8[%c47_284] : memref<144xf32, #tpu.memory_space<smem>>
    %1212 = vector.broadcast %1211 : f32 to vector<16x128xf32>
    %1213 = arith.mulf %1212, %1206 : vector<16x128xf32>
    %1214 = arith.addf %1192, %1213 : vector<16x128xf32>
    %c83_285 = arith.constant 83 : index
    %1215 = memref.load %arg8[%c83_285] : memref<144xf32, #tpu.memory_space<smem>>
    %1216 = vector.broadcast %1215 : f32 to vector<16x128xf32>
    %1217 = arith.mulf %1216, %1206 : vector<16x128xf32>
    %1218 = arith.addf %1196, %1217 : vector<16x128xf32>
    %c119_286 = arith.constant 119 : index
    %1219 = memref.load %arg8[%c119_286] : memref<144xf32, #tpu.memory_space<smem>>
    %1220 = vector.broadcast %1219 : f32 to vector<16x128xf32>
    %1221 = arith.mulf %1220, %1206 : vector<16x128xf32>
    %1222 = arith.addf %1200, %1221 : vector<16x128xf32>
    %c14_287 = arith.constant 14 : index
    %1223 = memref.load %arg8[%c14_287] : memref<144xf32, #tpu.memory_space<smem>>
    %1224 = vector.broadcast %1223 : f32 to vector<16x128xf32>
    %1225 = arith.mulf %1224, %1203 : vector<16x128xf32>
    %1226 = arith.addf %1210, %1225 : vector<16x128xf32>
    %c50_288 = arith.constant 50 : index
    %1227 = memref.load %arg8[%c50_288] : memref<144xf32, #tpu.memory_space<smem>>
    %1228 = vector.broadcast %1227 : f32 to vector<16x128xf32>
    %1229 = arith.mulf %1228, %1203 : vector<16x128xf32>
    %1230 = arith.addf %1214, %1229 : vector<16x128xf32>
    %c86_289 = arith.constant 86 : index
    %1231 = memref.load %arg8[%c86_289] : memref<144xf32, #tpu.memory_space<smem>>
    %1232 = vector.broadcast %1231 : f32 to vector<16x128xf32>
    %1233 = arith.mulf %1232, %1203 : vector<16x128xf32>
    %1234 = arith.addf %1218, %1233 : vector<16x128xf32>
    %c122_290 = arith.constant 122 : index
    %1235 = memref.load %arg8[%c122_290] : memref<144xf32, #tpu.memory_space<smem>>
    %1236 = vector.broadcast %1235 : f32 to vector<16x128xf32>
    %1237 = arith.mulf %1236, %1203 : vector<16x128xf32>
    %1238 = arith.addf %1222, %1237 : vector<16x128xf32>
    %cst_291 = arith.constant 0.000000e+00 : f32
    %1239 = vector.broadcast %cst_291 : f32 to vector<16x128xf32>
    %1240 = arith.select %69, %1203, %1239 : vector<16x128xi1>, vector<16x128xf32>
    %c15_i32_292 = arith.constant 15 : i32
    %1241 = tpu.dynamic_rotate %1240 by %c15_i32_292 dim 0 : vector<16x128xf32>, i32 -> vector<16x128xf32>
    %c17_293 = arith.constant 17 : index
    %1242 = memref.load %arg8[%c17_293] : memref<144xf32, #tpu.memory_space<smem>>
    %1243 = vector.broadcast %1242 : f32 to vector<16x128xf32>
    %1244 = arith.mulf %1243, %1241 : vector<16x128xf32>
    %1245 = arith.addf %1226, %1244 : vector<16x128xf32>
    %c53_294 = arith.constant 53 : index
    %1246 = memref.load %arg8[%c53_294] : memref<144xf32, #tpu.memory_space<smem>>
    %1247 = vector.broadcast %1246 : f32 to vector<16x128xf32>
    %1248 = arith.mulf %1247, %1241 : vector<16x128xf32>
    %1249 = arith.addf %1230, %1248 : vector<16x128xf32>
    %c89_295 = arith.constant 89 : index
    %1250 = memref.load %arg8[%c89_295] : memref<144xf32, #tpu.memory_space<smem>>
    %1251 = vector.broadcast %1250 : f32 to vector<16x128xf32>
    %1252 = arith.mulf %1251, %1241 : vector<16x128xf32>
    %1253 = arith.addf %1234, %1252 : vector<16x128xf32>
    %c125_296 = arith.constant 125 : index
    %1254 = memref.load %arg8[%c125_296] : memref<144xf32, #tpu.memory_space<smem>>
    %1255 = vector.broadcast %1254 : f32 to vector<16x128xf32>
    %1256 = arith.mulf %1255, %1241 : vector<16x128xf32>
    %1257 = arith.addf %1238, %1256 : vector<16x128xf32>
    %c1_i32_297 = arith.constant 1 : i32
    %1258 = tpu.dynamic_rotate %903 by %c1_i32_297 dim 1 : vector<16x128xf32>, i32 -> vector<16x128xf32>
    %cst_298 = arith.constant 0.000000e+00 : f32
    %1259 = vector.broadcast %cst_298 : f32 to vector<16x128xf32>
    %1260 = arith.select %54, %1258, %1259 : vector<16x128xi1>, vector<16x128xf32>
    %cst_299 = arith.constant 0.000000e+00 : f32
    %1261 = vector.broadcast %cst_299 : f32 to vector<16x128xf32>
    %1262 = arith.select %67, %1260, %1261 : vector<16x128xi1>, vector<16x128xf32>
    %c1_i32_300 = arith.constant 1 : i32
    %1263 = tpu.dynamic_rotate %1262 by %c1_i32_300 dim 0 : vector<16x128xf32>, i32 -> vector<16x128xf32>
    %c18_301 = arith.constant 18 : index
    %1264 = memref.load %arg8[%c18_301] : memref<144xf32, #tpu.memory_space<smem>>
    %1265 = vector.broadcast %1264 : f32 to vector<16x128xf32>
    %1266 = arith.mulf %1265, %1263 : vector<16x128xf32>
    %1267 = arith.addf %1245, %1266 : vector<16x128xf32>
    %c54_302 = arith.constant 54 : index
    %1268 = memref.load %arg8[%c54_302] : memref<144xf32, #tpu.memory_space<smem>>
    %1269 = vector.broadcast %1268 : f32 to vector<16x128xf32>
    %1270 = arith.mulf %1269, %1263 : vector<16x128xf32>
    %1271 = arith.addf %1249, %1270 : vector<16x128xf32>
    %c90_303 = arith.constant 90 : index
    %1272 = memref.load %arg8[%c90_303] : memref<144xf32, #tpu.memory_space<smem>>
    %1273 = vector.broadcast %1272 : f32 to vector<16x128xf32>
    %1274 = arith.mulf %1273, %1263 : vector<16x128xf32>
    %1275 = arith.addf %1253, %1274 : vector<16x128xf32>
    %c126_304 = arith.constant 126 : index
    %1276 = memref.load %arg8[%c126_304] : memref<144xf32, #tpu.memory_space<smem>>
    %1277 = vector.broadcast %1276 : f32 to vector<16x128xf32>
    %1278 = arith.mulf %1277, %1263 : vector<16x128xf32>
    %1279 = arith.addf %1257, %1278 : vector<16x128xf32>
    %c21_305 = arith.constant 21 : index
    %1280 = memref.load %arg8[%c21_305] : memref<144xf32, #tpu.memory_space<smem>>
    %1281 = vector.broadcast %1280 : f32 to vector<16x128xf32>
    %1282 = arith.mulf %1281, %1260 : vector<16x128xf32>
    %1283 = arith.addf %1267, %1282 : vector<16x128xf32>
    %c57_306 = arith.constant 57 : index
    %1284 = memref.load %arg8[%c57_306] : memref<144xf32, #tpu.memory_space<smem>>
    %1285 = vector.broadcast %1284 : f32 to vector<16x128xf32>
    %1286 = arith.mulf %1285, %1260 : vector<16x128xf32>
    %1287 = arith.addf %1271, %1286 : vector<16x128xf32>
    %c93_307 = arith.constant 93 : index
    %1288 = memref.load %arg8[%c93_307] : memref<144xf32, #tpu.memory_space<smem>>
    %1289 = vector.broadcast %1288 : f32 to vector<16x128xf32>
    %1290 = arith.mulf %1289, %1260 : vector<16x128xf32>
    %1291 = arith.addf %1275, %1290 : vector<16x128xf32>
    %c129_308 = arith.constant 129 : index
    %1292 = memref.load %arg8[%c129_308] : memref<144xf32, #tpu.memory_space<smem>>
    %1293 = vector.broadcast %1292 : f32 to vector<16x128xf32>
    %1294 = arith.mulf %1293, %1260 : vector<16x128xf32>
    %1295 = arith.addf %1279, %1294 : vector<16x128xf32>
    %cst_309 = arith.constant 0.000000e+00 : f32
    %1296 = vector.broadcast %cst_309 : f32 to vector<16x128xf32>
    %1297 = arith.select %69, %1260, %1296 : vector<16x128xi1>, vector<16x128xf32>
    %c15_i32_310 = arith.constant 15 : i32
    %1298 = tpu.dynamic_rotate %1297 by %c15_i32_310 dim 0 : vector<16x128xf32>, i32 -> vector<16x128xf32>
    %c24_311 = arith.constant 24 : index
    %1299 = memref.load %arg8[%c24_311] : memref<144xf32, #tpu.memory_space<smem>>
    %1300 = vector.broadcast %1299 : f32 to vector<16x128xf32>
    %1301 = arith.mulf %1300, %1298 : vector<16x128xf32>
    %1302 = arith.addf %1283, %1301 : vector<16x128xf32>
    %c60_312 = arith.constant 60 : index
    %1303 = memref.load %arg8[%c60_312] : memref<144xf32, #tpu.memory_space<smem>>
    %1304 = vector.broadcast %1303 : f32 to vector<16x128xf32>
    %1305 = arith.mulf %1304, %1298 : vector<16x128xf32>
    %1306 = arith.addf %1287, %1305 : vector<16x128xf32>
    %c96_313 = arith.constant 96 : index
    %1307 = memref.load %arg8[%c96_313] : memref<144xf32, #tpu.memory_space<smem>>
    %1308 = vector.broadcast %1307 : f32 to vector<16x128xf32>
    %1309 = arith.mulf %1308, %1298 : vector<16x128xf32>
    %1310 = arith.addf %1291, %1309 : vector<16x128xf32>
    %c132_314 = arith.constant 132 : index
    %1311 = memref.load %arg8[%c132_314] : memref<144xf32, #tpu.memory_space<smem>>
    %1312 = vector.broadcast %1311 : f32 to vector<16x128xf32>
    %1313 = arith.mulf %1312, %1298 : vector<16x128xf32>
    %1314 = arith.addf %1295, %1313 : vector<16x128xf32>
    %cst_315 = arith.constant 0.000000e+00 : f32
    %1315 = vector.broadcast %cst_315 : f32 to vector<16x128xf32>
    %1316 = arith.select %67, %903, %1315 : vector<16x128xi1>, vector<16x128xf32>
    %c1_i32_316 = arith.constant 1 : i32
    %1317 = tpu.dynamic_rotate %1316 by %c1_i32_316 dim 0 : vector<16x128xf32>, i32 -> vector<16x128xf32>
    %c19_317 = arith.constant 19 : index
    %1318 = memref.load %arg8[%c19_317] : memref<144xf32, #tpu.memory_space<smem>>
    %1319 = vector.broadcast %1318 : f32 to vector<16x128xf32>
    %1320 = arith.mulf %1319, %1317 : vector<16x128xf32>
    %1321 = arith.addf %1302, %1320 : vector<16x128xf32>
    %c55_318 = arith.constant 55 : index
    %1322 = memref.load %arg8[%c55_318] : memref<144xf32, #tpu.memory_space<smem>>
    %1323 = vector.broadcast %1322 : f32 to vector<16x128xf32>
    %1324 = arith.mulf %1323, %1317 : vector<16x128xf32>
    %1325 = arith.addf %1306, %1324 : vector<16x128xf32>
    %c91_319 = arith.constant 91 : index
    %1326 = memref.load %arg8[%c91_319] : memref<144xf32, #tpu.memory_space<smem>>
    %1327 = vector.broadcast %1326 : f32 to vector<16x128xf32>
    %1328 = arith.mulf %1327, %1317 : vector<16x128xf32>
    %1329 = arith.addf %1310, %1328 : vector<16x128xf32>
    %c127_320 = arith.constant 127 : index
    %1330 = memref.load %arg8[%c127_320] : memref<144xf32, #tpu.memory_space<smem>>
    %1331 = vector.broadcast %1330 : f32 to vector<16x128xf32>
    %1332 = arith.mulf %1331, %1317 : vector<16x128xf32>
    %1333 = arith.addf %1314, %1332 : vector<16x128xf32>
    %c22_321 = arith.constant 22 : index
    %1334 = memref.load %arg8[%c22_321] : memref<144xf32, #tpu.memory_space<smem>>
    %1335 = vector.broadcast %1334 : f32 to vector<16x128xf32>
    %1336 = arith.mulf %1335, %903 : vector<16x128xf32>
    %1337 = arith.addf %1321, %1336 : vector<16x128xf32>
    %c58_322 = arith.constant 58 : index
    %1338 = memref.load %arg8[%c58_322] : memref<144xf32, #tpu.memory_space<smem>>
    %1339 = vector.broadcast %1338 : f32 to vector<16x128xf32>
    %1340 = arith.mulf %1339, %903 : vector<16x128xf32>
    %1341 = arith.addf %1325, %1340 : vector<16x128xf32>
    %c94_323 = arith.constant 94 : index
    %1342 = memref.load %arg8[%c94_323] : memref<144xf32, #tpu.memory_space<smem>>
    %1343 = vector.broadcast %1342 : f32 to vector<16x128xf32>
    %1344 = arith.mulf %1343, %903 : vector<16x128xf32>
    %1345 = arith.addf %1329, %1344 : vector<16x128xf32>
    %c130_324 = arith.constant 130 : index
    %1346 = memref.load %arg8[%c130_324] : memref<144xf32, #tpu.memory_space<smem>>
    %1347 = vector.broadcast %1346 : f32 to vector<16x128xf32>
    %1348 = arith.mulf %1347, %903 : vector<16x128xf32>
    %1349 = arith.addf %1333, %1348 : vector<16x128xf32>
    %cst_325 = arith.constant 0.000000e+00 : f32
    %1350 = vector.broadcast %cst_325 : f32 to vector<16x128xf32>
    %1351 = arith.select %69, %903, %1350 : vector<16x128xi1>, vector<16x128xf32>
    %c15_i32_326 = arith.constant 15 : i32
    %1352 = tpu.dynamic_rotate %1351 by %c15_i32_326 dim 0 : vector<16x128xf32>, i32 -> vector<16x128xf32>
    %c25_327 = arith.constant 25 : index
    %1353 = memref.load %arg8[%c25_327] : memref<144xf32, #tpu.memory_space<smem>>
    %1354 = vector.broadcast %1353 : f32 to vector<16x128xf32>
    %1355 = arith.mulf %1354, %1352 : vector<16x128xf32>
    %1356 = arith.addf %1337, %1355 : vector<16x128xf32>
    %c61_328 = arith.constant 61 : index
    %1357 = memref.load %arg8[%c61_328] : memref<144xf32, #tpu.memory_space<smem>>
    %1358 = vector.broadcast %1357 : f32 to vector<16x128xf32>
    %1359 = arith.mulf %1358, %1352 : vector<16x128xf32>
    %1360 = arith.addf %1341, %1359 : vector<16x128xf32>
    %c97_329 = arith.constant 97 : index
    %1361 = memref.load %arg8[%c97_329] : memref<144xf32, #tpu.memory_space<smem>>
    %1362 = vector.broadcast %1361 : f32 to vector<16x128xf32>
    %1363 = arith.mulf %1362, %1352 : vector<16x128xf32>
    %1364 = arith.addf %1345, %1363 : vector<16x128xf32>
    %c133_330 = arith.constant 133 : index
    %1365 = memref.load %arg8[%c133_330] : memref<144xf32, #tpu.memory_space<smem>>
    %1366 = vector.broadcast %1365 : f32 to vector<16x128xf32>
    %1367 = arith.mulf %1366, %1352 : vector<16x128xf32>
    %1368 = arith.addf %1349, %1367 : vector<16x128xf32>
    %c127_i32_331 = arith.constant 127 : i32
    %1369 = tpu.dynamic_rotate %903 by %c127_i32_331 dim 1 : vector<16x128xf32>, i32 -> vector<16x128xf32>
    %cst_332 = arith.constant 0.000000e+00 : f32
    %1370 = vector.broadcast %cst_332 : f32 to vector<16x128xf32>
    %1371 = arith.select %65, %1369, %1370 : vector<16x128xi1>, vector<16x128xf32>
    %cst_333 = arith.constant 0.000000e+00 : f32
    %1372 = vector.broadcast %cst_333 : f32 to vector<16x128xf32>
    %1373 = arith.select %67, %1371, %1372 : vector<16x128xi1>, vector<16x128xf32>
    %c1_i32_334 = arith.constant 1 : i32
    %1374 = tpu.dynamic_rotate %1373 by %c1_i32_334 dim 0 : vector<16x128xf32>, i32 -> vector<16x128xf32>
    %c20_335 = arith.constant 20 : index
    %1375 = memref.load %arg8[%c20_335] : memref<144xf32, #tpu.memory_space<smem>>
    %1376 = vector.broadcast %1375 : f32 to vector<16x128xf32>
    %1377 = arith.mulf %1376, %1374 : vector<16x128xf32>
    %1378 = arith.addf %1356, %1377 : vector<16x128xf32>
    %c56_336 = arith.constant 56 : index
    %1379 = memref.load %arg8[%c56_336] : memref<144xf32, #tpu.memory_space<smem>>
    %1380 = vector.broadcast %1379 : f32 to vector<16x128xf32>
    %1381 = arith.mulf %1380, %1374 : vector<16x128xf32>
    %1382 = arith.addf %1360, %1381 : vector<16x128xf32>
    %c92_337 = arith.constant 92 : index
    %1383 = memref.load %arg8[%c92_337] : memref<144xf32, #tpu.memory_space<smem>>
    %1384 = vector.broadcast %1383 : f32 to vector<16x128xf32>
    %1385 = arith.mulf %1384, %1374 : vector<16x128xf32>
    %1386 = arith.addf %1364, %1385 : vector<16x128xf32>
    %c128_338 = arith.constant 128 : index
    %1387 = memref.load %arg8[%c128_338] : memref<144xf32, #tpu.memory_space<smem>>
    %1388 = vector.broadcast %1387 : f32 to vector<16x128xf32>
    %1389 = arith.mulf %1388, %1374 : vector<16x128xf32>
    %1390 = arith.addf %1368, %1389 : vector<16x128xf32>
    %c23_339 = arith.constant 23 : index
    %1391 = memref.load %arg8[%c23_339] : memref<144xf32, #tpu.memory_space<smem>>
    %1392 = vector.broadcast %1391 : f32 to vector<16x128xf32>
    %1393 = arith.mulf %1392, %1371 : vector<16x128xf32>
    %1394 = arith.addf %1378, %1393 : vector<16x128xf32>
    %c59_340 = arith.constant 59 : index
    %1395 = memref.load %arg8[%c59_340] : memref<144xf32, #tpu.memory_space<smem>>
    %1396 = vector.broadcast %1395 : f32 to vector<16x128xf32>
    %1397 = arith.mulf %1396, %1371 : vector<16x128xf32>
    %1398 = arith.addf %1382, %1397 : vector<16x128xf32>
    %c95_341 = arith.constant 95 : index
    %1399 = memref.load %arg8[%c95_341] : memref<144xf32, #tpu.memory_space<smem>>
    %1400 = vector.broadcast %1399 : f32 to vector<16x128xf32>
    %1401 = arith.mulf %1400, %1371 : vector<16x128xf32>
    %1402 = arith.addf %1386, %1401 : vector<16x128xf32>
    %c131_342 = arith.constant 131 : index
    %1403 = memref.load %arg8[%c131_342] : memref<144xf32, #tpu.memory_space<smem>>
    %1404 = vector.broadcast %1403 : f32 to vector<16x128xf32>
    %1405 = arith.mulf %1404, %1371 : vector<16x128xf32>
    %1406 = arith.addf %1390, %1405 : vector<16x128xf32>
    %cst_343 = arith.constant 0.000000e+00 : f32
    %1407 = vector.broadcast %cst_343 : f32 to vector<16x128xf32>
    %1408 = arith.select %69, %1371, %1407 : vector<16x128xi1>, vector<16x128xf32>
    %c15_i32_344 = arith.constant 15 : i32
    %1409 = tpu.dynamic_rotate %1408 by %c15_i32_344 dim 0 : vector<16x128xf32>, i32 -> vector<16x128xf32>
    %c26_345 = arith.constant 26 : index
    %1410 = memref.load %arg8[%c26_345] : memref<144xf32, #tpu.memory_space<smem>>
    %1411 = vector.broadcast %1410 : f32 to vector<16x128xf32>
    %1412 = arith.mulf %1411, %1409 : vector<16x128xf32>
    %1413 = arith.addf %1394, %1412 : vector<16x128xf32>
    %c62_346 = arith.constant 62 : index
    %1414 = memref.load %arg8[%c62_346] : memref<144xf32, #tpu.memory_space<smem>>
    %1415 = vector.broadcast %1414 : f32 to vector<16x128xf32>
    %1416 = arith.mulf %1415, %1409 : vector<16x128xf32>
    %1417 = arith.addf %1398, %1416 : vector<16x128xf32>
    %c98_347 = arith.constant 98 : index
    %1418 = memref.load %arg8[%c98_347] : memref<144xf32, #tpu.memory_space<smem>>
    %1419 = vector.broadcast %1418 : f32 to vector<16x128xf32>
    %1420 = arith.mulf %1419, %1409 : vector<16x128xf32>
    %1421 = arith.addf %1402, %1420 : vector<16x128xf32>
    %c134_348 = arith.constant 134 : index
    %1422 = memref.load %arg8[%c134_348] : memref<144xf32, #tpu.memory_space<smem>>
    %1423 = vector.broadcast %1422 : f32 to vector<16x128xf32>
    %1424 = arith.mulf %1423, %1409 : vector<16x128xf32>
    %1425 = arith.addf %1406, %1424 : vector<16x128xf32>
    %c1_i32_349 = arith.constant 1 : i32
    %1426 = tpu.dynamic_rotate %925 by %c1_i32_349 dim 1 : vector<16x128xf32>, i32 -> vector<16x128xf32>
    %cst_350 = arith.constant 0.000000e+00 : f32
    %1427 = vector.broadcast %cst_350 : f32 to vector<16x128xf32>
    %1428 = arith.select %54, %1426, %1427 : vector<16x128xi1>, vector<16x128xf32>
    %cst_351 = arith.constant 0.000000e+00 : f32
    %1429 = vector.broadcast %cst_351 : f32 to vector<16x128xf32>
    %1430 = arith.select %67, %1428, %1429 : vector<16x128xi1>, vector<16x128xf32>
    %c1_i32_352 = arith.constant 1 : i32
    %1431 = tpu.dynamic_rotate %1430 by %c1_i32_352 dim 0 : vector<16x128xf32>, i32 -> vector<16x128xf32>
    %c27_353 = arith.constant 27 : index
    %1432 = memref.load %arg8[%c27_353] : memref<144xf32, #tpu.memory_space<smem>>
    %1433 = vector.broadcast %1432 : f32 to vector<16x128xf32>
    %1434 = arith.mulf %1433, %1431 : vector<16x128xf32>
    %1435 = arith.addf %1413, %1434 : vector<16x128xf32>
    %c63_354 = arith.constant 63 : index
    %1436 = memref.load %arg8[%c63_354] : memref<144xf32, #tpu.memory_space<smem>>
    %1437 = vector.broadcast %1436 : f32 to vector<16x128xf32>
    %1438 = arith.mulf %1437, %1431 : vector<16x128xf32>
    %1439 = arith.addf %1417, %1438 : vector<16x128xf32>
    %c99_355 = arith.constant 99 : index
    %1440 = memref.load %arg8[%c99_355] : memref<144xf32, #tpu.memory_space<smem>>
    %1441 = vector.broadcast %1440 : f32 to vector<16x128xf32>
    %1442 = arith.mulf %1441, %1431 : vector<16x128xf32>
    %1443 = arith.addf %1421, %1442 : vector<16x128xf32>
    %c135_356 = arith.constant 135 : index
    %1444 = memref.load %arg8[%c135_356] : memref<144xf32, #tpu.memory_space<smem>>
    %1445 = vector.broadcast %1444 : f32 to vector<16x128xf32>
    %1446 = arith.mulf %1445, %1431 : vector<16x128xf32>
    %1447 = arith.addf %1425, %1446 : vector<16x128xf32>
    %c30_357 = arith.constant 30 : index
    %1448 = memref.load %arg8[%c30_357] : memref<144xf32, #tpu.memory_space<smem>>
    %1449 = vector.broadcast %1448 : f32 to vector<16x128xf32>
    %1450 = arith.mulf %1449, %1428 : vector<16x128xf32>
    %1451 = arith.addf %1435, %1450 : vector<16x128xf32>
    %c66_358 = arith.constant 66 : index
    %1452 = memref.load %arg8[%c66_358] : memref<144xf32, #tpu.memory_space<smem>>
    %1453 = vector.broadcast %1452 : f32 to vector<16x128xf32>
    %1454 = arith.mulf %1453, %1428 : vector<16x128xf32>
    %1455 = arith.addf %1439, %1454 : vector<16x128xf32>
    %c102_359 = arith.constant 102 : index
    %1456 = memref.load %arg8[%c102_359] : memref<144xf32, #tpu.memory_space<smem>>
    %1457 = vector.broadcast %1456 : f32 to vector<16x128xf32>
    %1458 = arith.mulf %1457, %1428 : vector<16x128xf32>
    %1459 = arith.addf %1443, %1458 : vector<16x128xf32>
    %c138_360 = arith.constant 138 : index
    %1460 = memref.load %arg8[%c138_360] : memref<144xf32, #tpu.memory_space<smem>>
    %1461 = vector.broadcast %1460 : f32 to vector<16x128xf32>
    %1462 = arith.mulf %1461, %1428 : vector<16x128xf32>
    %1463 = arith.addf %1447, %1462 : vector<16x128xf32>
    %cst_361 = arith.constant 0.000000e+00 : f32
    %1464 = vector.broadcast %cst_361 : f32 to vector<16x128xf32>
    %1465 = arith.select %69, %1428, %1464 : vector<16x128xi1>, vector<16x128xf32>
    %c15_i32_362 = arith.constant 15 : i32
    %1466 = tpu.dynamic_rotate %1465 by %c15_i32_362 dim 0 : vector<16x128xf32>, i32 -> vector<16x128xf32>
    %c33_363 = arith.constant 33 : index
    %1467 = memref.load %arg8[%c33_363] : memref<144xf32, #tpu.memory_space<smem>>
    %1468 = vector.broadcast %1467 : f32 to vector<16x128xf32>
    %1469 = arith.mulf %1468, %1466 : vector<16x128xf32>
    %1470 = arith.addf %1451, %1469 : vector<16x128xf32>
    %c69_364 = arith.constant 69 : index
    %1471 = memref.load %arg8[%c69_364] : memref<144xf32, #tpu.memory_space<smem>>
    %1472 = vector.broadcast %1471 : f32 to vector<16x128xf32>
    %1473 = arith.mulf %1472, %1466 : vector<16x128xf32>
    %1474 = arith.addf %1455, %1473 : vector<16x128xf32>
    %c105_365 = arith.constant 105 : index
    %1475 = memref.load %arg8[%c105_365] : memref<144xf32, #tpu.memory_space<smem>>
    %1476 = vector.broadcast %1475 : f32 to vector<16x128xf32>
    %1477 = arith.mulf %1476, %1466 : vector<16x128xf32>
    %1478 = arith.addf %1459, %1477 : vector<16x128xf32>
    %c141_366 = arith.constant 141 : index
    %1479 = memref.load %arg8[%c141_366] : memref<144xf32, #tpu.memory_space<smem>>
    %1480 = vector.broadcast %1479 : f32 to vector<16x128xf32>
    %1481 = arith.mulf %1480, %1466 : vector<16x128xf32>
    %1482 = arith.addf %1463, %1481 : vector<16x128xf32>
    %cst_367 = arith.constant 0.000000e+00 : f32
    %1483 = vector.broadcast %cst_367 : f32 to vector<16x128xf32>
    %1484 = arith.select %67, %925, %1483 : vector<16x128xi1>, vector<16x128xf32>
    %c1_i32_368 = arith.constant 1 : i32
    %1485 = tpu.dynamic_rotate %1484 by %c1_i32_368 dim 0 : vector<16x128xf32>, i32 -> vector<16x128xf32>
    %c28_369 = arith.constant 28 : index
    %1486 = memref.load %arg8[%c28_369] : memref<144xf32, #tpu.memory_space<smem>>
    %1487 = vector.broadcast %1486 : f32 to vector<16x128xf32>
    %1488 = arith.mulf %1487, %1485 : vector<16x128xf32>
    %1489 = arith.addf %1470, %1488 : vector<16x128xf32>
    %c64_370 = arith.constant 64 : index
    %1490 = memref.load %arg8[%c64_370] : memref<144xf32, #tpu.memory_space<smem>>
    %1491 = vector.broadcast %1490 : f32 to vector<16x128xf32>
    %1492 = arith.mulf %1491, %1485 : vector<16x128xf32>
    %1493 = arith.addf %1474, %1492 : vector<16x128xf32>
    %c100_371 = arith.constant 100 : index
    %1494 = memref.load %arg8[%c100_371] : memref<144xf32, #tpu.memory_space<smem>>
    %1495 = vector.broadcast %1494 : f32 to vector<16x128xf32>
    %1496 = arith.mulf %1495, %1485 : vector<16x128xf32>
    %1497 = arith.addf %1478, %1496 : vector<16x128xf32>
    %c136_372 = arith.constant 136 : index
    %1498 = memref.load %arg8[%c136_372] : memref<144xf32, #tpu.memory_space<smem>>
    %1499 = vector.broadcast %1498 : f32 to vector<16x128xf32>
    %1500 = arith.mulf %1499, %1485 : vector<16x128xf32>
    %1501 = arith.addf %1482, %1500 : vector<16x128xf32>
    %c31_373 = arith.constant 31 : index
    %1502 = memref.load %arg8[%c31_373] : memref<144xf32, #tpu.memory_space<smem>>
    %1503 = vector.broadcast %1502 : f32 to vector<16x128xf32>
    %1504 = arith.mulf %1503, %925 : vector<16x128xf32>
    %1505 = arith.addf %1489, %1504 : vector<16x128xf32>
    %c67_374 = arith.constant 67 : index
    %1506 = memref.load %arg8[%c67_374] : memref<144xf32, #tpu.memory_space<smem>>
    %1507 = vector.broadcast %1506 : f32 to vector<16x128xf32>
    %1508 = arith.mulf %1507, %925 : vector<16x128xf32>
    %1509 = arith.addf %1493, %1508 : vector<16x128xf32>
    %c103_375 = arith.constant 103 : index
    %1510 = memref.load %arg8[%c103_375] : memref<144xf32, #tpu.memory_space<smem>>
    %1511 = vector.broadcast %1510 : f32 to vector<16x128xf32>
    %1512 = arith.mulf %1511, %925 : vector<16x128xf32>
    %1513 = arith.addf %1497, %1512 : vector<16x128xf32>
    %c139_376 = arith.constant 139 : index
    %1514 = memref.load %arg8[%c139_376] : memref<144xf32, #tpu.memory_space<smem>>
    %1515 = vector.broadcast %1514 : f32 to vector<16x128xf32>
    %1516 = arith.mulf %1515, %925 : vector<16x128xf32>
    %1517 = arith.addf %1501, %1516 : vector<16x128xf32>
    %cst_377 = arith.constant 0.000000e+00 : f32
    %1518 = vector.broadcast %cst_377 : f32 to vector<16x128xf32>
    %1519 = arith.select %69, %925, %1518 : vector<16x128xi1>, vector<16x128xf32>
    %c15_i32_378 = arith.constant 15 : i32
    %1520 = tpu.dynamic_rotate %1519 by %c15_i32_378 dim 0 : vector<16x128xf32>, i32 -> vector<16x128xf32>
    %c34_379 = arith.constant 34 : index
    %1521 = memref.load %arg8[%c34_379] : memref<144xf32, #tpu.memory_space<smem>>
    %1522 = vector.broadcast %1521 : f32 to vector<16x128xf32>
    %1523 = arith.mulf %1522, %1520 : vector<16x128xf32>
    %1524 = arith.addf %1505, %1523 : vector<16x128xf32>
    %c70_380 = arith.constant 70 : index
    %1525 = memref.load %arg8[%c70_380] : memref<144xf32, #tpu.memory_space<smem>>
    %1526 = vector.broadcast %1525 : f32 to vector<16x128xf32>
    %1527 = arith.mulf %1526, %1520 : vector<16x128xf32>
    %1528 = arith.addf %1509, %1527 : vector<16x128xf32>
    %c106_381 = arith.constant 106 : index
    %1529 = memref.load %arg8[%c106_381] : memref<144xf32, #tpu.memory_space<smem>>
    %1530 = vector.broadcast %1529 : f32 to vector<16x128xf32>
    %1531 = arith.mulf %1530, %1520 : vector<16x128xf32>
    %1532 = arith.addf %1513, %1531 : vector<16x128xf32>
    %c142_382 = arith.constant 142 : index
    %1533 = memref.load %arg8[%c142_382] : memref<144xf32, #tpu.memory_space<smem>>
    %1534 = vector.broadcast %1533 : f32 to vector<16x128xf32>
    %1535 = arith.mulf %1534, %1520 : vector<16x128xf32>
    %1536 = arith.addf %1517, %1535 : vector<16x128xf32>
    %c127_i32_383 = arith.constant 127 : i32
    %1537 = tpu.dynamic_rotate %925 by %c127_i32_383 dim 1 : vector<16x128xf32>, i32 -> vector<16x128xf32>
    %cst_384 = arith.constant 0.000000e+00 : f32
    %1538 = vector.broadcast %cst_384 : f32 to vector<16x128xf32>
    %1539 = arith.select %65, %1537, %1538 : vector<16x128xi1>, vector<16x128xf32>
    %cst_385 = arith.constant 0.000000e+00 : f32
    %1540 = vector.broadcast %cst_385 : f32 to vector<16x128xf32>
    %1541 = arith.select %67, %1539, %1540 : vector<16x128xi1>, vector<16x128xf32>
    %c1_i32_386 = arith.constant 1 : i32
    %1542 = tpu.dynamic_rotate %1541 by %c1_i32_386 dim 0 : vector<16x128xf32>, i32 -> vector<16x128xf32>
    %c29_387 = arith.constant 29 : index
    %1543 = memref.load %arg8[%c29_387] : memref<144xf32, #tpu.memory_space<smem>>
    %1544 = vector.broadcast %1543 : f32 to vector<16x128xf32>
    %1545 = arith.mulf %1544, %1542 : vector<16x128xf32>
    %1546 = arith.addf %1524, %1545 : vector<16x128xf32>
    %c65_388 = arith.constant 65 : index
    %1547 = memref.load %arg8[%c65_388] : memref<144xf32, #tpu.memory_space<smem>>
    %1548 = vector.broadcast %1547 : f32 to vector<16x128xf32>
    %1549 = arith.mulf %1548, %1542 : vector<16x128xf32>
    %1550 = arith.addf %1528, %1549 : vector<16x128xf32>
    %c101_389 = arith.constant 101 : index
    %1551 = memref.load %arg8[%c101_389] : memref<144xf32, #tpu.memory_space<smem>>
    %1552 = vector.broadcast %1551 : f32 to vector<16x128xf32>
    %1553 = arith.mulf %1552, %1542 : vector<16x128xf32>
    %1554 = arith.addf %1532, %1553 : vector<16x128xf32>
    %c137_390 = arith.constant 137 : index
    %1555 = memref.load %arg8[%c137_390] : memref<144xf32, #tpu.memory_space<smem>>
    %1556 = vector.broadcast %1555 : f32 to vector<16x128xf32>
    %1557 = arith.mulf %1556, %1542 : vector<16x128xf32>
    %1558 = arith.addf %1536, %1557 : vector<16x128xf32>
    %c32_391 = arith.constant 32 : index
    %1559 = memref.load %arg8[%c32_391] : memref<144xf32, #tpu.memory_space<smem>>
    %1560 = vector.broadcast %1559 : f32 to vector<16x128xf32>
    %1561 = arith.mulf %1560, %1539 : vector<16x128xf32>
    %1562 = arith.addf %1546, %1561 : vector<16x128xf32>
    %c68_392 = arith.constant 68 : index
    %1563 = memref.load %arg8[%c68_392] : memref<144xf32, #tpu.memory_space<smem>>
    %1564 = vector.broadcast %1563 : f32 to vector<16x128xf32>
    %1565 = arith.mulf %1564, %1539 : vector<16x128xf32>
    %1566 = arith.addf %1550, %1565 : vector<16x128xf32>
    %c104_393 = arith.constant 104 : index
    %1567 = memref.load %arg8[%c104_393] : memref<144xf32, #tpu.memory_space<smem>>
    %1568 = vector.broadcast %1567 : f32 to vector<16x128xf32>
    %1569 = arith.mulf %1568, %1539 : vector<16x128xf32>
    %1570 = arith.addf %1554, %1569 : vector<16x128xf32>
    %c140_394 = arith.constant 140 : index
    %1571 = memref.load %arg8[%c140_394] : memref<144xf32, #tpu.memory_space<smem>>
    %1572 = vector.broadcast %1571 : f32 to vector<16x128xf32>
    %1573 = arith.mulf %1572, %1539 : vector<16x128xf32>
    %1574 = arith.addf %1558, %1573 : vector<16x128xf32>
    %cst_395 = arith.constant 0.000000e+00 : f32
    %1575 = vector.broadcast %cst_395 : f32 to vector<16x128xf32>
    %1576 = arith.select %69, %1539, %1575 : vector<16x128xi1>, vector<16x128xf32>
    %c15_i32_396 = arith.constant 15 : i32
    %1577 = tpu.dynamic_rotate %1576 by %c15_i32_396 dim 0 : vector<16x128xf32>, i32 -> vector<16x128xf32>
    %c35_397 = arith.constant 35 : index
    %1578 = memref.load %arg8[%c35_397] : memref<144xf32, #tpu.memory_space<smem>>
    %1579 = vector.broadcast %1578 : f32 to vector<16x128xf32>
    %1580 = arith.mulf %1579, %1577 : vector<16x128xf32>
    %1581 = arith.addf %1562, %1580 : vector<16x128xf32>
    %c71_398 = arith.constant 71 : index
    %1582 = memref.load %arg8[%c71_398] : memref<144xf32, #tpu.memory_space<smem>>
    %1583 = vector.broadcast %1582 : f32 to vector<16x128xf32>
    %1584 = arith.mulf %1583, %1577 : vector<16x128xf32>
    %1585 = arith.addf %1566, %1584 : vector<16x128xf32>
    %c107_399 = arith.constant 107 : index
    %1586 = memref.load %arg8[%c107_399] : memref<144xf32, #tpu.memory_space<smem>>
    %1587 = vector.broadcast %1586 : f32 to vector<16x128xf32>
    %1588 = arith.mulf %1587, %1577 : vector<16x128xf32>
    %1589 = arith.addf %1570, %1588 : vector<16x128xf32>
    %c143_400 = arith.constant 143 : index
    %1590 = memref.load %arg8[%c143_400] : memref<144xf32, #tpu.memory_space<smem>>
    %1591 = vector.broadcast %1590 : f32 to vector<16x128xf32>
    %1592 = arith.mulf %1591, %1577 : vector<16x128xf32>
    %1593 = arith.addf %1574, %1592 : vector<16x128xf32>
    %c0_401 = arith.constant 0 : index
    %1594 = memref.load %arg9[%c0_401] : memref<4xf32, #tpu.memory_space<smem>>
    %1595 = vector.broadcast %1594 : f32 to vector<16x128xf32>
    %1596 = arith.addf %1581, %1595 : vector<16x128xf32>
    %c1_402 = arith.constant 1 : index
    %1597 = memref.load %arg9[%c1_402] : memref<4xf32, #tpu.memory_space<smem>>
    %1598 = vector.broadcast %1597 : f32 to vector<16x128xf32>
    %1599 = arith.addf %1585, %1598 : vector<16x128xf32>
    %c2_403 = arith.constant 2 : index
    %1600 = memref.load %arg9[%c2_403] : memref<4xf32, #tpu.memory_space<smem>>
    %1601 = vector.broadcast %1600 : f32 to vector<16x128xf32>
    %1602 = arith.addf %1589, %1601 : vector<16x128xf32>
    %c3_404 = arith.constant 3 : index
    %1603 = memref.load %arg9[%c3_404] : memref<4xf32, #tpu.memory_space<smem>>
    %1604 = vector.broadcast %1603 : f32 to vector<16x128xf32>
    %1605 = arith.addf %1593, %1604 : vector<16x128xf32>
    %c0_405 = arith.constant 0 : index
    %c0_406 = arith.constant 0 : index
    %c0_407 = arith.constant 0 : index
    %1606 = vector.load %arg11[%c0_405, %c0_406, %c0_407] : memref<4x16x128xf32, #tpu.memory_space<vmem>>, vector<1x16x128xf32>
    %1607 = vector.shape_cast %1606 : vector<1x16x128xf32> to vector<16x128xf32>
    %1608 = vector.shape_cast %1596 : vector<16x128xf32> to vector<1x16x128xf32>
    tpu.vector_store %arg11[%c0_405, %c0_406, %c0_407], %1608 {strides = array<i32>} : memref<4x16x128xf32, #tpu.memory_space<vmem>>, vector<1x16x128xf32>,
    %c1_408 = arith.constant 1 : index
    %c0_409 = arith.constant 0 : index
    %c0_410 = arith.constant 0 : index
    %1609 = vector.load %arg11[%c1_408, %c0_409, %c0_410] : memref<4x16x128xf32, #tpu.memory_space<vmem>>, vector<1x16x128xf32>
    %1610 = vector.shape_cast %1609 : vector<1x16x128xf32> to vector<16x128xf32>
    %1611 = vector.shape_cast %1599 : vector<16x128xf32> to vector<1x16x128xf32>
    tpu.vector_store %arg11[%c1_408, %c0_409, %c0_410], %1611 {strides = array<i32>} : memref<4x16x128xf32, #tpu.memory_space<vmem>>, vector<1x16x128xf32>,
    %c2_411 = arith.constant 2 : index
    %c0_412 = arith.constant 0 : index
    %c0_413 = arith.constant 0 : index
    %1612 = vector.load %arg11[%c2_411, %c0_412, %c0_413] : memref<4x16x128xf32, #tpu.memory_space<vmem>>, vector<1x16x128xf32>
    %1613 = vector.shape_cast %1612 : vector<1x16x128xf32> to vector<16x128xf32>
    %1614 = vector.shape_cast %1602 : vector<16x128xf32> to vector<1x16x128xf32>
    tpu.vector_store %arg11[%c2_411, %c0_412, %c0_413], %1614 {strides = array<i32>} : memref<4x16x128xf32, #tpu.memory_space<vmem>>, vector<1x16x128xf32>,
    %c3_414 = arith.constant 3 : index
    %c0_415 = arith.constant 0 : index
    %c0_416 = arith.constant 0 : index
    %1615 = vector.load %arg11[%c3_414, %c0_415, %c0_416] : memref<4x16x128xf32, #tpu.memory_space<vmem>>, vector<1x16x128xf32>
    %1616 = vector.shape_cast %1615 : vector<1x16x128xf32> to vector<16x128xf32>
    %1617 = vector.shape_cast %1605 : vector<16x128xf32> to vector<1x16x128xf32>
    tpu.vector_store %arg11[%c3_414, %c0_415, %c0_416], %1617 {strides = array<i32>} : memref<4x16x128xf32, #tpu.memory_space<vmem>>, vector<1x16x128xf32>,
    %c0_417 = arith.constant 0 : index
    %c0_418 = arith.constant 0 : index
    %c0_419 = arith.constant 0 : index
    %1618 = vector.load %arg11[%c0_417, %c0_418, %c0_419] : memref<4x16x128xf32, #tpu.memory_space<vmem>>, vector<1x16x16xf32>
    %1619 = vector.shape_cast %1618 : vector<1x16x16xf32> to vector<16x16xf32>
    %c0_420 = arith.constant 0 : index
    %c0_421 = arith.constant 0 : index
    %c0_422 = arith.constant 0 : index
    %c0_423 = arith.constant 0 : index
    %1620 = vector.load %arg1[%c0_420, %c0_421, %c0_422, %c0_423] : memref<2x4x16x16xf32, #tpu.memory_space<vmem>>, vector<1x1x16x16xf32>
    %1621 = vector.shape_cast %1620 : vector<1x1x16x16xf32> to vector<16x16xf32>
    %1622 = arith.addf %1619, %1621 : vector<16x16xf32>
    %c0_424 = arith.constant 0 : index
    %c0_425 = arith.constant 0 : index
    %c0_426 = arith.constant 0 : index
    %c0_427 = arith.constant 0 : index
    %1623 = vector.load %arg10[%c0_424, %c0_425, %c0_426, %c0_427] : memref<2x4x16x16xf32, #tpu.memory_space<vmem>>, vector<1x1x16x16xf32>
    %1624 = vector.shape_cast %1623 : vector<1x1x16x16xf32> to vector<16x16xf32>
    %1625 = vector.shape_cast %1622 : vector<16x16xf32> to vector<1x1x16x16xf32>
    tpu.vector_store %arg10[%c0_424, %c0_425, %c0_426, %c0_427], %1625 {strides = array<i32>} : memref<2x4x16x16xf32, #tpu.memory_space<vmem>>, vector<1x1x16x16xf32>,
    %c1_428 = arith.constant 1 : index
    %c0_429 = arith.constant 0 : index
    %c0_430 = arith.constant 0 : index
    %1626 = vector.load %arg11[%c1_428, %c0_429, %c0_430] : memref<4x16x128xf32, #tpu.memory_space<vmem>>, vector<1x16x16xf32>
    %1627 = vector.shape_cast %1626 : vector<1x16x16xf32> to vector<16x16xf32>
    %c0_431 = arith.constant 0 : index
    %c1_432 = arith.constant 1 : index
    %c0_433 = arith.constant 0 : index
    %c0_434 = arith.constant 0 : index
    %1628 = vector.load %arg1[%c0_431, %c1_432, %c0_433, %c0_434] : memref<2x4x16x16xf32, #tpu.memory_space<vmem>>, vector<1x1x16x16xf32>
    %1629 = vector.shape_cast %1628 : vector<1x1x16x16xf32> to vector<16x16xf32>
    %1630 = arith.addf %1627, %1629 : vector<16x16xf32>
    %c0_435 = arith.constant 0 : index
    %c1_436 = arith.constant 1 : index
    %c0_437 = arith.constant 0 : index
    %c0_438 = arith.constant 0 : index
    %1631 = vector.load %arg10[%c0_435, %c1_436, %c0_437, %c0_438] : memref<2x4x16x16xf32, #tpu.memory_space<vmem>>, vector<1x1x16x16xf32>
    %1632 = vector.shape_cast %1631 : vector<1x1x16x16xf32> to vector<16x16xf32>
    %1633 = vector.shape_cast %1630 : vector<16x16xf32> to vector<1x1x16x16xf32>
    tpu.vector_store %arg10[%c0_435, %c1_436, %c0_437, %c0_438], %1633 {strides = array<i32>} : memref<2x4x16x16xf32, #tpu.memory_space<vmem>>, vector<1x1x16x16xf32>,
    %c2_439 = arith.constant 2 : index
    %c0_440 = arith.constant 0 : index
    %c0_441 = arith.constant 0 : index
    %1634 = vector.load %arg11[%c2_439, %c0_440, %c0_441] : memref<4x16x128xf32, #tpu.memory_space<vmem>>, vector<1x16x16xf32>
    %1635 = vector.shape_cast %1634 : vector<1x16x16xf32> to vector<16x16xf32>
    %c0_442 = arith.constant 0 : index
    %c2_443 = arith.constant 2 : index
    %c0_444 = arith.constant 0 : index
    %c0_445 = arith.constant 0 : index
    %1636 = vector.load %arg1[%c0_442, %c2_443, %c0_444, %c0_445] : memref<2x4x16x16xf32, #tpu.memory_space<vmem>>, vector<1x1x16x16xf32>
    %1637 = vector.shape_cast %1636 : vector<1x1x16x16xf32> to vector<16x16xf32>
    %1638 = arith.addf %1635, %1637 : vector<16x16xf32>
    %c0_446 = arith.constant 0 : index
    %c2_447 = arith.constant 2 : index
    %c0_448 = arith.constant 0 : index
    %c0_449 = arith.constant 0 : index
    %1639 = vector.load %arg10[%c0_446, %c2_447, %c0_448, %c0_449] : memref<2x4x16x16xf32, #tpu.memory_space<vmem>>, vector<1x1x16x16xf32>
    %1640 = vector.shape_cast %1639 : vector<1x1x16x16xf32> to vector<16x16xf32>
    %1641 = vector.shape_cast %1638 : vector<16x16xf32> to vector<1x1x16x16xf32>
    tpu.vector_store %arg10[%c0_446, %c2_447, %c0_448, %c0_449], %1641 {strides = array<i32>} : memref<2x4x16x16xf32, #tpu.memory_space<vmem>>, vector<1x1x16x16xf32>,
    %c3_450 = arith.constant 3 : index
    %c0_451 = arith.constant 0 : index
    %c0_452 = arith.constant 0 : index
    %1642 = vector.load %arg11[%c3_450, %c0_451, %c0_452] : memref<4x16x128xf32, #tpu.memory_space<vmem>>, vector<1x16x16xf32>
    %1643 = vector.shape_cast %1642 : vector<1x16x16xf32> to vector<16x16xf32>
    %c0_453 = arith.constant 0 : index
    %c3_454 = arith.constant 3 : index
    %c0_455 = arith.constant 0 : index
    %c0_456 = arith.constant 0 : index
    %1644 = vector.load %arg1[%c0_453, %c3_454, %c0_455, %c0_456] : memref<2x4x16x16xf32, #tpu.memory_space<vmem>>, vector<1x1x16x16xf32>
    %1645 = vector.shape_cast %1644 : vector<1x1x16x16xf32> to vector<16x16xf32>
    %1646 = arith.addf %1643, %1645 : vector<16x16xf32>
    %c0_457 = arith.constant 0 : index
    %c3_458 = arith.constant 3 : index
    %c0_459 = arith.constant 0 : index
    %c0_460 = arith.constant 0 : index
    %1647 = vector.load %arg10[%c0_457, %c3_458, %c0_459, %c0_460] : memref<2x4x16x16xf32, #tpu.memory_space<vmem>>, vector<1x1x16x16xf32>
    %1648 = vector.shape_cast %1647 : vector<1x1x16x16xf32> to vector<16x16xf32>
    %1649 = vector.shape_cast %1646 : vector<16x16xf32> to vector<1x1x16x16xf32>
    tpu.vector_store %arg10[%c0_457, %c3_458, %c0_459, %c0_460], %1649 {strides = array<i32>} : memref<2x4x16x16xf32, #tpu.memory_space<vmem>>, vector<1x1x16x16xf32>,
    %c0_461 = arith.constant 0 : index
    %c0_462 = arith.constant 0 : index
    %c16_463 = arith.constant 16 : index
    %1650 = vector.load %arg11[%c0_461, %c0_462, %c16_463] : memref<4x16x128xf32, #tpu.memory_space<vmem>>, vector<1x16x16xf32>
    %1651 = vector.shape_cast %1650 : vector<1x16x16xf32> to vector<16x16xf32>
    %c1_464 = arith.constant 1 : index
    %c0_465 = arith.constant 0 : index
    %c0_466 = arith.constant 0 : index
    %c0_467 = arith.constant 0 : index
    %1652 = vector.load %arg1[%c1_464, %c0_465, %c0_466, %c0_467] : memref<2x4x16x16xf32, #tpu.memory_space<vmem>>, vector<1x1x16x16xf32>
    %1653 = vector.shape_cast %1652 : vector<1x1x16x16xf32> to vector<16x16xf32>
    %1654 = arith.addf %1651, %1653 : vector<16x16xf32>
    %c1_468 = arith.constant 1 : index
    %c0_469 = arith.constant 0 : index
    %c0_470 = arith.constant 0 : index
    %c0_471 = arith.constant 0 : index
    %1655 = vector.load %arg10[%c1_468, %c0_469, %c0_470, %c0_471] : memref<2x4x16x16xf32, #tpu.memory_space<vmem>>, vector<1x1x16x16xf32>
    %1656 = vector.shape_cast %1655 : vector<1x1x16x16xf32> to vector<16x16xf32>
    %1657 = vector.shape_cast %1654 : vector<16x16xf32> to vector<1x1x16x16xf32>
    tpu.vector_store %arg10[%c1_468, %c0_469, %c0_470, %c0_471], %1657 {strides = array<i32>} : memref<2x4x16x16xf32, #tpu.memory_space<vmem>>, vector<1x1x16x16xf32>,
    %c1_472 = arith.constant 1 : index
    %c0_473 = arith.constant 0 : index
    %c16_474 = arith.constant 16 : index
    %1658 = vector.load %arg11[%c1_472, %c0_473, %c16_474] : memref<4x16x128xf32, #tpu.memory_space<vmem>>, vector<1x16x16xf32>
    %1659 = vector.shape_cast %1658 : vector<1x16x16xf32> to vector<16x16xf32>
    %c1_475 = arith.constant 1 : index
    %c1_476 = arith.constant 1 : index
    %c0_477 = arith.constant 0 : index
    %c0_478 = arith.constant 0 : index
    %1660 = vector.load %arg1[%c1_475, %c1_476, %c0_477, %c0_478] : memref<2x4x16x16xf32, #tpu.memory_space<vmem>>, vector<1x1x16x16xf32>
    %1661 = vector.shape_cast %1660 : vector<1x1x16x16xf32> to vector<16x16xf32>
    %1662 = arith.addf %1659, %1661 : vector<16x16xf32>
    %c1_479 = arith.constant 1 : index
    %c1_480 = arith.constant 1 : index
    %c0_481 = arith.constant 0 : index
    %c0_482 = arith.constant 0 : index
    %1663 = vector.load %arg10[%c1_479, %c1_480, %c0_481, %c0_482] : memref<2x4x16x16xf32, #tpu.memory_space<vmem>>, vector<1x1x16x16xf32>
    %1664 = vector.shape_cast %1663 : vector<1x1x16x16xf32> to vector<16x16xf32>
    %1665 = vector.shape_cast %1662 : vector<16x16xf32> to vector<1x1x16x16xf32>
    tpu.vector_store %arg10[%c1_479, %c1_480, %c0_481, %c0_482], %1665 {strides = array<i32>} : memref<2x4x16x16xf32, #tpu.memory_space<vmem>>, vector<1x1x16x16xf32>,
    %c2_483 = arith.constant 2 : index
    %c0_484 = arith.constant 0 : index
    %c16_485 = arith.constant 16 : index
    %1666 = vector.load %arg11[%c2_483, %c0_484, %c16_485] : memref<4x16x128xf32, #tpu.memory_space<vmem>>, vector<1x16x16xf32>
    %1667 = vector.shape_cast %1666 : vector<1x16x16xf32> to vector<16x16xf32>
    %c1_486 = arith.constant 1 : index
    %c2_487 = arith.constant 2 : index
    %c0_488 = arith.constant 0 : index
    %c0_489 = arith.constant 0 : index
    %1668 = vector.load %arg1[%c1_486, %c2_487, %c0_488, %c0_489] : memref<2x4x16x16xf32, #tpu.memory_space<vmem>>, vector<1x1x16x16xf32>
    %1669 = vector.shape_cast %1668 : vector<1x1x16x16xf32> to vector<16x16xf32>
    %1670 = arith.addf %1667, %1669 : vector<16x16xf32>
    %c1_490 = arith.constant 1 : index
    %c2_491 = arith.constant 2 : index
    %c0_492 = arith.constant 0 : index
    %c0_493 = arith.constant 0 : index
    %1671 = vector.load %arg10[%c1_490, %c2_491, %c0_492, %c0_493] : memref<2x4x16x16xf32, #tpu.memory_space<vmem>>, vector<1x1x16x16xf32>
    %1672 = vector.shape_cast %1671 : vector<1x1x16x16xf32> to vector<16x16xf32>
    %1673 = vector.shape_cast %1670 : vector<16x16xf32> to vector<1x1x16x16xf32>
    tpu.vector_store %arg10[%c1_490, %c2_491, %c0_492, %c0_493], %1673 {strides = array<i32>} : memref<2x4x16x16xf32, #tpu.memory_space<vmem>>, vector<1x1x16x16xf32>,
    %c3_494 = arith.constant 3 : index
    %c0_495 = arith.constant 0 : index
    %c16_496 = arith.constant 16 : index
    %1674 = vector.load %arg11[%c3_494, %c0_495, %c16_496] : memref<4x16x128xf32, #tpu.memory_space<vmem>>, vector<1x16x16xf32>
    %1675 = vector.shape_cast %1674 : vector<1x16x16xf32> to vector<16x16xf32>
    %c1_497 = arith.constant 1 : index
    %c3_498 = arith.constant 3 : index
    %c0_499 = arith.constant 0 : index
    %c0_500 = arith.constant 0 : index
    %1676 = vector.load %arg1[%c1_497, %c3_498, %c0_499, %c0_500] : memref<2x4x16x16xf32, #tpu.memory_space<vmem>>, vector<1x1x16x16xf32>
    %1677 = vector.shape_cast %1676 : vector<1x1x16x16xf32> to vector<16x16xf32>
    %1678 = arith.addf %1675, %1677 : vector<16x16xf32>
    %c1_501 = arith.constant 1 : index
    %c3_502 = arith.constant 3 : index
    %c0_503 = arith.constant 0 : index
    %c0_504 = arith.constant 0 : index
    %1679 = vector.load %arg10[%c1_501, %c3_502, %c0_503, %c0_504] : memref<2x4x16x16xf32, #tpu.memory_space<vmem>>, vector<1x1x16x16xf32>
    %1680 = vector.shape_cast %1679 : vector<1x1x16x16xf32> to vector<16x16xf32>
    %1681 = vector.shape_cast %1678 : vector<16x16xf32> to vector<1x1x16x16xf32>
    tpu.vector_store %arg10[%c1_501, %c3_502, %c0_503, %c0_504], %1681 {strides = array<i32>} : memref<2x4x16x16xf32, #tpu.memory_space<vmem>>, vector<1x1x16x16xf32>,
    return
  }
  func.func @transform_0(%arg0: i32) -> (i32, i32, i32, i32) {
    %c0_i32 = arith.constant 0 : i32
    %c0_i32_0 = arith.constant 0 : i32
    %c0_i32_1 = arith.constant 0 : i32
    %c0_i32_2 = arith.constant 0 : i32
    return %arg0, %c0_i32, %c0_i32_0, %c0_i32_1 : i32, i32, i32, i32
  }
  func.func @transform_1(%arg0: i32) -> (i32, i32) {
    %c0_i32 = arith.constant 0 : i32
    %c0_i32_0 = arith.constant 0 : i32
    %c0_i32_1 = arith.constant 0 : i32
    return %c0_i32, %c0_i32_0 : i32, i32
  }
  func.func @transform_2(%arg0: i32) -> (i32, i32) {
    %c0_i32 = arith.constant 0 : i32
    %c0_i32_0 = arith.constant 0 : i32
    %c0_i32_1 = arith.constant 0 : i32
    return %c0_i32, %c0_i32_0 : i32, i32
  }
  func.func @transform_3(%arg0: i32) -> i32 {
    %c0_i32 = arith.constant 0 : i32
    %c0_i32_0 = arith.constant 0 : i32
    return %c0_i32 : i32
  }
  func.func @transform_4(%arg0: i32) -> i32 {
    %c0_i32 = arith.constant 0 : i32
    %c0_i32_0 = arith.constant 0 : i32
    return %c0_i32 : i32
  }
  func.func @transform_5(%arg0: i32) -> (i32, i32) {
    %c0_i32 = arith.constant 0 : i32
    %c0_i32_0 = arith.constant 0 : i32
    %c0_i32_1 = arith.constant 0 : i32
    return %c0_i32, %c0_i32_0 : i32, i32
  }
  func.func @transform_6(%arg0: i32) -> (i32, i32) {
    %c0_i32 = arith.constant 0 : i32
    %c0_i32_0 = arith.constant 0 : i32
    %c0_i32_1 = arith.constant 0 : i32
    return %c0_i32, %c0_i32_0 : i32, i32
  }
  func.func @transform_7(%arg0: i32) -> i32 {
    %c0_i32 = arith.constant 0 : i32
    %c0_i32_0 = arith.constant 0 : i32
    return %c0_i32 : i32
  }
  func.func @transform_8(%arg0: i32) -> i32 {
    %c0_i32 = arith.constant 0 : i32
    %c0_i32_0 = arith.constant 0 : i32
    return %c0_i32 : i32
  }
  func.func @transform_9(%arg0: i32) -> (i32, i32, i32, i32) {
    %c0_i32 = arith.constant 0 : i32
    %c0_i32_0 = arith.constant 0 : i32
    %c0_i32_1 = arith.constant 0 : i32
    %c0_i32_2 = arith.constant 0 : i32
    return %arg0, %c0_i32, %c0_i32_0, %c0_i32_1 : i32, i32, i32, i32
  }
}

</mosaic_0001>

<llo_original>
// kernel: tpu_custom_call.1
$region0: #{tpu_custom_call.1}
  #allocation0 [shape = 'u32[]', space=smem, size = 0x4, offset = 0x4, fixed_abs, tag = 'smem constant byte address 0x4 - core index']
  #allocation1 [shape = 'u32[144,128]{1,0:T(1,128)}', space=vmem, size = 0x12000, scoped, tag = 'internal scratch']
  #allocation2 [shape = 'f32[4,16,128]{2,1,0:T(8,128)}', space=vmem, size = 0x8000, scoped, tag = 'scratch operand']
  %s0 = inlined_call_operand.hbm [shape: f32[2,4,16,16], index: 0, kind: input, shape index: {}]
  %s1 = inlined_call_operand.vmem [shape: f32[16,1], index: 1, kind: input, shape index: {}]
  %s2 = inlined_call_operand.vmem [shape: f32[16,1], index: 2, kind: input, shape index: {}]
  %s3 = inlined_call_operand.vmem [shape: f32[144], index: 3, kind: input, shape index: {}]
  %s4 = inlined_call_operand.vmem [shape: f32[4], index: 4, kind: input, shape index: {}]
  %s5 = inlined_call_operand.vmem [shape: f32[16,1], index: 5, kind: input, shape index: {}]
  %s6 = inlined_call_operand.vmem [shape: f32[16,1], index: 6, kind: input, shape index: {}]
  %s7 = inlined_call_operand.vmem [shape: f32[144], index: 7, kind: input, shape index: {}]
  %s8 = inlined_call_operand.vmem [shape: f32[4], index: 8, kind: input, shape index: {}]
  %s9 = inlined_call_operand.hbm [shape: f32[2,4,16,16], index: 9, kind: output, shape index: {}]
  %s10 = sld [smem:[#allocation0]]
  $region66: #{tpu_custom_call.1} parent=0
    _
  %s12 = ssub.s32 1, %s10
  %s13 = scalar_select 0, %s12, %s10
  $region1: #{tpu_custom_call.1} parent=0
    #allocation3 [shape = 'u8[65536]{0}', space=vmem, size = 0x10000, scoped, tag = 'input window, operand 0, single buffered']
    #allocation4 [shape = 's32[1]{0}', space=sflag, size = 0x4, scoped, tag = 'scoped memory for tpu_custom_call.1']
    #allocation5 [shape = 's32[1]{0}', space=sflag, size = 0x4, scoped, tag = 'scoped memory for tpu_custom_call.1']
    #allocation6 [shape = 's32[1]{0}', space=sflag, size = 0x4, scoped, tag = 'scoped memory for tpu_custom_call.1']
    #allocation7 [shape = 'u8[1024]{0}', space=smem, size = 0x400, scoped, tag = 'input window, operand 3, single buffered']
    #allocation8 [shape = 'u8[512]{0}', space=smem, size = 0x200, scoped, tag = 'input window, operand 4, single buffered']
    #allocation9 [shape = 's32[1]{0}', space=sflag, size = 0x4, scoped, tag = 'scoped memory for tpu_custom_call.1']
    #allocation10 [shape = 'u8[1024]{0}', space=smem, size = 0x400, scoped, tag = 'input window, operand 7, single buffered']
    #allocation11 [shape = 'u8[512]{0}', space=smem, size = 0x200, scoped, tag = 'input window, operand 8, single buffered']
    #allocation12 [shape = 's32[1]{0}', space=sflag, size = 0x4, scoped, tag = 'scoped memory for tpu_custom_call.1']
    #allocation13 [shape = 'u8[65536]{0}', space=vmem, size = 0x10000, scoped, tag = 'output window, operand 0, single buffered']
    %14 = vsyncpa [#allocation4], 0
    %15 = vsyncpa [#allocation6], 0
    %16 = vsyncpa [#allocation9], 0
    %17 = vsyncpa [#allocation12], 0
    %18 = vsyncpa [#allocation5], 0
    // Predicated region
    $region2: #{tpu_custom_call.1} parent=1 // pred_check
      _
    $region3: #{tpu_custom_call.1} parent=1 // pred_check_branch
      %20 = sbr.rel (0) target = $region5
    $region4: #{tpu_custom_call.1} parent=1 // pred_region
      %s22 = ssub.s32 2048, 2048
      %23 = vsyncadd [#allocation4], %s22
      %s24 = sshll.u32 [#allocation3], 4
      %s25 = int_to_ptr.vmem [resolvable:$true] %s24
      %30 = dma.hbm_to_vmem [thread:$0]  %s0, 2048, %s25, [#allocation4], 128, 128, 8
    $region5: #{tpu_custom_call.1} parent=1 // pred_fallthru
      _
    // Predicated region
    $region6: #{tpu_custom_call.1} parent=1 // pred_check
      _
    $region7: #{tpu_custom_call.1} parent=1 // pred_check_branch
      %32 = sbr.rel (0) target = $region9
    $region8: #{tpu_custom_call.1} parent=1 // pred_region
      _
    $region9: #{tpu_custom_call.1} parent=1 // pred_fallthru
      _
    // Predicated region
    $region10: #{tpu_custom_call.1} parent=1 // pred_check
      _
    $region11: #{tpu_custom_call.1} parent=1 // pred_check_branch
      %34 = sbr.rel (0) target = $region13
    $region12: #{tpu_custom_call.1} parent=1 // pred_region
      _
    $region13: #{tpu_custom_call.1} parent=1 // pred_fallthru
      _
    // Predicated region
    $region14: #{tpu_custom_call.1} parent=1 // pred_check
      _
    $region15: #{tpu_custom_call.1} parent=1 // pred_check_branch
      %36 = sbr.rel (0) target = $region17
    $region16: #{tpu_custom_call.1} parent=1 // pred_region
      %s38 = ssub.s32 32, 32
      %39 = vsyncadd [#allocation6], %s38
      %s41 = sshll.u32 %s3, 4
      %s42 = int_to_ptr.vmem [resolvable:$true] %s41
      %44 = dma.vmem_to_smem %s42, 32, [#allocation7], [#allocation6]
    $region17: #{tpu_custom_call.1} parent=1 // pred_fallthru
      _
    // Predicated region
    $region18: #{tpu_custom_call.1} parent=1 // pred_check
      _
    $region19: #{tpu_custom_call.1} parent=1 // pred_check_branch
      %46 = sbr.rel (0) target = $region21
    $region20: #{tpu_custom_call.1} parent=1 // pred_region
      %s48 = ssub.s32 16, 16
      %49 = vsyncadd [#allocation9], %s48
      %s51 = sshll.u32 %s4, 4
      %s52 = int_to_ptr.vmem [resolvable:$true] %s51
      %54 = dma.vmem_to_smem %s52, 16, [#allocation8], [#allocation9]
    $region21: #{tpu_custom_call.1} parent=1 // pred_fallthru
      _
    // Predicated region
    $region22: #{tpu_custom_call.1} parent=1 // pred_check
      _
    $region23: #{tpu_custom_call.1} parent=1 // pred_check_branch
      %56 = sbr.rel (0) target = $region25
    $region24: #{tpu_custom_call.1} parent=1 // pred_region
      _
    $region25: #{tpu_custom_call.1} parent=1 // pred_fallthru
      _
    // Predicated region
    $region26: #{tpu_custom_call.1} parent=1 // pred_check
      _
    $region27: #{tpu_custom_call.1} parent=1 // pred_check_branch
      %58 = sbr.rel (0) target = $region29
    $region28: #{tpu_custom_call.1} parent=1 // pred_region
      _
    $region29: #{tpu_custom_call.1} parent=1 // pred_fallthru
      _
    // Predicated region
    $region30: #{tpu_custom_call.1} parent=1 // pred_check
      _
    $region31: #{tpu_custom_call.1} parent=1 // pred_check_branch
      %60 = sbr.rel (0) target = $region33
    $region32: #{tpu_custom_call.1} parent=1 // pred_region
      %s62 = ssub.s32 32, 32
      %63 = vsyncadd [#allocation9], %s62
      %s65 = sshll.u32 %s7, 4
      %s66 = int_to_ptr.vmem [resolvable:$true] %s65
      %68 = dma.vmem_to_smem %s66, 32, [#allocation10], [#allocation9]
    $region33: #{tpu_custom_call.1} parent=1 // pred_fallthru
      _
    // Predicated region
    $region34: #{tpu_custom_call.1} parent=1 // pred_check
      _
    $region35: #{tpu_custom_call.1} parent=1 // pred_check_branch
      %70 = sbr.rel (0) target = $region37
    $region36: #{tpu_custom_call.1} parent=1 // pred_region
      %s72 = ssub.s32 16, 16
      %73 = vsyncadd [#allocation12], %s72
      %s75 = sshll.u32 %s8, 4
      %s76 = int_to_ptr.vmem [resolvable:$true] %s75
      %78 = dma.vmem_to_smem %s76, 16, [#allocation11], [#allocation12]
    $region37: #{tpu_custom_call.1} parent=1 // pred_fallthru
      _
    // Predicated region
    $region38: #{tpu_custom_call.1} parent=1 // pred_check
      _
    $region39: #{tpu_custom_call.1} parent=1 // pred_check_branch
      %80 = sbr.rel (0) target = $region41
    $region40: #{tpu_custom_call.1} parent=1 // pred_region
      %81 = dma.done [#allocation4], 2048
    $region41: #{tpu_custom_call.1} parent=1 // pred_fallthru
      _
    // Predicated region
    $region42: #{tpu_custom_call.1} parent=1 // pred_check
      _
    $region43: #{tpu_custom_call.1} parent=1 // pred_check_branch
      %83 = sbr.rel (0) target = $region45
    $region44: #{tpu_custom_call.1} parent=1 // pred_region
      %84 = dma.done [#allocation6], 32
    $region45: #{tpu_custom_call.1} parent=1 // pred_fallthru
      _
    // Predicated region
    $region46: #{tpu_custom_call.1} parent=1 // pred_check
      _
    $region47: #{tpu_custom_call.1} parent=1 // pred_check_branch
      %86 = sbr.rel (0) target = $region49
    $region48: #{tpu_custom_call.1} parent=1 // pred_region
      %87 = dma.done [#allocation9], 16
    $region49: #{tpu_custom_call.1} parent=1 // pred_fallthru
      _
    // Predicated region
    $region50: #{tpu_custom_call.1} parent=1 // pred_check
      _
    $region51: #{tpu_custom_call.1} parent=1 // pred_check_branch
      %89 = sbr.rel (0) target = $region53
    $region52: #{tpu_custom_call.1} parent=1 // pred_region
      %90 = dma.done [#allocation9], 32
    $region53: #{tpu_custom_call.1} parent=1 // pred_fallthru
      _
    // Predicated region
    $region54: #{tpu_custom_call.1} parent=1 // pred_check
      _
    $region55: #{tpu_custom_call.1} parent=1 // pred_check_branch
      %92 = sbr.rel (0) target = $region57
    $region56: #{tpu_custom_call.1} parent=1 // pred_region
      %93 = dma.done [#allocation12], 16
    $region57: #{tpu_custom_call.1} parent=1 // pred_fallthru
      _
    %94 = sfence
    %95 = vst [vmem:[#allocation2] sm:$0xff] 0.0
    %96 = vst [vmem:[#allocation2 + $0x8] sm:$0xff] 0.0
    %97 = vst [vmem:[#allocation2 + $0x10] sm:$0xff] 0.0
    %98 = vst [vmem:[#allocation2 + $0x18] sm:$0xff] 0.0
    %99 = vst [vmem:[#allocation2 + $0x20] sm:$0xff] 0.0
    %100 = vst [vmem:[#allocation2 + $0x28] sm:$0xff] 0.0
    %101 = vst [vmem:[#allocation2 + $0x30] sm:$0xff] 0.0
    %102 = vst [vmem:[#allocation2 + $0x38] sm:$0xff] 0.0
    %v103 = vld [vmem:[#allocation3] sm:$0xff]
    %v104 = vld [vmem:[#allocation3 + $0x8] sm:$0xff]
    %vm105 = vcmask 130048
    %106 = vst.msk [vmem:[#allocation2] sm:$0xff] %vm105, %v103
    %107 = vst.msk [vmem:[#allocation2 + $0x8] sm:$0xff] %vm105, %v104
    %s108 = scalar_lea.vmem [#allocation3], 16
    %v109 = vld [vmem:[%s108] sm:$0xff]
    %v110 = vld [vmem:[%s108 + $0x8] sm:$0xff]
    %s111 = scalar_lea.vmem [#allocation2], 16
    %112 = vst.msk [vmem:[%s111] sm:$0xff] %vm105, %v109
    %113 = vst.msk [vmem:[%s111 + $0x8] sm:$0xff] %vm105, %v110
    %s114 = scalar_lea.vmem [#allocation3], 32
    %v115 = vld [vmem:[%s114] sm:$0xff]
    %v116 = vld [vmem:[%s114 + $0x8] sm:$0xff]
    %s117 = scalar_lea.vmem [#allocation2], 32
    %118 = vst.msk [vmem:[%s117] sm:$0xff] %vm105, %v115
    %119 = vst.msk [vmem:[%s117 + $0x8] sm:$0xff] %vm105, %v116
    %s120 = scalar_lea.vmem [#allocation3], 48
    %v121 = vld [vmem:[%s120] sm:$0xff]
    %v122 = vld [vmem:[%s120 + $0x8] sm:$0xff]
    %s123 = scalar_lea.vmem [#allocation2], 48
    %124 = vst.msk [vmem:[%s123] sm:$0xff] %vm105, %v121
    %125 = vst.msk [vmem:[%s123 + $0x8] sm:$0xff] %vm105, %v122
    %s126 = scalar_lea.vmem [#allocation3], 64
    %v127 = vld [vmem:[%s126] sm:$0xff]
    %v128 = vld [vmem:[%s126 + $0x8] sm:$0xff]
    %131 = vrot.lane.b32.xlu0 %v127, 16
    %v132 = vpop.permute.xlu0 %131
    %133 = vrot.lane.b32.xlu0 %v128, 16
    %v134 = vpop.permute.xlu0 %133
    %vm137 = vcmask 261248
    %138 = vst.msk [vmem:[#allocation2] sm:$0xff] %vm137, %v132
    %139 = vst.msk [vmem:[#allocation2 + $0x8] sm:$0xff] %vm137, %v134
    %s140 = scalar_lea.vmem [#allocation3], 80
    %v141 = vld [vmem:[%s140] sm:$0xff]
    %v142 = vld [vmem:[%s140 + $0x8] sm:$0xff]
    %145 = vrot.lane.b32.xlu0 %v141, 16
    %v146 = vpop.permute.xlu0 %145
    %147 = vrot.lane.b32.xlu0 %v142, 16
    %v148 = vpop.permute.xlu0 %147
    %151 = vst.msk [vmem:[%s111] sm:$0xff] %vm137, %v146
    %152 = vst.msk [vmem:[%s111 + $0x8] sm:$0xff] %vm137, %v148
    %s153 = scalar_lea.vmem [#allocation3], 96
    %v154 = vld [vmem:[%s153] sm:$0xff]
    %v155 = vld [vmem:[%s153 + $0x8] sm:$0xff]
    %158 = vrot.lane.b32.xlu0 %v154, 16
    %v159 = vpop.permute.xlu0 %158
    %160 = vrot.lane.b32.xlu0 %v155, 16
    %v161 = vpop.permute.xlu0 %160
    %164 = vst.msk [vmem:[%s117] sm:$0xff] %vm137, %v159
    %165 = vst.msk [vmem:[%s117 + $0x8] sm:$0xff] %vm137, %v161
    %s166 = scalar_lea.vmem [#allocation3], 112
    %v167 = vld [vmem:[%s166] sm:$0xff]
    %v168 = vld [vmem:[%s166 + $0x8] sm:$0xff]
    %171 = vrot.lane.b32.xlu0 %v167, 16
    %v172 = vpop.permute.xlu0 %171
    %173 = vrot.lane.b32.xlu0 %v168, 16
    %v174 = vpop.permute.xlu0 %173
    %177 = vst.msk [vmem:[%s123] sm:$0xff] %vm137, %v172
    %178 = vst.msk [vmem:[%s123 + $0x8] sm:$0xff] %vm137, %v174
    %v179 = vlaneseq
    %v180 = vshrl.u32 %v179, 7
    %v181 = vadd.s32 %v180, 8
    %v182 = vlaneseq
    %v183 = vand.u32 %v182, 127
    %vm184 = vcmp.lt.s32.totalorder %v183, 0
    %vm185 = vcmp.ge.s32.totalorder %v183, 1
    %vm186 = vmor %vm184, %vm185
    %vm187 = vcmp.lt.s32.totalorder %v183, 16
    %vm188 = vcmp.ge.s32.totalorder %v183, 17
    %vm189 = vmor %vm187, %vm188
    %vm190 = vmand %vm186, %vm189
    %vm191 = vcmp.lt.s32.totalorder %v183, 15
    %vm192 = vcmp.ge.s32.totalorder %v183, 16
    %vm193 = vmor %vm191, %vm192
    %vm194 = vcmp.lt.s32.totalorder %v183, 31
    %vm195 = vcmp.ge.s32.totalorder %v183, 32
    %vm196 = vmor %vm194, %vm195
    %vm197 = vmand %vm193, %vm196
    %vm198 = vcmp.lt.s32.totalorder %v180, 15
    %vm199 = vcmp.lt.s32.totalorder %v181, 15
    %vm200 = vcmp.ge.s32.totalorder %v180, 1
    %vm201 = vcmp.ge.s32.totalorder %v181, 1
    %v202 = vld [vmem:[#allocation2] sm:$0xff]
    %v203 = vld [vmem:[#allocation2 + $0x8] sm:$0xff]
    %v204 = vld [vmem:[%s111] sm:$0xff]
    %v205 = vld [vmem:[%s111 + $0x8] sm:$0xff]
    %v206 = vld [vmem:[%s117] sm:$0xff]
    %v207 = vld [vmem:[%s117 + $0x8] sm:$0xff]
    %v208 = vld [vmem:[%s123] sm:$0xff]
    %v209 = vld [vmem:[%s123 + $0x8] sm:$0xff]
    %v210 = vld [vmem:[%s1] sm:$0xff]
    %v211 = vld [vmem:[%s1 + $0x8] sm:$0xff]
    %v212 = vld [vmem:[%s2] sm:$0xff]
    %v213 = vld [vmem:[%s2 + $0x8] sm:$0xff]
    %v214 = vadd.f32 %v202, %v203
    %v215 = vrot.slane %v214, 4
    %v216 = vadd.f32 %v214, %v215
    %v217 = vrot.slane %v216, 2
    %v218 = vadd.f32 %v216, %v217
    %v219 = vrot.slane %v218, 1
    %v220 = vadd.f32 %v218, %v219
    %v221 = vrcp.pop 16.0
    %v222 = vmul.f32 %v220, %v221
    %v223 = vsub.f32 %v202, %v222
    %v224 = vsub.f32 %v203, %v222
    %v225 = vmul.f32 %v223, %v223
    %v226 = vmul.f32 %v224, %v224
    %v227 = vadd.f32 %v225, %v226
    %v228 = vrot.slane %v227, 4
    %v229 = vadd.f32 %v227, %v228
    %v230 = vrot.slane %v229, 2
    %v231 = vadd.f32 %v229, %v230
    %v232 = vrot.slane %v231, 1
    %v233 = vadd.f32 %v231, %v232
    %v234 = vmul.f32 %v233, %v221
    %v235 = vadd.f32 %v234, 1e-05
    %v236 = vrsqrt.pop %v235
    %v237 = vmul.f32 %v223, %v236
    %v238 = vmul.f32 %v224, %v236
    %240 = vset.pattern.permute.xlu0 0
    %241 = vperm.xlu0 %240, %v210
    %v242 = vpop.permute.xlu0 %241
    %245 = vset.pattern.permute.xlu0 0
    %246 = vperm.xlu0 %245, %v211
    %v247 = vpop.permute.xlu0 %246
    %v249 = vmul.f32 %v237, %v242
    %v250 = vmul.f32 %v238, %v247
    %252 = vset.pattern.permute.xlu0 0
    %253 = vperm.xlu0 %252, %v212
    %v254 = vpop.permute.xlu0 %253
    %257 = vset.pattern.permute.xlu0 0
    %258 = vperm.xlu0 %257, %v213
    %v259 = vpop.permute.xlu0 %258
    %v261 = vadd.f32 %v249, %v254
    %v262 = vadd.f32 %v250, %v259
    %v263 = vmax.f32 %v261, 0.0
    %v264 = vmax.f32 %v262, 0.0
    %v265 = vadd.f32 %v204, %v205
    %v266 = vrot.slane %v265, 4
    %v267 = vadd.f32 %v265, %v266
    %v268 = vrot.slane %v267, 2
    %v269 = vadd.f32 %v267, %v268
    %v270 = vrot.slane %v269, 1
    %v271 = vadd.f32 %v269, %v270
    %v272 = vmul.f32 %v271, %v221
    %v273 = vsub.f32 %v204, %v272
    %v274 = vsub.f32 %v205, %v272
    %v275 = vmul.f32 %v273, %v273
    %v276 = vmul.f32 %v274, %v274
    %v277 = vadd.f32 %v275, %v276
    %v278 = vrot.slane %v277, 4
    %v279 = vadd.f32 %v277, %v278
    %v280 = vrot.slane %v279, 2
    %v281 = vadd.f32 %v279, %v280
    %v282 = vrot.slane %v281, 1
    %v283 = vadd.f32 %v281, %v282
    %v284 = vmul.f32 %v283, %v221
    %v285 = vadd.f32 %v284, 1e-05
    %v286 = vrsqrt.pop %v285
    %v287 = vmul.f32 %v273, %v286
    %v288 = vmul.f32 %v274, %v286
    %v289 = vmul.f32 %v287, %v242
    %v290 = vmul.f32 %v288, %v247
    %v291 = vadd.f32 %v289, %v254
    %v292 = vadd.f32 %v290, %v259
    %v293 = vmax.f32 %v291, 0.0
    %v294 = vmax.f32 %v292, 0.0
    %v295 = vadd.f32 %v206, %v207
    %v296 = vrot.slane %v295, 4
    %v297 = vadd.f32 %v295, %v296
    %v298 = vrot.slane %v297, 2
    %v299 = vadd.f32 %v297, %v298
    %v300 = vrot.slane %v299, 1
    %v301 = vadd.f32 %v299, %v300
    %v302 = vmul.f32 %v301, %v221
    %v303 = vsub.f32 %v206, %v302
    %v304 = vsub.f32 %v207, %v302
    %v305 = vmul.f32 %v303, %v303
    %v306 = vmul.f32 %v304, %v304
    %v307 = vadd.f32 %v305, %v306
    %v308 = vrot.slane %v307, 4
    %v309 = vadd.f32 %v307, %v308
    %v310 = vrot.slane %v309, 2
    %v311 = vadd.f32 %v309, %v310
    %v312 = vrot.slane %v311, 1
    %v313 = vadd.f32 %v311, %v312
    %v314 = vmul.f32 %v313, %v221
    %v315 = vadd.f32 %v314, 1e-05
    %v316 = vrsqrt.pop %v315
    %v317 = vmul.f32 %v303, %v316
    %v318 = vmul.f32 %v304, %v316
    %v319 = vmul.f32 %v317, %v242
    %v320 = vmul.f32 %v318, %v247
    %v321 = vadd.f32 %v319, %v254
    %v322 = vadd.f32 %v320, %v259
    %v323 = vmax.f32 %v321, 0.0
    %v324 = vmax.f32 %v322, 0.0
    %v325 = vadd.f32 %v208, %v209
    %v326 = vrot.slane %v325, 4
    %v327 = vadd.f32 %v325, %v326
    %v328 = vrot.slane %v327, 2
    %v329 = vadd.f32 %v327, %v328
    %v330 = vrot.slane %v329, 1
    %v331 = vadd.f32 %v329, %v330
    %v332 = vmul.f32 %v331, %v221
    %v333 = vsub.f32 %v208, %v332
    %v334 = vsub.f32 %v209, %v332
    %v335 = vmul.f32 %v333, %v333
    %v336 = vmul.f32 %v334, %v334
    %v337 = vadd.f32 %v335, %v336
    %v338 = vrot.slane %v337, 4
    %v339 = vadd.f32 %v337, %v338
    %v340 = vrot.slane %v339, 2
    %v341 = vadd.f32 %v339, %v340
    %v342 = vrot.slane %v341, 1
    %v343 = vadd.f32 %v341, %v342
    %v344 = vmul.f32 %v343, %v221
    %v345 = vadd.f32 %v344, 1e-05
    %v346 = vrsqrt.pop %v345
    %v347 = vmul.f32 %v333, %v346
    %v348 = vmul.f32 %v334, %v346
    %v349 = vmul.f32 %v347, %v242
    %v350 = vmul.f32 %v348, %v247
    %v351 = vadd.f32 %v349, %v254
    %v352 = vadd.f32 %v350, %v259
    %v353 = vmax.f32 %v351, 0.0
    %v354 = vmax.f32 %v352, 0.0
    %355 = vrot.lane.b32.xlu0 %v263, 1
    %v356 = vpop.permute.xlu0 %355
    %357 = vrot.lane.b32.xlu0 %v264, 1
    %v358 = vpop.permute.xlu0 %357
    %v359 = vsel %vm190, %v356, 0.0
    %v360 = vsel %vm190, %v358, 0.0
    %v361 = vsel %vm198, %v359, 0.0
    %v362 = vsel %vm199, %v360, 0.0
    %v363 = vrot.slane %v361, 7
    %v364 = vrot.slane %v362, 7
    %vm365 = vcmp.lt.s32.totalorder %v180, 1
    %v366 = vsel %vm365, %v363, %v364
    %v367 = vsel %vm365, %v364, %v363
    %s368 = sld [smem:[#allocation7]]
    %v369 = vstv %s368
    %v370 = vmul.f32 %v369, %v367
    %v371 = vmul.f32 %v369, %v366
    %s372 = sld [smem:[#allocation7 + $0x24]]
    %v373 = vstv %s372
    %v374 = vmul.f32 %v373, %v367
    %v375 = vmul.f32 %v373, %v366
    %s376 = sld [smem:[#allocation7 + $0x48]]
    %v377 = vstv %s376
    %v378 = vmul.f32 %v377, %v367
    %v379 = vmul.f32 %v377, %v366
    %s380 = sld [smem:[#allocation7 + $0x6c]]
    %v381 = vstv %s380
    %v382 = vmul.f32 %v381, %v367
    %v383 = vmul.f32 %v381, %v366
    %s384 = sld [smem:[#allocation7 + $0x3]]
    %v385 = vstv %s384
    %v386 = vmul.f32 %v385, %v359
    %v387 = vmul.f32 %v385, %v360
    %v388 = vadd.f32 %v370, %v386
    %v389 = vadd.f32 %v371, %v387
    %s390 = sld [smem:[#allocation7 + $0x27]]
    %v391 = vstv %s390
    %v392 = vmul.f32 %v391, %v359
    %v393 = vmul.f32 %v391, %v360
    %v394 = vadd.f32 %v374, %v392
    %v395 = vadd.f32 %v375, %v393
    %s396 = sld [smem:[#allocation7 + $0x4b]]
    %v397 = vstv %s396
    %v398 = vmul.f32 %v397, %v359
    %v399 = vmul.f32 %v397, %v360
    %v400 = vadd.f32 %v378, %v398
    %v401 = vadd.f32 %v379, %v399
    %s402 = sld [smem:[#allocation7 + $0x6f]]
    %v403 = vstv %s402
    %v404 = vmul.f32 %v403, %v359
    %v405 = vmul.f32 %v403, %v360
    %v406 = vadd.f32 %v382, %v404
    %v407 = vadd.f32 %v383, %v405
    %v408 = vsel %vm200, %v359, 0.0
    %v409 = vsel %vm201, %v360, 0.0
    %v410 = vrot.slane %v408, 1
    %v411 = vrot.slane %v409, 1
    %vm412 = vcmp.lt.s32.totalorder %v180, 7
    %v413 = vsel %vm412, %v410, %v411
    %v414 = vsel %vm412, %v411, %v410
    %s415 = sld [smem:[#allocation7 + $0x6]]
    %v416 = vstv %s415
    %v417 = vmul.f32 %v416, %v413
    %v418 = vmul.f32 %v416, %v414
    %v419 = vadd.f32 %v388, %v417
    %v420 = vadd.f32 %v389, %v418
    %s421 = sld [smem:[#allocation7 + $0x2a]]
    %v422 = vstv %s421
    %v423 = vmul.f32 %v422, %v413
    %v424 = vmul.f32 %v422, %v414
    %v425 = vadd.f32 %v394, %v423
    %v426 = vadd.f32 %v395, %v424
    %s427 = sld [smem:[#allocation7 + $0x4e]]
    %v428 = vstv %s427
    %v429 = vmul.f32 %v428, %v413
    %v430 = vmul.f32 %v428, %v414
    %v431 = vadd.f32 %v400, %v429
    %v432 = vadd.f32 %v401, %v430
    %s433 = sld [smem:[#allocation7 + $0x72]]
    %v434 = vstv %s433
    %v435 = vmul.f32 %v434, %v413
    %v436 = vmul.f32 %v434, %v414
    %v437 = vadd.f32 %v406, %v435
    %v438 = vadd.f32 %v407, %v436
    %v439 = vsel %vm198, %v263, 0.0
    %v440 = vsel %vm199, %v264, 0.0
    %v441 = vrot.slane %v439, 7
    %v442 = vrot.slane %v440, 7
    %v443 = vsel %vm365, %v441, %v442
    %v444 = vsel %vm365, %v442, %v441
    %s445 = sld [smem:[#allocation7 + $0x1]]
    %v446 = vstv %s445
    %v447 = vmul.f32 %v446, %v444
    %v448 = vmul.f32 %v446, %v443
    %v449 = vadd.f32 %v419, %v447
    %v450 = vadd.f32 %v420, %v448
    %s451 = sld [smem:[#allocation7 + $0x25]]
    %v452 = vstv %s451
    %v453 = vmul.f32 %v452, %v444
    %v454 = vmul.f32 %v452, %v443
    %v455 = vadd.f32 %v425, %v453
    %v456 = vadd.f32 %v426, %v454
    %s457 = sld [smem:[#allocation7 + $0x49]]
    %v458 = vstv %s457
    %v459 = vmul.f32 %v458, %v444
    %v460 = vmul.f32 %v458, %v443
    %v461 = vadd.f32 %v431, %v459
    %v462 = vadd.f32 %v432, %v460
    %s463 = sld [smem:[#allocation7 + $0x6d]]
    %v464 = vstv %s463
    %v465 = vmul.f32 %v464, %v444
    %v466 = vmul.f32 %v464, %v443
    %v467 = vadd.f32 %v437, %v465
    %v468 = vadd.f32 %v438, %v466
    %s469 = sld [smem:[#allocation7 + $0x4]]
    %v470 = vstv %s469
    %v471 = vmul.f32 %v470, %v263
    %v472 = vmul.f32 %v470, %v264
    %v473 = vadd.f32 %v449, %v471
    %v474 = vadd.f32 %v450, %v472
    %s475 = sld [smem:[#allocation7 + $0x28]]
    %v476 = vstv %s475
    %v477 = vmul.f32 %v476, %v263
    %v478 = vmul.f32 %v476, %v264
    %v479 = vadd.f32 %v455, %v477
    %v480 = vadd.f32 %v456, %v478
    %s481 = sld [smem:[#allocation7 + $0x4c]]
    %v482 = vstv %s481
    %v483 = vmul.f32 %v482, %v263
    %v484 = vmul.f32 %v482, %v264
    %v485 = vadd.f32 %v461, %v483
    %v486 = vadd.f32 %v462, %v484
    %s487 = sld [smem:[#allocation7 + $0x70]]
    %v488 = vstv %s487
    %v489 = vmul.f32 %v488, %v263
    %v490 = vmul.f32 %v488, %v264
    %v491 = vadd.f32 %v467, %v489
    %v492 = vadd.f32 %v468, %v490
    %v493 = vsel %vm200, %v263, 0.0
    %v494 = vsel %vm201, %v264, 0.0
    %v495 = vrot.slane %v493, 1
    %v496 = vrot.slane %v494, 1
    %v497 = vsel %vm412, %v495, %v496
    %v498 = vsel %vm412, %v496, %v495
    %s499 = sld [smem:[#allocation7 + $0x7]]
    %v500 = vstv %s499
    %v501 = vmul.f32 %v500, %v497
    %v502 = vmul.f32 %v500, %v498
    %v503 = vadd.f32 %v473, %v501
    %v504 = vadd.f32 %v474, %v502
    %s505 = sld [smem:[#allocation7 + $0x2b]]
    %v506 = vstv %s505
    %v507 = vmul.f32 %v506, %v497
    %v508 = vmul.f32 %v506, %v498
    %v509 = vadd.f32 %v479, %v507
    %v510 = vadd.f32 %v480, %v508
    %s511 = sld [smem:[#allocation7 + $0x4f]]
    %v512 = vstv %s511
    %v513 = vmul.f32 %v512, %v497
    %v514 = vmul.f32 %v512, %v498
    %v515 = vadd.f32 %v485, %v513
    %v516 = vadd.f32 %v486, %v514
    %s517 = sld [smem:[#allocation7 + $0x73]]
    %v518 = vstv %s517
    %v519 = vmul.f32 %v518, %v497
    %v520 = vmul.f32 %v518, %v498
    %v521 = vadd.f32 %v491, %v519
    %v522 = vadd.f32 %v492, %v520
    %523 = vrot.lane.b32.xlu0 %v263, 127
    %v524 = vpop.permute.xlu0 %523
    %525 = vrot.lane.b32.xlu0 %v264, 127
    %v526 = vpop.permute.xlu0 %525
    %v527 = vsel %vm197, %v524, 0.0
    %v528 = vsel %vm197, %v526, 0.0
    %v529 = vsel %vm198, %v527, 0.0
    %v530 = vsel %vm199, %v528, 0.0
    %v531 = vrot.slane %v529, 7
    %v532 = vrot.slane %v530, 7
    %v533 = vsel %vm365, %v531, %v532
    %v534 = vsel %vm365, %v532, %v531
    %s535 = sld [smem:[#allocation7 + $0x2]]
    %v536 = vstv %s535
    %v537 = vmul.f32 %v536, %v534
    %v538 = vmul.f32 %v536, %v533
    %v539 = vadd.f32 %v503, %v537
    %v540 = vadd.f32 %v504, %v538
    %s541 = sld [smem:[#allocation7 + $0x26]]
    %v542 = vstv %s541
    %v543 = vmul.f32 %v542, %v534
    %v544 = vmul.f32 %v542, %v533
    %v545 = vadd.f32 %v509, %v543
    %v546 = vadd.f32 %v510, %v544
    %s547 = sld [smem:[#allocation7 + $0x4a]]
    %v548 = vstv %s547
    %v549 = vmul.f32 %v548, %v534
    %v550 = vmul.f32 %v548, %v533
    %v551 = vadd.f32 %v515, %v549
    %v552 = vadd.f32 %v516, %v550
    %s553 = sld [smem:[#allocation7 + $0x6e]]
    %v554 = vstv %s553
    %v555 = vmul.f32 %v554, %v534
    %v556 = vmul.f32 %v554, %v533
    %v557 = vadd.f32 %v521, %v555
    %v558 = vadd.f32 %v522, %v556
    %s559 = sld [smem:[#allocation7 + $0x5]]
    %v560 = vstv %s559
    %v561 = vmul.f32 %v560, %v527
    %v562 = vmul.f32 %v560, %v528
    %v563 = vadd.f32 %v539, %v561
    %v564 = vadd.f32 %v540, %v562
    %s565 = sld [smem:[#allocation7 + $0x29]]
    %v566 = vstv %s565
    %v567 = vmul.f32 %v566, %v527
    %v568 = vmul.f32 %v566, %v528
    %v569 = vadd.f32 %v545, %v567
    %v570 = vadd.f32 %v546, %v568
    %s571 = sld [smem:[#allocation7 + $0x4d]]
    %v572 = vstv %s571
    %v573 = vmul.f32 %v572, %v527
    %v574 = vmul.f32 %v572, %v528
    %v575 = vadd.f32 %v551, %v573
    %v576 = vadd.f32 %v552, %v574
    %s577 = sld [smem:[#allocation7 + $0x71]]
    %v578 = vstv %s577
    %v579 = vmul.f32 %v578, %v527
    %v580 = vmul.f32 %v578, %v528
    %v581 = vadd.f32 %v557, %v579
    %v582 = vadd.f32 %v558, %v580
    %v583 = vsel %vm200, %v527, 0.0
    %v584 = vsel %vm201, %v528, 0.0
    %v585 = vrot.slane %v583, 1
    %v586 = vrot.slane %v584, 1
    %v587 = vsel %vm412, %v585, %v586
    %v588 = vsel %vm412, %v586, %v585
    %s589 = sld [smem:[#allocation7 + $0x8]]
    %v590 = vstv %s589
    %v591 = vmul.f32 %v590, %v587
    %v592 = vmul.f32 %v590, %v588
    %v593 = vadd.f32 %v563, %v591
    %v594 = vadd.f32 %v564, %v592
    %s595 = sld [smem:[#allocation7 + $0x2c]]
    %v596 = vstv %s595
    %v597 = vmul.f32 %v596, %v587
    %v598 = vmul.f32 %v596, %v588
    %v599 = vadd.f32 %v569, %v597
    %v600 = vadd.f32 %v570, %v598
    %s601 = sld [smem:[#allocation7 + $0x50]]
    %v602 = vstv %s601
    %v603 = vmul.f32 %v602, %v587
    %v604 = vmul.f32 %v602, %v588
    %v605 = vadd.f32 %v575, %v603
    %v606 = vadd.f32 %v576, %v604
    %s607 = sld [smem:[#allocation7 + $0x74]]
    %v608 = vstv %s607
    %v609 = vmul.f32 %v608, %v587
    %v610 = vmul.f32 %v608, %v588
    %v611 = vadd.f32 %v581, %v609
    %v612 = vadd.f32 %v582, %v610
    %613 = vrot.lane.b32.xlu0 %v293, 1
    %v614 = vpop.permute.xlu0 %613
    %615 = vrot.lane.b32.xlu0 %v294, 1
    %v616 = vpop.permute.xlu0 %615
    %v617 = vsel %vm190, %v614, 0.0
    %v618 = vsel %vm190, %v616, 0.0
    %v619 = vsel %vm198, %v617, 0.0
    %v620 = vsel %vm199, %v618, 0.0
    %v621 = vrot.slane %v619, 7
    %v622 = vrot.slane %v620, 7
    %v623 = vsel %vm365, %v621, %v622
    %v624 = vsel %vm365, %v622, %v621
    %s625 = sld [smem:[#allocation7 + $0x9]]
    %v626 = vstv %s625
    %v627 = vmul.f32 %v626, %v624
    %v628 = vmul.f32 %v626, %v623
    %v629 = vadd.f32 %v593, %v627
    %v630 = vadd.f32 %v594, %v628
    %s631 = sld [smem:[#allocation7 + $0x2d]]
    %v632 = vstv %s631
    %v633 = vmul.f32 %v632, %v624
    %v634 = vmul.f32 %v632, %v623
    %v635 = vadd.f32 %v599, %v633
    %v636 = vadd.f32 %v600, %v634
    %s637 = sld [smem:[#allocation7 + $0x51]]
    %v638 = vstv %s637
    %v639 = vmul.f32 %v638, %v624
    %v640 = vmul.f32 %v638, %v623
    %v641 = vadd.f32 %v605, %v639
    %v642 = vadd.f32 %v606, %v640
    %s643 = sld [smem:[#allocation7 + $0x75]]
    %v644 = vstv %s643
    %v645 = vmul.f32 %v644, %v624
    %v646 = vmul.f32 %v644, %v623
    %v647 = vadd.f32 %v611, %v645
    %v648 = vadd.f32 %v612, %v646
    %s649 = sld [smem:[#allocation7 + $0xc]]
    %v650 = vstv %s649
    %v651 = vmul.f32 %v650, %v617
    %v652 = vmul.f32 %v650, %v618
    %v653 = vadd.f32 %v629, %v651
    %v654 = vadd.f32 %v630, %v652
    %s655 = sld [smem:[#allocation7 + $0x30]]
    %v656 = vstv %s655
    %v657 = vmul.f32 %v656, %v617
    %v658 = vmul.f32 %v656, %v618
    %v659 = vadd.f32 %v635, %v657
    %v660 = vadd.f32 %v636, %v658
    %s661 = sld [smem:[#allocation7 + $0x54]]
    %v662 = vstv %s661
    %v663 = vmul.f32 %v662, %v617
    %v664 = vmul.f32 %v662, %v618
    %v665 = vadd.f32 %v641, %v663
    %v666 = vadd.f32 %v642, %v664
    %s667 = sld [smem:[#allocation7 + $0x78]]
    %v668 = vstv %s667
    %v669 = vmul.f32 %v668, %v617
    %v670 = vmul.f32 %v668, %v618
    %v671 = vadd.f32 %v647, %v669
    %v672 = vadd.f32 %v648, %v670
    %v673 = vsel %vm200, %v617, 0.0
    %v674 = vsel %vm201, %v618, 0.0
    %v675 = vrot.slane %v673, 1
    %v676 = vrot.slane %v674, 1
    %v677 = vsel %vm412, %v675, %v676
    %v678 = vsel %vm412, %v676, %v675
    %s679 = sld [smem:[#allocation7 + $0xf]]
    %v680 = vstv %s679
    %v681 = vmul.f32 %v680, %v677
    %v682 = vmul.f32 %v680, %v678
    %v683 = vadd.f32 %v653, %v681
    %v684 = vadd.f32 %v654, %v682
    %s685 = sld [smem:[#allocation7 + $0x33]]
    %v686 = vstv %s685
    %v687 = vmul.f32 %v686, %v677
    %v688 = vmul.f32 %v686, %v678
    %v689 = vadd.f32 %v659, %v687
    %v690 = vadd.f32 %v660, %v688
    %s691 = sld [smem:[#allocation7 + $0x57]]
    %v692 = vstv %s691
    %v693 = vmul.f32 %v692, %v677
    %v694 = vmul.f32 %v692, %v678
    %v695 = vadd.f32 %v665, %v693
    %v696 = vadd.f32 %v666, %v694
    %s697 = sld [smem:[#allocation7 + $0x7b]]
    %v698 = vstv %s697
    %v699 = vmul.f32 %v698, %v677
    %v700 = vmul.f32 %v698, %v678
    %v701 = vadd.f32 %v671, %v699
    %v702 = vadd.f32 %v672, %v700
    %v703 = vsel %vm198, %v293, 0.0
    %v704 = vsel %vm199, %v294, 0.0
    %v705 = vrot.slane %v703, 7
    %v706 = vrot.slane %v704, 7
    %v707 = vsel %vm365, %v705, %v706
    %v708 = vsel %vm365, %v706, %v705
    %s709 = sld [smem:[#allocation7 + $0xa]]
    %v710 = vstv %s709
    %v711 = vmul.f32 %v710, %v708
    %v712 = vmul.f32 %v710, %v707
    %v713 = vadd.f32 %v683, %v711
    %v714 = vadd.f32 %v684, %v712
    %s715 = sld [smem:[#allocation7 + $0x2e]]
    %v716 = vstv %s715
    %v717 = vmul.f32 %v716, %v708
    %v718 = vmul.f32 %v716, %v707
    %v719 = vadd.f32 %v689, %v717
    %v720 = vadd.f32 %v690, %v718
    %s721 = sld [smem:[#allocation7 + $0x52]]
    %v722 = vstv %s721
    %v723 = vmul.f32 %v722, %v708
    %v724 = vmul.f32 %v722, %v707
    %v725 = vadd.f32 %v695, %v723
    %v726 = vadd.f32 %v696, %v724
    %s727 = sld [smem:[#allocation7 + $0x76]]
    %v728 = vstv %s727
    %v729 = vmul.f32 %v728, %v708
    %v730 = vmul.f32 %v728, %v707
    %v731 = vadd.f32 %v701, %v729
    %v732 = vadd.f32 %v702, %v730
    %s733 = sld [smem:[#allocation7 + $0xd]]
    %v734 = vstv %s733
    %v735 = vmul.f32 %v734, %v293
    %v736 = vmul.f32 %v734, %v294
    %v737 = vadd.f32 %v713, %v735
    %v738 = vadd.f32 %v714, %v736
    %s739 = sld [smem:[#allocation7 + $0x31]]
    %v740 = vstv %s739
    %v741 = vmul.f32 %v740, %v293
    %v742 = vmul.f32 %v740, %v294
    %v743 = vadd.f32 %v719, %v741
    %v744 = vadd.f32 %v720, %v742
    %s745 = sld [smem:[#allocation7 + $0x55]]
    %v746 = vstv %s745
    %v747 = vmul.f32 %v746, %v293
    %v748 = vmul.f32 %v746, %v294
    %v749 = vadd.f32 %v725, %v747
    %v750 = vadd.f32 %v726, %v748
    %s751 = sld [smem:[#allocation7 + $0x79]]
    %v752 = vstv %s751
    %v753 = vmul.f32 %v752, %v293
    %v754 = vmul.f32 %v752, %v294
    %v755 = vadd.f32 %v731, %v753
    %v756 = vadd.f32 %v732, %v754
    %v757 = vsel %vm200, %v293, 0.0
    %v758 = vsel %vm201, %v294, 0.0
    %v759 = vrot.slane %v757, 1
    %v760 = vrot.slane %v758, 1
    %v761 = vsel %vm412, %v759, %v760
    %v762 = vsel %vm412, %v760, %v759
    %s763 = sld [smem:[#allocation7 + $0x10]]
    %v764 = vstv %s763
    %v765 = vmul.f32 %v764, %v761
    %v766 = vmul.f32 %v764, %v762
    %v767 = vadd.f32 %v737, %v765
    %v768 = vadd.f32 %v738, %v766
    %s769 = sld [smem:[#allocation7 + $0x34]]
    %v770 = vstv %s769
    %v771 = vmul.f32 %v770, %v761
    %v772 = vmul.f32 %v770, %v762
    %v773 = vadd.f32 %v743, %v771
    %v774 = vadd.f32 %v744, %v772
    %s775 = sld [smem:[#allocation7 + $0x58]]
    %v776 = vstv %s775
    %v777 = vmul.f32 %v776, %v761
    %v778 = vmul.f32 %v776, %v762
    %v779 = vadd.f32 %v749, %v777
    %v780 = vadd.f32 %v750, %v778
    %s781 = sld [smem:[#allocation7 + $0x7c]]
    %v782 = vstv %s781
    %v783 = vmul.f32 %v782, %v761
    %v784 = vmul.f32 %v782, %v762
    %v785 = vadd.f32 %v755, %v783
    %v786 = vadd.f32 %v756, %v784
    %787 = vrot.lane.b32.xlu0 %v293, 127
    %v788 = vpop.permute.xlu0 %787
    %789 = vrot.lane.b32.xlu0 %v294, 127
    %v790 = vpop.permute.xlu0 %789
    %v791 = vsel %vm197, %v788, 0.0
    %v792 = vsel %vm197, %v790, 0.0
    %v793 = vsel %vm198, %v791, 0.0
    %v794 = vsel %vm199, %v792, 0.0
    %v795 = vrot.slane %v793, 7
    %v796 = vrot.slane %v794, 7
    %v797 = vsel %vm365, %v795, %v796
    %v798 = vsel %vm365, %v796, %v795
    %s799 = sld [smem:[#allocation7 + $0xb]]
    %v800 = vstv %s799
    %v801 = vmul.f32 %v800, %v798
    %v802 = vmul.f32 %v800, %v797
    %v803 = vadd.f32 %v767, %v801
    %v804 = vadd.f32 %v768, %v802
    %s805 = sld [smem:[#allocation7 + $0x2f]]
    %v806 = vstv %s805
    %v807 = vmul.f32 %v806, %v798
    %v808 = vmul.f32 %v806, %v797
    %v809 = vadd.f32 %v773, %v807
    %v810 = vadd.f32 %v774, %v808
    %s811 = sld [smem:[#allocation7 + $0x53]]
    %v812 = vstv %s811
    %v813 = vmul.f32 %v812, %v798
    %v814 = vmul.f32 %v812, %v797
    %v815 = vadd.f32 %v779, %v813
    %v816 = vadd.f32 %v780, %v814
    %s817 = sld [smem:[#allocation7 + $0x77]]
    %v818 = vstv %s817
    %v819 = vmul.f32 %v818, %v798
    %v820 = vmul.f32 %v818, %v797
    %v821 = vadd.f32 %v785, %v819
    %v822 = vadd.f32 %v786, %v820
    %s823 = sld [smem:[#allocation7 + $0xe]]
    %v824 = vstv %s823
    %v825 = vmul.f32 %v824, %v791
    %v826 = vmul.f32 %v824, %v792
    %v827 = vadd.f32 %v803, %v825
    %v828 = vadd.f32 %v804, %v826
    %s829 = sld [smem:[#allocation7 + $0x32]]
    %v830 = vstv %s829
    %v831 = vmul.f32 %v830, %v791
    %v832 = vmul.f32 %v830, %v792
    %v833 = vadd.f32 %v809, %v831
    %v834 = vadd.f32 %v810, %v832
    %s835 = sld [smem:[#allocation7 + $0x56]]
    %v836 = vstv %s835
    %v837 = vmul.f32 %v836, %v791
    %v838 = vmul.f32 %v836, %v792
    %v839 = vadd.f32 %v815, %v837
    %v840 = vadd.f32 %v816, %v838
    %s841 = sld [smem:[#allocation7 + $0x7a]]
    %v842 = vstv %s841
    %v843 = vmul.f32 %v842, %v791
    %v844 = vmul.f32 %v842, %v792
    %v845 = vadd.f32 %v821, %v843
    %v846 = vadd.f32 %v822, %v844
    %v847 = vsel %vm200, %v791, 0.0
    %v848 = vsel %vm201, %v792, 0.0
    %v849 = vrot.slane %v847, 1
    %v850 = vrot.slane %v848, 1
    %v851 = vsel %vm412, %v849, %v850
    %v852 = vsel %vm412, %v850, %v849
    %s853 = sld [smem:[#allocation7 + $0x11]]
    %v854 = vstv %s853
    %v855 = vmul.f32 %v854, %v851
    %v856 = vmul.f32 %v854, %v852
    %v857 = vadd.f32 %v827, %v855
    %v858 = vadd.f32 %v828, %v856
    %s859 = sld [smem:[#allocation7 + $0x35]]
    %v860 = vstv %s859
    %v861 = vmul.f32 %v860, %v851
    %v862 = vmul.f32 %v860, %v852
    %v863 = vadd.f32 %v833, %v861
    %v864 = vadd.f32 %v834, %v862
    %s865 = sld [smem:[#allocation7 + $0x59]]
    %v866 = vstv %s865
    %v867 = vmul.f32 %v866, %v851
    %v868 = vmul.f32 %v866, %v852
    %v869 = vadd.f32 %v839, %v867
    %v870 = vadd.f32 %v840, %v868
    %s871 = sld [smem:[#allocation7 + $0x7d]]
    %v872 = vstv %s871
    %v873 = vmul.f32 %v872, %v851
    %v874 = vmul.f32 %v872, %v852
    %v875 = vadd.f32 %v845, %v873
    %v876 = vadd.f32 %v846, %v874
    %877 = vrot.lane.b32.xlu0 %v323, 1
    %v878 = vpop.permute.xlu0 %877
    %879 = vrot.lane.b32.xlu0 %v324, 1
    %v880 = vpop.permute.xlu0 %879
    %v881 = vsel %vm190, %v878, 0.0
    %v882 = vsel %vm190, %v880, 0.0
    %v883 = vsel %vm198, %v881, 0.0
    %v884 = vsel %vm199, %v882, 0.0
    %v885 = vrot.slane %v883, 7
    %v886 = vrot.slane %v884, 7
    %v887 = vsel %vm365, %v885, %v886
    %v888 = vsel %vm365, %v886, %v885
    %s889 = sld [smem:[#allocation7 + $0x12]]
    %v890 = vstv %s889
    %v891 = vmul.f32 %v890, %v888
    %v892 = vmul.f32 %v890, %v887
    %v893 = vadd.f32 %v857, %v891
    %v894 = vadd.f32 %v858, %v892
    %s895 = sld [smem:[#allocation7 + $0x36]]
    %v896 = vstv %s895
    %v897 = vmul.f32 %v896, %v888
    %v898 = vmul.f32 %v896, %v887
    %v899 = vadd.f32 %v863, %v897
    %v900 = vadd.f32 %v864, %v898
    %s901 = sld [smem:[#allocation7 + $0x5a]]
    %v902 = vstv %s901
    %v903 = vmul.f32 %v902, %v888
    %v904 = vmul.f32 %v902, %v887
    %v905 = vadd.f32 %v869, %v903
    %v906 = vadd.f32 %v870, %v904
    %s907 = sld [smem:[#allocation7 + $0x7e]]
    %v908 = vstv %s907
    %v909 = vmul.f32 %v908, %v888
    %v910 = vmul.f32 %v908, %v887
    %v911 = vadd.f32 %v875, %v909
    %v912 = vadd.f32 %v876, %v910
    %s913 = sld [smem:[#allocation7 + $0x15]]
    %v914 = vstv %s913
    %v915 = vmul.f32 %v914, %v881
    %v916 = vmul.f32 %v914, %v882
    %v917 = vadd.f32 %v893, %v915
    %v918 = vadd.f32 %v894, %v916
    %s919 = sld [smem:[#allocation7 + $0x39]]
    %v920 = vstv %s919
    %v921 = vmul.f32 %v920, %v881
    %v922 = vmul.f32 %v920, %v882
    %v923 = vadd.f32 %v899, %v921
    %v924 = vadd.f32 %v900, %v922
    %s925 = sld [smem:[#allocation7 + $0x5d]]
    %v926 = vstv %s925
    %v927 = vmul.f32 %v926, %v881
    %v928 = vmul.f32 %v926, %v882
    %v929 = vadd.f32 %v905, %v927
    %v930 = vadd.f32 %v906, %v928
    %s931 = sld [smem:[#allocation7 + $0x81]]
    %v932 = vstv %s931
    %v933 = vmul.f32 %v932, %v881
    %v934 = vmul.f32 %v932, %v882
    %v935 = vadd.f32 %v911, %v933
    %v936 = vadd.f32 %v912, %v934
    %v937 = vsel %vm200, %v881, 0.0
    %v938 = vsel %vm201, %v882, 0.0
    %v939 = vrot.slane %v937, 1
    %v940 = vrot.slane %v938, 1
    %v941 = vsel %vm412, %v939, %v940
    %v942 = vsel %vm412, %v940, %v939
    %s943 = sld [smem:[#allocation7 + $0x18]]
    %v944 = vstv %s943
    %v945 = vmul.f32 %v944, %v941
    %v946 = vmul.f32 %v944, %v942
    %v947 = vadd.f32 %v917, %v945
    %v948 = vadd.f32 %v918, %v946
    %s949 = sld [smem:[#allocation7 + $0x3c]]
    %v950 = vstv %s949
    %v951 = vmul.f32 %v950, %v941
    %v952 = vmul.f32 %v950, %v942
    %v953 = vadd.f32 %v923, %v951
    %v954 = vadd.f32 %v924, %v952
    %s955 = sld [smem:[#allocation7 + $0x60]]
    %v956 = vstv %s955
    %v957 = vmul.f32 %v956, %v941
    %v958 = vmul.f32 %v956, %v942
    %v959 = vadd.f32 %v929, %v957
    %v960 = vadd.f32 %v930, %v958
    %s961 = sld [smem:[#allocation7 + $0x84]]
    %v962 = vstv %s961
    %v963 = vmul.f32 %v962, %v941
    %v964 = vmul.f32 %v962, %v942
    %v965 = vadd.f32 %v935, %v963
    %v966 = vadd.f32 %v936, %v964
    %v967 = vsel %vm198, %v323, 0.0
    %v968 = vsel %vm199, %v324, 0.0
    %v969 = vrot.slane %v967, 7
    %v970 = vrot.slane %v968, 7
    %v971 = vsel %vm365, %v969, %v970
    %v972 = vsel %vm365, %v970, %v969
    %s973 = sld [smem:[#allocation7 + $0x13]]
    %v974 = vstv %s973
    %v975 = vmul.f32 %v974, %v972
    %v976 = vmul.f32 %v974, %v971
    %v977 = vadd.f32 %v947, %v975
    %v978 = vadd.f32 %v948, %v976
    %s979 = sld [smem:[#allocation7 + $0x37]]
    %v980 = vstv %s979
    %v981 = vmul.f32 %v980, %v972
    %v982 = vmul.f32 %v980, %v971
    %v983 = vadd.f32 %v953, %v981
    %v984 = vadd.f32 %v954, %v982
    %s985 = sld [smem:[#allocation7 + $0x5b]]
    %v986 = vstv %s985
    %v987 = vmul.f32 %v986, %v972
    %v988 = vmul.f32 %v986, %v971
    %v989 = vadd.f32 %v959, %v987
    %v990 = vadd.f32 %v960, %v988
    %s991 = sld [smem:[#allocation7 + $0x7f]]
    %v992 = vstv %s991
    %v993 = vmul.f32 %v992, %v972
    %v994 = vmul.f32 %v992, %v971
    %v995 = vadd.f32 %v965, %v993
    %v996 = vadd.f32 %v966, %v994
    %s997 = sld [smem:[#allocation7 + $0x16]]
    %v998 = vstv %s997
    %v999 = vmul.f32 %v998, %v323
    %v1000 = vmul.f32 %v998, %v324
    %v1001 = vadd.f32 %v977, %v999
    %v1002 = vadd.f32 %v978, %v1000
    %s1003 = sld [smem:[#allocation7 + $0x3a]]
    %v1004 = vstv %s1003
    %v1005 = vmul.f32 %v1004, %v323
    %v1006 = vmul.f32 %v1004, %v324
    %v1007 = vadd.f32 %v983, %v1005
    %v1008 = vadd.f32 %v984, %v1006
    %s1009 = sld [smem:[#allocation7 + $0x5e]]
    %v1010 = vstv %s1009
    %v1011 = vmul.f32 %v1010, %v323
    %v1012 = vmul.f32 %v1010, %v324
    %v1013 = vadd.f32 %v989, %v1011
    %v1014 = vadd.f32 %v990, %v1012
    %s1015 = sld [smem:[#allocation7 + $0x82]]
    %v1016 = vstv %s1015
    %v1017 = vmul.f32 %v1016, %v323
    %v1018 = vmul.f32 %v1016, %v324
    %v1019 = vadd.f32 %v995, %v1017
    %v1020 = vadd.f32 %v996, %v1018
    %v1021 = vsel %vm200, %v323, 0.0
    %v1022 = vsel %vm201, %v324, 0.0
    %v1023 = vrot.slane %v1021, 1
    %v1024 = vrot.slane %v1022, 1
    %v1025 = vsel %vm412, %v1023, %v1024
    %v1026 = vsel %vm412, %v1024, %v1023
    %s1027 = sld [smem:[#allocation7 + $0x19]]
    %v1028 = vstv %s1027
    %v1029 = vmul.f32 %v1028, %v1025
    %v1030 = vmul.f32 %v1028, %v1026
    %v1031 = vadd.f32 %v1001, %v1029
    %v1032 = vadd.f32 %v1002, %v1030
    %s1033 = sld [smem:[#allocation7 + $0x3d]]
    %v1034 = vstv %s1033
    %v1035 = vmul.f32 %v1034, %v1025
    %v1036 = vmul.f32 %v1034, %v1026
    %v1037 = vadd.f32 %v1007, %v1035
    %v1038 = vadd.f32 %v1008, %v1036
    %s1039 = sld [smem:[#allocation7 + $0x61]]
    %v1040 = vstv %s1039
    %v1041 = vmul.f32 %v1040, %v1025
    %v1042 = vmul.f32 %v1040, %v1026
    %v1043 = vadd.f32 %v1013, %v1041
    %v1044 = vadd.f32 %v1014, %v1042
    %s1045 = sld [smem:[#allocation7 + $0x85]]
    %v1046 = vstv %s1045
    %v1047 = vmul.f32 %v1046, %v1025
    %v1048 = vmul.f32 %v1046, %v1026
    %v1049 = vadd.f32 %v1019, %v1047
    %v1050 = vadd.f32 %v1020, %v1048
    %1051 = vrot.lane.b32.xlu0 %v323, 127
    %v1052 = vpop.permute.xlu0 %1051
    %1053 = vrot.lane.b32.xlu0 %v324, 127
    %v1054 = vpop.permute.xlu0 %1053
    %v1055 = vsel %vm197, %v1052, 0.0
    %v1056 = vsel %vm197, %v1054, 0.0
    %v1057 = vsel %vm198, %v1055, 0.0
    %v1058 = vsel %vm199, %v1056, 0.0
    %v1059 = vrot.slane %v1057, 7
    %v1060 = vrot.slane %v1058, 7
    %v1061 = vsel %vm365, %v1059, %v1060
    %v1062 = vsel %vm365, %v1060, %v1059
    %s1063 = sld [smem:[#allocation7 + $0x14]]
    %v1064 = vstv %s1063
    %v1065 = vmul.f32 %v1064, %v1062
    %v1066 = vmul.f32 %v1064, %v1061
    %v1067 = vadd.f32 %v1031, %v1065
    %v1068 = vadd.f32 %v1032, %v1066
    %s1069 = sld [smem:[#allocation7 + $0x38]]
    %v1070 = vstv %s1069
    %v1071 = vmul.f32 %v1070, %v1062
    %v1072 = vmul.f32 %v1070, %v1061
    %v1073 = vadd.f32 %v1037, %v1071
    %v1074 = vadd.f32 %v1038, %v1072
    %s1075 = sld [smem:[#allocation7 + $0x5c]]
    %v1076 = vstv %s1075
    %v1077 = vmul.f32 %v1076, %v1062
    %v1078 = vmul.f32 %v1076, %v1061
    %v1079 = vadd.f32 %v1043, %v1077
    %v1080 = vadd.f32 %v1044, %v1078
    %s1081 = sld [smem:[#allocation7 + $0x80]]
    %v1082 = vstv %s1081
    %v1083 = vmul.f32 %v1082, %v1062
    %v1084 = vmul.f32 %v1082, %v1061
    %v1085 = vadd.f32 %v1049, %v1083
    %v1086 = vadd.f32 %v1050, %v1084
    %s1087 = sld [smem:[#allocation7 + $0x17]]
    %v1088 = vstv %s1087
    %v1089 = vmul.f32 %v1088, %v1055
    %v1090 = vmul.f32 %v1088, %v1056
    %v1091 = vadd.f32 %v1067, %v1089
    %v1092 = vadd.f32 %v1068, %v1090
    %s1093 = sld [smem:[#allocation7 + $0x3b]]
    %v1094 = vstv %s1093
    %v1095 = vmul.f32 %v1094, %v1055
    %v1096 = vmul.f32 %v1094, %v1056
    %v1097 = vadd.f32 %v1073, %v1095
    %v1098 = vadd.f32 %v1074, %v1096
    %s1099 = sld [smem:[#allocation7 + $0x5f]]
    %v1100 = vstv %s1099
    %v1101 = vmul.f32 %v1100, %v1055
    %v1102 = vmul.f32 %v1100, %v1056
    %v1103 = vadd.f32 %v1079, %v1101
    %v1104 = vadd.f32 %v1080, %v1102
    %s1105 = sld [smem:[#allocation7 + $0x83]]
    %v1106 = vstv %s1105
    %v1107 = vmul.f32 %v1106, %v1055
    %v1108 = vmul.f32 %v1106, %v1056
    %v1109 = vadd.f32 %v1085, %v1107
    %v1110 = vadd.f32 %v1086, %v1108
    %v1111 = vsel %vm200, %v1055, 0.0
    %v1112 = vsel %vm201, %v1056, 0.0
    %v1113 = vrot.slane %v1111, 1
    %v1114 = vrot.slane %v1112, 1
    %v1115 = vsel %vm412, %v1113, %v1114
    %v1116 = vsel %vm412, %v1114, %v1113
    %s1117 = sld [smem:[#allocation7 + $0x1a]]
    %v1118 = vstv %s1117
    %v1119 = vmul.f32 %v1118, %v1115
    %v1120 = vmul.f32 %v1118, %v1116
    %v1121 = vadd.f32 %v1091, %v1119
    %v1122 = vadd.f32 %v1092, %v1120
    %s1123 = sld [smem:[#allocation7 + $0x3e]]
    %v1124 = vstv %s1123
    %v1125 = vmul.f32 %v1124, %v1115
    %v1126 = vmul.f32 %v1124, %v1116
    %v1127 = vadd.f32 %v1097, %v1125
    %v1128 = vadd.f32 %v1098, %v1126
    %s1129 = sld [smem:[#allocation7 + $0x62]]
    %v1130 = vstv %s1129
    %v1131 = vmul.f32 %v1130, %v1115
    %v1132 = vmul.f32 %v1130, %v1116
    %v1133 = vadd.f32 %v1103, %v1131
    %v1134 = vadd.f32 %v1104, %v1132
    %s1135 = sld [smem:[#allocation7 + $0x86]]
    %v1136 = vstv %s1135
    %v1137 = vmul.f32 %v1136, %v1115
    %v1138 = vmul.f32 %v1136, %v1116
    %v1139 = vadd.f32 %v1109, %v1137
    %v1140 = vadd.f32 %v1110, %v1138
    %1141 = vrot.lane.b32.xlu0 %v353, 1
    %v1142 = vpop.permute.xlu0 %1141
    %1143 = vrot.lane.b32.xlu0 %v354, 1
    %v1144 = vpop.permute.xlu0 %1143
    %v1145 = vsel %vm190, %v1142, 0.0
    %v1146 = vsel %vm190, %v1144, 0.0
    %v1147 = vsel %vm198, %v1145, 0.0
    %v1148 = vsel %vm199, %v1146, 0.0
    %v1149 = vrot.slane %v1147, 7
    %v1150 = vrot.slane %v1148, 7
    %v1151 = vsel %vm365, %v1149, %v1150
    %v1152 = vsel %vm365, %v1150, %v1149
    %s1153 = sld [smem:[#allocation7 + $0x1b]]
    %v1154 = vstv %s1153
    %v1155 = vmul.f32 %v1154, %v1152
    %v1156 = vmul.f32 %v1154, %v1151
    %v1157 = vadd.f32 %v1121, %v1155
    %v1158 = vadd.f32 %v1122, %v1156
    %s1159 = sld [smem:[#allocation7 + $0x3f]]
    %v1160 = vstv %s1159
    %v1161 = vmul.f32 %v1160, %v1152
    %v1162 = vmul.f32 %v1160, %v1151
    %v1163 = vadd.f32 %v1127, %v1161
    %v1164 = vadd.f32 %v1128, %v1162
    %s1165 = sld [smem:[#allocation7 + $0x63]]
    %v1166 = vstv %s1165
    %v1167 = vmul.f32 %v1166, %v1152
    %v1168 = vmul.f32 %v1166, %v1151
    %v1169 = vadd.f32 %v1133, %v1167
    %v1170 = vadd.f32 %v1134, %v1168
    %s1171 = sld [smem:[#allocation7 + $0x87]]
    %v1172 = vstv %s1171
    %v1173 = vmul.f32 %v1172, %v1152
    %v1174 = vmul.f32 %v1172, %v1151
    %v1175 = vadd.f32 %v1139, %v1173
    %v1176 = vadd.f32 %v1140, %v1174
    %s1177 = sld [smem:[#allocation7 + $0x1e]]
    %v1178 = vstv %s1177
    %v1179 = vmul.f32 %v1178, %v1145
    %v1180 = vmul.f32 %v1178, %v1146
    %v1181 = vadd.f32 %v1157, %v1179
    %v1182 = vadd.f32 %v1158, %v1180
    %s1183 = sld [smem:[#allocation7 + $0x42]]
    %v1184 = vstv %s1183
    %v1185 = vmul.f32 %v1184, %v1145
    %v1186 = vmul.f32 %v1184, %v1146
    %v1187 = vadd.f32 %v1163, %v1185
    %v1188 = vadd.f32 %v1164, %v1186
    %s1189 = sld [smem:[#allocation7 + $0x66]]
    %v1190 = vstv %s1189
    %v1191 = vmul.f32 %v1190, %v1145
    %v1192 = vmul.f32 %v1190, %v1146
    %v1193 = vadd.f32 %v1169, %v1191
    %v1194 = vadd.f32 %v1170, %v1192
    %s1195 = sld [smem:[#allocation7 + $0x8a]]
    %v1196 = vstv %s1195
    %v1197 = vmul.f32 %v1196, %v1145
    %v1198 = vmul.f32 %v1196, %v1146
    %v1199 = vadd.f32 %v1175, %v1197
    %v1200 = vadd.f32 %v1176, %v1198
    %v1201 = vsel %vm200, %v1145, 0.0
    %v1202 = vsel %vm201, %v1146, 0.0
    %v1203 = vrot.slane %v1201, 1
    %v1204 = vrot.slane %v1202, 1
    %v1205 = vsel %vm412, %v1203, %v1204
    %v1206 = vsel %vm412, %v1204, %v1203
    %s1207 = sld [smem:[#allocation7 + $0x21]]
    %v1208 = vstv %s1207
    %v1209 = vmul.f32 %v1208, %v1205
    %v1210 = vmul.f32 %v1208, %v1206
    %v1211 = vadd.f32 %v1181, %v1209
    %v1212 = vadd.f32 %v1182, %v1210
    %s1213 = sld [smem:[#allocation7 + $0x45]]
    %v1214 = vstv %s1213
    %v1215 = vmul.f32 %v1214, %v1205
    %v1216 = vmul.f32 %v1214, %v1206
    %v1217 = vadd.f32 %v1187, %v1215
    %v1218 = vadd.f32 %v1188, %v1216
    %s1219 = sld [smem:[#allocation7 + $0x69]]
    %v1220 = vstv %s1219
    %v1221 = vmul.f32 %v1220, %v1205
    %v1222 = vmul.f32 %v1220, %v1206
    %v1223 = vadd.f32 %v1193, %v1221
    %v1224 = vadd.f32 %v1194, %v1222
    %s1225 = sld [smem:[#allocation7 + $0x8d]]
    %v1226 = vstv %s1225
    %v1227 = vmul.f32 %v1226, %v1205
    %v1228 = vmul.f32 %v1226, %v1206
    %v1229 = vadd.f32 %v1199, %v1227
    %v1230 = vadd.f32 %v1200, %v1228
    %v1231 = vsel %vm198, %v353, 0.0
    %v1232 = vsel %vm199, %v354, 0.0
    %v1233 = vrot.slane %v1231, 7
    %v1234 = vrot.slane %v1232, 7
    %v1235 = vsel %vm365, %v1233, %v1234
    %v1236 = vsel %vm365, %v1234, %v1233
    %s1237 = sld [smem:[#allocation7 + $0x1c]]
    %v1238 = vstv %s1237
    %v1239 = vmul.f32 %v1238, %v1236
    %v1240 = vmul.f32 %v1238, %v1235
    %v1241 = vadd.f32 %v1211, %v1239
    %v1242 = vadd.f32 %v1212, %v1240
    %s1243 = sld [smem:[#allocation7 + $0x40]]
    %v1244 = vstv %s1243
    %v1245 = vmul.f32 %v1244, %v1236
    %v1246 = vmul.f32 %v1244, %v1235
    %v1247 = vadd.f32 %v1217, %v1245
    %v1248 = vadd.f32 %v1218, %v1246
    %s1249 = sld [smem:[#allocation7 + $0x64]]
    %v1250 = vstv %s1249
    %v1251 = vmul.f32 %v1250, %v1236
    %v1252 = vmul.f32 %v1250, %v1235
    %v1253 = vadd.f32 %v1223, %v1251
    %v1254 = vadd.f32 %v1224, %v1252
    %s1255 = sld [smem:[#allocation7 + $0x88]]
    %v1256 = vstv %s1255
    %v1257 = vmul.f32 %v1256, %v1236
    %v1258 = vmul.f32 %v1256, %v1235
    %v1259 = vadd.f32 %v1229, %v1257
    %v1260 = vadd.f32 %v1230, %v1258
    %s1261 = sld [smem:[#allocation7 + $0x1f]]
    %v1262 = vstv %s1261
    %v1263 = vmul.f32 %v1262, %v353
    %v1264 = vmul.f32 %v1262, %v354
    %v1265 = vadd.f32 %v1241, %v1263
    %v1266 = vadd.f32 %v1242, %v1264
    %s1267 = sld [smem:[#allocation7 + $0x43]]
    %v1268 = vstv %s1267
    %v1269 = vmul.f32 %v1268, %v353
    %v1270 = vmul.f32 %v1268, %v354
    %v1271 = vadd.f32 %v1247, %v1269
    %v1272 = vadd.f32 %v1248, %v1270
    %s1273 = sld [smem:[#allocation7 + $0x67]]
    %v1274 = vstv %s1273
    %v1275 = vmul.f32 %v1274, %v353
    %v1276 = vmul.f32 %v1274, %v354
    %v1277 = vadd.f32 %v1253, %v1275
    %v1278 = vadd.f32 %v1254, %v1276
    %s1279 = sld [smem:[#allocation7 + $0x8b]]
    %v1280 = vstv %s1279
    %v1281 = vmul.f32 %v1280, %v353
    %v1282 = vmul.f32 %v1280, %v354
    %v1283 = vadd.f32 %v1259, %v1281
    %v1284 = vadd.f32 %v1260, %v1282
    %v1285 = vsel %vm200, %v353, 0.0
    %v1286 = vsel %vm201, %v354, 0.0
    %v1287 = vrot.slane %v1285, 1
    %v1288 = vrot.slane %v1286, 1
    %v1289 = vsel %vm412, %v1287, %v1288
    %v1290 = vsel %vm412, %v1288, %v1287
    %s1291 = sld [smem:[#allocation7 + $0x22]]
    %v1292 = vstv %s1291
    %v1293 = vmul.f32 %v1292, %v1289
    %v1294 = vmul.f32 %v1292, %v1290
    %v1295 = vadd.f32 %v1265, %v1293
    %v1296 = vadd.f32 %v1266, %v1294
    %s1297 = sld [smem:[#allocation7 + $0x46]]
    %v1298 = vstv %s1297
    %v1299 = vmul.f32 %v1298, %v1289
    %v1300 = vmul.f32 %v1298, %v1290
    %v1301 = vadd.f32 %v1271, %v1299
    %v1302 = vadd.f32 %v1272, %v1300
    %s1303 = sld [smem:[#allocation7 + $0x6a]]
    %v1304 = vstv %s1303
    %v1305 = vmul.f32 %v1304, %v1289
    %v1306 = vmul.f32 %v1304, %v1290
    %v1307 = vadd.f32 %v1277, %v1305
    %v1308 = vadd.f32 %v1278, %v1306
    %s1309 = sld [smem:[#allocation7 + $0x8e]]
    %v1310 = vstv %s1309
    %v1311 = vmul.f32 %v1310, %v1289
    %v1312 = vmul.f32 %v1310, %v1290
    %v1313 = vadd.f32 %v1283, %v1311
    %v1314 = vadd.f32 %v1284, %v1312
    %1315 = vrot.lane.b32.xlu0 %v353, 127
    %v1316 = vpop.permute.xlu0 %1315
    %1317 = vrot.lane.b32.xlu0 %v354, 127
    %v1318 = vpop.permute.xlu0 %1317
    %v1319 = vsel %vm197, %v1316, 0.0
    %v1320 = vsel %vm197, %v1318, 0.0
    %v1321 = vsel %vm198, %v1319, 0.0
    %v1322 = vsel %vm199, %v1320, 0.0
    %v1323 = vrot.slane %v1321, 7
    %v1324 = vrot.slane %v1322, 7
    %v1325 = vsel %vm365, %v1323, %v1324
    %v1326 = vsel %vm365, %v1324, %v1323
    %s1327 = sld [smem:[#allocation7 + $0x1d]]
    %v1328 = vstv %s1327
    %v1329 = vmul.f32 %v1328, %v1326
    %v1330 = vmul.f32 %v1328, %v1325
    %v1331 = vadd.f32 %v1295, %v1329
    %v1332 = vadd.f32 %v1296, %v1330
    %s1333 = sld [smem:[#allocation7 + $0x41]]
    %v1334 = vstv %s1333
    %v1335 = vmul.f32 %v1334, %v1326
    %v1336 = vmul.f32 %v1334, %v1325
    %v1337 = vadd.f32 %v1301, %v1335
    %v1338 = vadd.f32 %v1302, %v1336
    %s1339 = sld [smem:[#allocation7 + $0x65]]
    %v1340 = vstv %s1339
    %v1341 = vmul.f32 %v1340, %v1326
    %v1342 = vmul.f32 %v1340, %v1325
    %v1343 = vadd.f32 %v1307, %v1341
    %v1344 = vadd.f32 %v1308, %v1342
    %s1345 = sld [smem:[#allocation7 + $0x89]]
    %v1346 = vstv %s1345
    %v1347 = vmul.f32 %v1346, %v1326
    %v1348 = vmul.f32 %v1346, %v1325
    %v1349 = vadd.f32 %v1313, %v1347
    %v1350 = vadd.f32 %v1314, %v1348
    %s1351 = sld [smem:[#allocation7 + $0x20]]
    %v1352 = vstv %s1351
    %v1353 = vmul.f32 %v1352, %v1319
    %v1354 = vmul.f32 %v1352, %v1320
    %v1355 = vadd.f32 %v1331, %v1353
    %v1356 = vadd.f32 %v1332, %v1354
    %s1357 = sld [smem:[#allocation7 + $0x44]]
    %v1358 = vstv %s1357
    %v1359 = vmul.f32 %v1358, %v1319
    %v1360 = vmul.f32 %v1358, %v1320
    %v1361 = vadd.f32 %v1337, %v1359
    %v1362 = vadd.f32 %v1338, %v1360
    %s1363 = sld [smem:[#allocation7 + $0x68]]
    %v1364 = vstv %s1363
    %v1365 = vmul.f32 %v1364, %v1319
    %v1366 = vmul.f32 %v1364, %v1320
    %v1367 = vadd.f32 %v1343, %v1365
    %v1368 = vadd.f32 %v1344, %v1366
    %s1369 = sld [smem:[#allocation7 + $0x8c]]
    %v1370 = vstv %s1369
    %v1371 = vmul.f32 %v1370, %v1319
    %v1372 = vmul.f32 %v1370, %v1320
    %v1373 = vadd.f32 %v1349, %v1371
    %v1374 = vadd.f32 %v1350, %v1372
    %v1375 = vsel %vm200, %v1319, 0.0
    %v1376 = vsel %vm201, %v1320, 0.0
    %v1377 = vrot.slane %v1375, 1
    %v1378 = vrot.slane %v1376, 1
    %v1379 = vsel %vm412, %v1377, %v1378
    %v1380 = vsel %vm412, %v1378, %v1377
    %s1381 = sld [smem:[#allocation7 + $0x23]]
    %v1382 = vstv %s1381
    %v1383 = vmul.f32 %v1382, %v1379
    %v1384 = vmul.f32 %v1382, %v1380
    %v1385 = vadd.f32 %v1355, %v1383
    %v1386 = vadd.f32 %v1356, %v1384
    %s1387 = sld [smem:[#allocation7 + $0x47]]
    %v1388 = vstv %s1387
    %v1389 = vmul.f32 %v1388, %v1379
    %v1390 = vmul.f32 %v1388, %v1380
    %v1391 = vadd.f32 %v1361, %v1389
    %v1392 = vadd.f32 %v1362, %v1390
    %s1393 = sld [smem:[#allocation7 + $0x6b]]
    %v1394 = vstv %s1393
    %v1395 = vmul.f32 %v1394, %v1379
    %v1396 = vmul.f32 %v1394, %v1380
    %v1397 = vadd.f32 %v1367, %v1395
    %v1398 = vadd.f32 %v1368, %v1396
    %s1399 = sld [smem:[#allocation7 + $0x8f]]
    %v1400 = vstv %s1399
    %v1401 = vmul.f32 %v1400, %v1379
    %v1402 = vmul.f32 %v1400, %v1380
    %v1403 = vadd.f32 %v1373, %v1401
    %v1404 = vadd.f32 %v1374, %v1402
    %v1405 = vld [vmem:[%s5] sm:$0xff]
    %v1406 = vld [vmem:[%s5 + $0x8] sm:$0xff]
    %v1407 = vld [vmem:[%s6] sm:$0xff]
    %v1408 = vld [vmem:[%s6 + $0x8] sm:$0xff]
    %v1409 = vadd.f32 %v1385, %v1386
    %v1410 = vrot.slane %v1409, 4
    %v1411 = vadd.f32 %v1409, %v1410
    %v1412 = vrot.slane %v1411, 2
    %v1413 = vadd.f32 %v1411, %v1412
    %v1414 = vrot.slane %v1413, 1
    %v1415 = vadd.f32 %v1413, %v1414
    %v1416 = vmul.f32 %v1415, %v221
    %v1417 = vsub.f32 %v1385, %v1416
    %v1418 = vsub.f32 %v1386, %v1416
    %v1419 = vmul.f32 %v1417, %v1417
    %v1420 = vmul.f32 %v1418, %v1418
    %v1421 = vadd.f32 %v1419, %v1420
    %v1422 = vrot.slane %v1421, 4
    %v1423 = vadd.f32 %v1421, %v1422
    %v1424 = vrot.slane %v1423, 2
    %v1425 = vadd.f32 %v1423, %v1424
    %v1426 = vrot.slane %v1425, 1
    %v1427 = vadd.f32 %v1425, %v1426
    %v1428 = vmul.f32 %v1427, %v221
    %v1429 = vadd.f32 %v1428, 1e-05
    %v1430 = vrsqrt.pop %v1429
    %v1431 = vmul.f32 %v1417, %v1430
    %v1432 = vmul.f32 %v1418, %v1430
    %1434 = vset.pattern.permute.xlu0 0
    %1435 = vperm.xlu0 %1434, %v1405
    %v1436 = vpop.permute.xlu0 %1435
    %1439 = vset.pattern.permute.xlu0 0
    %1440 = vperm.xlu0 %1439, %v1406
    %v1441 = vpop.permute.xlu0 %1440
    %v1443 = vmul.f32 %v1431, %v1436
    %v1444 = vmul.f32 %v1432, %v1441
    %1446 = vset.pattern.permute.xlu0 0
    %1447 = vperm.xlu0 %1446, %v1407
    %v1448 = vpop.permute.xlu0 %1447
    %1451 = vset.pattern.permute.xlu0 0
    %1452 = vperm.xlu0 %1451, %v1408
    %v1453 = vpop.permute.xlu0 %1452
    %v1455 = vadd.f32 %v1443, %v1448
    %v1456 = vadd.f32 %v1444, %v1453
    %v1457 = vmax.f32 %v1455, 0.0
    %v1458 = vmax.f32 %v1456, 0.0
    %v1459 = vadd.f32 %v1391, %v1392
    %v1460 = vrot.slane %v1459, 4
    %v1461 = vadd.f32 %v1459, %v1460
    %v1462 = vrot.slane %v1461, 2
    %v1463 = vadd.f32 %v1461, %v1462
    %v1464 = vrot.slane %v1463, 1
    %v1465 = vadd.f32 %v1463, %v1464
    %v1466 = vmul.f32 %v1465, %v221
    %v1467 = vsub.f32 %v1391, %v1466
    %v1468 = vsub.f32 %v1392, %v1466
    %v1469 = vmul.f32 %v1467, %v1467
    %v1470 = vmul.f32 %v1468, %v1468
    %v1471 = vadd.f32 %v1469, %v1470
    %v1472 = vrot.slane %v1471, 4
    %v1473 = vadd.f32 %v1471, %v1472
    %v1474 = vrot.slane %v1473, 2
    %v1475 = vadd.f32 %v1473, %v1474
    %v1476 = vrot.slane %v1475, 1
    %v1477 = vadd.f32 %v1475, %v1476
    %v1478 = vmul.f32 %v1477, %v221
    %v1479 = vadd.f32 %v1478, 1e-05
    %v1480 = vrsqrt.pop %v1479
    %v1481 = vmul.f32 %v1467, %v1480
    %v1482 = vmul.f32 %v1468, %v1480
    %v1483 = vmul.f32 %v1481, %v1436
    %v1484 = vmul.f32 %v1482, %v1441
    %v1485 = vadd.f32 %v1483, %v1448
    %v1486 = vadd.f32 %v1484, %v1453
    %v1487 = vmax.f32 %v1485, 0.0
    %v1488 = vmax.f32 %v1486, 0.0
    %v1489 = vadd.f32 %v1397, %v1398
    %v1490 = vrot.slane %v1489, 4
    %v1491 = vadd.f32 %v1489, %v1490
    %v1492 = vrot.slane %v1491, 2
    %v1493 = vadd.f32 %v1491, %v1492
    %v1494 = vrot.slane %v1493, 1
    %v1495 = vadd.f32 %v1493, %v1494
    %v1496 = vmul.f32 %v1495, %v221
    %v1497 = vsub.f32 %v1397, %v1496
    %v1498 = vsub.f32 %v1398, %v1496
    %v1499 = vmul.f32 %v1497, %v1497
    %v1500 = vmul.f32 %v1498, %v1498
    %v1501 = vadd.f32 %v1499, %v1500
    %v1502 = vrot.slane %v1501, 4
    %v1503 = vadd.f32 %v1501, %v1502
    %v1504 = vrot.slane %v1503, 2
    %v1505 = vadd.f32 %v1503, %v1504
    %v1506 = vrot.slane %v1505, 1
    %v1507 = vadd.f32 %v1505, %v1506
    %v1508 = vmul.f32 %v1507, %v221
    %v1509 = vadd.f32 %v1508, 1e-05
    %v1510 = vrsqrt.pop %v1509
    %v1511 = vmul.f32 %v1497, %v1510
    %v1512 = vmul.f32 %v1498, %v1510
    %v1513 = vmul.f32 %v1511, %v1436
    %v1514 = vmul.f32 %v1512, %v1441
    %v1515 = vadd.f32 %v1513, %v1448
    %v1516 = vadd.f32 %v1514, %v1453
    %v1517 = vmax.f32 %v1515, 0.0
    %v1518 = vmax.f32 %v1516, 0.0
    %v1519 = vadd.f32 %v1403, %v1404
    %v1520 = vrot.slane %v1519, 4
    %v1521 = vadd.f32 %v1519, %v1520
    %v1522 = vrot.slane %v1521, 2
    %v1523 = vadd.f32 %v1521, %v1522
    %v1524 = vrot.slane %v1523, 1
    %v1525 = vadd.f32 %v1523, %v1524
    %v1526 = vmul.f32 %v1525, %v221
    %v1527 = vsub.f32 %v1403, %v1526
    %v1528 = vsub.f32 %v1404, %v1526
    %v1529 = vmul.f32 %v1527, %v1527
    %v1530 = vmul.f32 %v1528, %v1528
    %v1531 = vadd.f32 %v1529, %v1530
    %v1532 = vrot.slane %v1531, 4
    %v1533 = vadd.f32 %v1531, %v1532
    %v1534 = vrot.slane %v1533, 2
    %v1535 = vadd.f32 %v1533, %v1534
    %v1536 = vrot.slane %v1535, 1
    %v1537 = vadd.f32 %v1535, %v1536
    %v1538 = vmul.f32 %v1537, %v221
    %v1539 = vadd.f32 %v1538, 1e-05
    %v1540 = vrsqrt.pop %v1539
    %v1541 = vmul.f32 %v1527, %v1540
    %v1542 = vmul.f32 %v1528, %v1540
    %v1543 = vmul.f32 %v1541, %v1436
    %v1544 = vmul.f32 %v1542, %v1441
    %v1545 = vadd.f32 %v1543, %v1448
    %v1546 = vadd.f32 %v1544, %v1453
    %v1547 = vmax.f32 %v1545, 0.0
    %v1548 = vmax.f32 %v1546, 0.0
    %1549 = vrot.lane.b32.xlu0 %v1457, 1
    %v1550 = vpop.permute.xlu0 %1549
    %1551 = vrot.lane.b32.xlu0 %v1458, 1
    %v1552 = vpop.permute.xlu0 %1551
    %v1553 = vsel %vm190, %v1550, 0.0
    %v1554 = vsel %vm190, %v1552, 0.0
    %v1555 = vsel %vm198, %v1553, 0.0
    %v1556 = vsel %vm199, %v1554, 0.0
    %v1557 = vrot.slane %v1555, 7
    %v1558 = vrot.slane %v1556, 7
    %v1559 = vsel %vm365, %v1557, %v1558
    %v1560 = vsel %vm365, %v1558, %v1557
    %s1561 = sld [smem:[#allocation10]]
    %v1562 = vstv %s1561
    %v1563 = vmul.f32 %v1562, %v1560
    %v1564 = vmul.f32 %v1562, %v1559
    %s1565 = sld [smem:[#allocation10 + $0x24]]
    %v1566 = vstv %s1565
    %v1567 = vmul.f32 %v1566, %v1560
    %v1568 = vmul.f32 %v1566, %v1559
    %s1569 = sld [smem:[#allocation10 + $0x48]]
    %v1570 = vstv %s1569
    %v1571 = vmul.f32 %v1570, %v1560
    %v1572 = vmul.f32 %v1570, %v1559
    %s1573 = sld [smem:[#allocation10 + $0x6c]]
    %v1574 = vstv %s1573
    %v1575 = vmul.f32 %v1574, %v1560
    %v1576 = vmul.f32 %v1574, %v1559
    %s1577 = sld [smem:[#allocation10 + $0x3]]
    %v1578 = vstv %s1577
    %v1579 = vmul.f32 %v1578, %v1553
    %v1580 = vmul.f32 %v1578, %v1554
    %v1581 = vadd.f32 %v1563, %v1579
    %v1582 = vadd.f32 %v1564, %v1580
    %s1583 = sld [smem:[#allocation10 + $0x27]]
    %v1584 = vstv %s1583
    %v1585 = vmul.f32 %v1584, %v1553
    %v1586 = vmul.f32 %v1584, %v1554
    %v1587 = vadd.f32 %v1567, %v1585
    %v1588 = vadd.f32 %v1568, %v1586
    %s1589 = sld [smem:[#allocation10 + $0x4b]]
    %v1590 = vstv %s1589
    %v1591 = vmul.f32 %v1590, %v1553
    %v1592 = vmul.f32 %v1590, %v1554
    %v1593 = vadd.f32 %v1571, %v1591
    %v1594 = vadd.f32 %v1572, %v1592
    %s1595 = sld [smem:[#allocation10 + $0x6f]]
    %v1596 = vstv %s1595
    %v1597 = vmul.f32 %v1596, %v1553
    %v1598 = vmul.f32 %v1596, %v1554
    %v1599 = vadd.f32 %v1575, %v1597
    %v1600 = vadd.f32 %v1576, %v1598
    %v1601 = vsel %vm200, %v1553, 0.0
    %v1602 = vsel %vm201, %v1554, 0.0
    %v1603 = vrot.slane %v1601, 1
    %v1604 = vrot.slane %v1602, 1
    %v1605 = vsel %vm412, %v1603, %v1604
    %v1606 = vsel %vm412, %v1604, %v1603
    %s1607 = sld [smem:[#allocation10 + $0x6]]
    %v1608 = vstv %s1607
    %v1609 = vmul.f32 %v1608, %v1605
    %v1610 = vmul.f32 %v1608, %v1606
    %v1611 = vadd.f32 %v1581, %v1609
    %v1612 = vadd.f32 %v1582, %v1610
    %s1613 = sld [smem:[#allocation10 + $0x2a]]
    %v1614 = vstv %s1613
    %v1615 = vmul.f32 %v1614, %v1605
    %v1616 = vmul.f32 %v1614, %v1606
    %v1617 = vadd.f32 %v1587, %v1615
    %v1618 = vadd.f32 %v1588, %v1616
    %s1619 = sld [smem:[#allocation10 + $0x4e]]
    %v1620 = vstv %s1619
    %v1621 = vmul.f32 %v1620, %v1605
    %v1622 = vmul.f32 %v1620, %v1606
    %v1623 = vadd.f32 %v1593, %v1621
    %v1624 = vadd.f32 %v1594, %v1622
    %s1625 = sld [smem:[#allocation10 + $0x72]]
    %v1626 = vstv %s1625
    %v1627 = vmul.f32 %v1626, %v1605
    %v1628 = vmul.f32 %v1626, %v1606
    %v1629 = vadd.f32 %v1599, %v1627
    %v1630 = vadd.f32 %v1600, %v1628
    %v1631 = vsel %vm198, %v1457, 0.0
    %v1632 = vsel %vm199, %v1458, 0.0
    %v1633 = vrot.slane %v1631, 7
    %v1634 = vrot.slane %v1632, 7
    %v1635 = vsel %vm365, %v1633, %v1634
    %v1636 = vsel %vm365, %v1634, %v1633
    %s1637 = sld [smem:[#allocation10 + $0x1]]
    %v1638 = vstv %s1637
    %v1639 = vmul.f32 %v1638, %v1636
    %v1640 = vmul.f32 %v1638, %v1635
    %v1641 = vadd.f32 %v1611, %v1639
    %v1642 = vadd.f32 %v1612, %v1640
    %s1643 = sld [smem:[#allocation10 + $0x25]]
    %v1644 = vstv %s1643
    %v1645 = vmul.f32 %v1644, %v1636
    %v1646 = vmul.f32 %v1644, %v1635
    %v1647 = vadd.f32 %v1617, %v1645
    %v1648 = vadd.f32 %v1618, %v1646
    %s1649 = sld [smem:[#allocation10 + $0x49]]
    %v1650 = vstv %s1649
    %v1651 = vmul.f32 %v1650, %v1636
    %v1652 = vmul.f32 %v1650, %v1635
    %v1653 = vadd.f32 %v1623, %v1651
    %v1654 = vadd.f32 %v1624, %v1652
    %s1655 = sld [smem:[#allocation10 + $0x6d]]
    %v1656 = vstv %s1655
    %v1657 = vmul.f32 %v1656, %v1636
    %v1658 = vmul.f32 %v1656, %v1635
    %v1659 = vadd.f32 %v1629, %v1657
    %v1660 = vadd.f32 %v1630, %v1658
    %s1661 = sld [smem:[#allocation10 + $0x4]]
    %v1662 = vstv %s1661
    %v1663 = vmul.f32 %v1662, %v1457
    %v1664 = vmul.f32 %v1662, %v1458
    %v1665 = vadd.f32 %v1641, %v1663
    %v1666 = vadd.f32 %v1642, %v1664
    %s1667 = sld [smem:[#allocation10 + $0x28]]
    %v1668 = vstv %s1667
    %v1669 = vmul.f32 %v1668, %v1457
    %v1670 = vmul.f32 %v1668, %v1458
    %v1671 = vadd.f32 %v1647, %v1669
    %v1672 = vadd.f32 %v1648, %v1670
    %s1673 = sld [smem:[#allocation10 + $0x4c]]
    %v1674 = vstv %s1673
    %v1675 = vmul.f32 %v1674, %v1457
    %v1676 = vmul.f32 %v1674, %v1458
    %v1677 = vadd.f32 %v1653, %v1675
    %v1678 = vadd.f32 %v1654, %v1676
    %s1679 = sld [smem:[#allocation10 + $0x70]]
    %v1680 = vstv %s1679
    %v1681 = vmul.f32 %v1680, %v1457
    %v1682 = vmul.f32 %v1680, %v1458
    %v1683 = vadd.f32 %v1659, %v1681
    %v1684 = vadd.f32 %v1660, %v1682
    %v1685 = vsel %vm200, %v1457, 0.0
    %v1686 = vsel %vm201, %v1458, 0.0
    %v1687 = vrot.slane %v1685, 1
    %v1688 = vrot.slane %v1686, 1
    %v1689 = vsel %vm412, %v1687, %v1688
    %v1690 = vsel %vm412, %v1688, %v1687
    %s1691 = sld [smem:[#allocation10 + $0x7]]
    %v1692 = vstv %s1691
    %v1693 = vmul.f32 %v1692, %v1689
    %v1694 = vmul.f32 %v1692, %v1690
    %v1695 = vadd.f32 %v1665, %v1693
    %v1696 = vadd.f32 %v1666, %v1694
    %s1697 = sld [smem:[#allocation10 + $0x2b]]
    %v1698 = vstv %s1697
    %v1699 = vmul.f32 %v1698, %v1689
    %v1700 = vmul.f32 %v1698, %v1690
    %v1701 = vadd.f32 %v1671, %v1699
    %v1702 = vadd.f32 %v1672, %v1700
    %s1703 = sld [smem:[#allocation10 + $0x4f]]
    %v1704 = vstv %s1703
    %v1705 = vmul.f32 %v1704, %v1689
    %v1706 = vmul.f32 %v1704, %v1690
    %v1707 = vadd.f32 %v1677, %v1705
    %v1708 = vadd.f32 %v1678, %v1706
    %s1709 = sld [smem:[#allocation10 + $0x73]]
    %v1710 = vstv %s1709
    %v1711 = vmul.f32 %v1710, %v1689
    %v1712 = vmul.f32 %v1710, %v1690
    %v1713 = vadd.f32 %v1683, %v1711
    %v1714 = vadd.f32 %v1684, %v1712
    %1715 = vrot.lane.b32.xlu0 %v1457, 127
    %v1716 = vpop.permute.xlu0 %1715
    %1717 = vrot.lane.b32.xlu0 %v1458, 127
    %v1718 = vpop.permute.xlu0 %1717
    %v1719 = vsel %vm197, %v1716, 0.0
    %v1720 = vsel %vm197, %v1718, 0.0
    %v1721 = vsel %vm198, %v1719, 0.0
    %v1722 = vsel %vm199, %v1720, 0.0
    %v1723 = vrot.slane %v1721, 7
    %v1724 = vrot.slane %v1722, 7
    %v1725 = vsel %vm365, %v1723, %v1724
    %v1726 = vsel %vm365, %v1724, %v1723
    %s1727 = sld [smem:[#allocation10 + $0x2]]
    %v1728 = vstv %s1727
    %v1729 = vmul.f32 %v1728, %v1726
    %v1730 = vmul.f32 %v1728, %v1725
    %v1731 = vadd.f32 %v1695, %v1729
    %v1732 = vadd.f32 %v1696, %v1730
    %s1733 = sld [smem:[#allocation10 + $0x26]]
    %v1734 = vstv %s1733
    %v1735 = vmul.f32 %v1734, %v1726
    %v1736 = vmul.f32 %v1734, %v1725
    %v1737 = vadd.f32 %v1701, %v1735
    %v1738 = vadd.f32 %v1702, %v1736
    %s1739 = sld [smem:[#allocation10 + $0x4a]]
    %v1740 = vstv %s1739
    %v1741 = vmul.f32 %v1740, %v1726
    %v1742 = vmul.f32 %v1740, %v1725
    %v1743 = vadd.f32 %v1707, %v1741
    %v1744 = vadd.f32 %v1708, %v1742
    %s1745 = sld [smem:[#allocation10 + $0x6e]]
    %v1746 = vstv %s1745
    %v1747 = vmul.f32 %v1746, %v1726
    %v1748 = vmul.f32 %v1746, %v1725
    %v1749 = vadd.f32 %v1713, %v1747
    %v1750 = vadd.f32 %v1714, %v1748
    %s1751 = sld [smem:[#allocation10 + $0x5]]
    %v1752 = vstv %s1751
    %v1753 = vmul.f32 %v1752, %v1719
    %v1754 = vmul.f32 %v1752, %v1720
    %v1755 = vadd.f32 %v1731, %v1753
    %v1756 = vadd.f32 %v1732, %v1754
    %s1757 = sld [smem:[#allocation10 + $0x29]]
    %v1758 = vstv %s1757
    %v1759 = vmul.f32 %v1758, %v1719
    %v1760 = vmul.f32 %v1758, %v1720
    %v1761 = vadd.f32 %v1737, %v1759
    %v1762 = vadd.f32 %v1738, %v1760
    %s1763 = sld [smem:[#allocation10 + $0x4d]]
    %v1764 = vstv %s1763
    %v1765 = vmul.f32 %v1764, %v1719
    %v1766 = vmul.f32 %v1764, %v1720
    %v1767 = vadd.f32 %v1743, %v1765
    %v1768 = vadd.f32 %v1744, %v1766
    %s1769 = sld [smem:[#allocation10 + $0x71]]
    %v1770 = vstv %s1769
    %v1771 = vmul.f32 %v1770, %v1719
    %v1772 = vmul.f32 %v1770, %v1720
    %v1773 = vadd.f32 %v1749, %v1771
    %v1774 = vadd.f32 %v1750, %v1772
    %v1775 = vsel %vm200, %v1719, 0.0
    %v1776 = vsel %vm201, %v1720, 0.0
    %v1777 = vrot.slane %v1775, 1
    %v1778 = vrot.slane %v1776, 1
    %v1779 = vsel %vm412, %v1777, %v1778
    %v1780 = vsel %vm412, %v1778, %v1777
    %s1781 = sld [smem:[#allocation10 + $0x8]]
    %v1782 = vstv %s1781
    %v1783 = vmul.f32 %v1782, %v1779
    %v1784 = vmul.f32 %v1782, %v1780
    %v1785 = vadd.f32 %v1755, %v1783
    %v1786 = vadd.f32 %v1756, %v1784
    %s1787 = sld [smem:[#allocation10 + $0x2c]]
    %v1788 = vstv %s1787
    %v1789 = vmul.f32 %v1788, %v1779
    %v1790 = vmul.f32 %v1788, %v1780
    %v1791 = vadd.f32 %v1761, %v1789
    %v1792 = vadd.f32 %v1762, %v1790
    %s1793 = sld [smem:[#allocation10 + $0x50]]
    %v1794 = vstv %s1793
    %v1795 = vmul.f32 %v1794, %v1779
    %v1796 = vmul.f32 %v1794, %v1780
    %v1797 = vadd.f32 %v1767, %v1795
    %v1798 = vadd.f32 %v1768, %v1796
    %s1799 = sld [smem:[#allocation10 + $0x74]]
    %v1800 = vstv %s1799
    %v1801 = vmul.f32 %v1800, %v1779
    %v1802 = vmul.f32 %v1800, %v1780
    %v1803 = vadd.f32 %v1773, %v1801
    %v1804 = vadd.f32 %v1774, %v1802
    %1805 = vrot.lane.b32.xlu0 %v1487, 1
    %v1806 = vpop.permute.xlu0 %1805
    %1807 = vrot.lane.b32.xlu0 %v1488, 1
    %v1808 = vpop.permute.xlu0 %1807
    %v1809 = vsel %vm190, %v1806, 0.0
    %v1810 = vsel %vm190, %v1808, 0.0
    %v1811 = vsel %vm198, %v1809, 0.0
    %v1812 = vsel %vm199, %v1810, 0.0
    %v1813 = vrot.slane %v1811, 7
    %v1814 = vrot.slane %v1812, 7
    %v1815 = vsel %vm365, %v1813, %v1814
    %v1816 = vsel %vm365, %v1814, %v1813
    %s1817 = sld [smem:[#allocation10 + $0x9]]
    %v1818 = vstv %s1817
    %v1819 = vmul.f32 %v1818, %v1816
    %v1820 = vmul.f32 %v1818, %v1815
    %v1821 = vadd.f32 %v1785, %v1819
    %v1822 = vadd.f32 %v1786, %v1820
    %s1823 = sld [smem:[#allocation10 + $0x2d]]
    %v1824 = vstv %s1823
    %v1825 = vmul.f32 %v1824, %v1816
    %v1826 = vmul.f32 %v1824, %v1815
    %v1827 = vadd.f32 %v1791, %v1825
    %v1828 = vadd.f32 %v1792, %v1826
    %s1829 = sld [smem:[#allocation10 + $0x51]]
    %v1830 = vstv %s1829
    %v1831 = vmul.f32 %v1830, %v1816
    %v1832 = vmul.f32 %v1830, %v1815
    %v1833 = vadd.f32 %v1797, %v1831
    %v1834 = vadd.f32 %v1798, %v1832
    %s1835 = sld [smem:[#allocation10 + $0x75]]
    %v1836 = vstv %s1835
    %v1837 = vmul.f32 %v1836, %v1816
    %v1838 = vmul.f32 %v1836, %v1815
    %v1839 = vadd.f32 %v1803, %v1837
    %v1840 = vadd.f32 %v1804, %v1838
    %s1841 = sld [smem:[#allocation10 + $0xc]]
    %v1842 = vstv %s1841
    %v1843 = vmul.f32 %v1842, %v1809
    %v1844 = vmul.f32 %v1842, %v1810
    %v1845 = vadd.f32 %v1821, %v1843
    %v1846 = vadd.f32 %v1822, %v1844
    %s1847 = sld [smem:[#allocation10 + $0x30]]
    %v1848 = vstv %s1847
    %v1849 = vmul.f32 %v1848, %v1809
    %v1850 = vmul.f32 %v1848, %v1810
    %v1851 = vadd.f32 %v1827, %v1849
    %v1852 = vadd.f32 %v1828, %v1850
    %s1853 = sld [smem:[#allocation10 + $0x54]]
    %v1854 = vstv %s1853
    %v1855 = vmul.f32 %v1854, %v1809
    %v1856 = vmul.f32 %v1854, %v1810
    %v1857 = vadd.f32 %v1833, %v1855
    %v1858 = vadd.f32 %v1834, %v1856
    %s1859 = sld [smem:[#allocation10 + $0x78]]
    %v1860 = vstv %s1859
    %v1861 = vmul.f32 %v1860, %v1809
    %v1862 = vmul.f32 %v1860, %v1810
    %v1863 = vadd.f32 %v1839, %v1861
    %v1864 = vadd.f32 %v1840, %v1862
    %v1865 = vsel %vm200, %v1809, 0.0
    %v1866 = vsel %vm201, %v1810, 0.0
    %v1867 = vrot.slane %v1865, 1
    %v1868 = vrot.slane %v1866, 1
    %v1869 = vsel %vm412, %v1867, %v1868
    %v1870 = vsel %vm412, %v1868, %v1867
    %s1871 = sld [smem:[#allocation10 + $0xf]]
    %v1872 = vstv %s1871
    %v1873 = vmul.f32 %v1872, %v1869
    %v1874 = vmul.f32 %v1872, %v1870
    %v1875 = vadd.f32 %v1845, %v1873
    %v1876 = vadd.f32 %v1846, %v1874
    %s1877 = sld [smem:[#allocation10 + $0x33]]
    %v1878 = vstv %s1877
    %v1879 = vmul.f32 %v1878, %v1869
    %v1880 = vmul.f32 %v1878, %v1870
    %v1881 = vadd.f32 %v1851, %v1879
    %v1882 = vadd.f32 %v1852, %v1880
    %s1883 = sld [smem:[#allocation10 + $0x57]]
    %v1884 = vstv %s1883
    %v1885 = vmul.f32 %v1884, %v1869
    %v1886 = vmul.f32 %v1884, %v1870
    %v1887 = vadd.f32 %v1857, %v1885
    %v1888 = vadd.f32 %v1858, %v1886
    %s1889 = sld [smem:[#allocation10 + $0x7b]]
    %v1890 = vstv %s1889
    %v1891 = vmul.f32 %v1890, %v1869
    %v1892 = vmul.f32 %v1890, %v1870
    %v1893 = vadd.f32 %v1863, %v1891
    %v1894 = vadd.f32 %v1864, %v1892
    %v1895 = vsel %vm198, %v1487, 0.0
    %v1896 = vsel %vm199, %v1488, 0.0
    %v1897 = vrot.slane %v1895, 7
    %v1898 = vrot.slane %v1896, 7
    %v1899 = vsel %vm365, %v1897, %v1898
    %v1900 = vsel %vm365, %v1898, %v1897
    %s1901 = sld [smem:[#allocation10 + $0xa]]
    %v1902 = vstv %s1901
    %v1903 = vmul.f32 %v1902, %v1900
    %v1904 = vmul.f32 %v1902, %v1899
    %v1905 = vadd.f32 %v1875, %v1903
    %v1906 = vadd.f32 %v1876, %v1904
    %s1907 = sld [smem:[#allocation10 + $0x2e]]
    %v1908 = vstv %s1907
    %v1909 = vmul.f32 %v1908, %v1900
    %v1910 = vmul.f32 %v1908, %v1899
    %v1911 = vadd.f32 %v1881, %v1909
    %v1912 = vadd.f32 %v1882, %v1910
    %s1913 = sld [smem:[#allocation10 + $0x52]]
    %v1914 = vstv %s1913
    %v1915 = vmul.f32 %v1914, %v1900
    %v1916 = vmul.f32 %v1914, %v1899
    %v1917 = vadd.f32 %v1887, %v1915
    %v1918 = vadd.f32 %v1888, %v1916
    %s1919 = sld [smem:[#allocation10 + $0x76]]
    %v1920 = vstv %s1919
    %v1921 = vmul.f32 %v1920, %v1900
    %v1922 = vmul.f32 %v1920, %v1899
    %v1923 = vadd.f32 %v1893, %v1921
    %v1924 = vadd.f32 %v1894, %v1922
    %s1925 = sld [smem:[#allocation10 + $0xd]]
    %v1926 = vstv %s1925
    %v1927 = vmul.f32 %v1926, %v1487
    %v1928 = vmul.f32 %v1926, %v1488
    %v1929 = vadd.f32 %v1905, %v1927
    %v1930 = vadd.f32 %v1906, %v1928
    %s1931 = sld [smem:[#allocation10 + $0x31]]
    %v1932 = vstv %s1931
    %v1933 = vmul.f32 %v1932, %v1487
    %v1934 = vmul.f32 %v1932, %v1488
    %v1935 = vadd.f32 %v1911, %v1933
    %v1936 = vadd.f32 %v1912, %v1934
    %s1937 = sld [smem:[#allocation10 + $0x55]]
    %v1938 = vstv %s1937
    %v1939 = vmul.f32 %v1938, %v1487
    %v1940 = vmul.f32 %v1938, %v1488
    %v1941 = vadd.f32 %v1917, %v1939
    %v1942 = vadd.f32 %v1918, %v1940
    %s1943 = sld [smem:[#allocation10 + $0x79]]
    %v1944 = vstv %s1943
    %v1945 = vmul.f32 %v1944, %v1487
    %v1946 = vmul.f32 %v1944, %v1488
    %v1947 = vadd.f32 %v1923, %v1945
    %v1948 = vadd.f32 %v1924, %v1946
    %v1949 = vsel %vm200, %v1487, 0.0
    %v1950 = vsel %vm201, %v1488, 0.0
    %v1951 = vrot.slane %v1949, 1
    %v1952 = vrot.slane %v1950, 1
    %v1953 = vsel %vm412, %v1951, %v1952
    %v1954 = vsel %vm412, %v1952, %v1951
    %s1955 = sld [smem:[#allocation10 + $0x10]]
    %v1956 = vstv %s1955
    %v1957 = vmul.f32 %v1956, %v1953
    %v1958 = vmul.f32 %v1956, %v1954
    %v1959 = vadd.f32 %v1929, %v1957
    %v1960 = vadd.f32 %v1930, %v1958
    %s1961 = sld [smem:[#allocation10 + $0x34]]
    %v1962 = vstv %s1961
    %v1963 = vmul.f32 %v1962, %v1953
    %v1964 = vmul.f32 %v1962, %v1954
    %v1965 = vadd.f32 %v1935, %v1963
    %v1966 = vadd.f32 %v1936, %v1964
    %s1967 = sld [smem:[#allocation10 + $0x58]]
    %v1968 = vstv %s1967
    %v1969 = vmul.f32 %v1968, %v1953
    %v1970 = vmul.f32 %v1968, %v1954
    %v1971 = vadd.f32 %v1941, %v1969
    %v1972 = vadd.f32 %v1942, %v1970
    %s1973 = sld [smem:[#allocation10 + $0x7c]]
    %v1974 = vstv %s1973
    %v1975 = vmul.f32 %v1974, %v1953
    %v1976 = vmul.f32 %v1974, %v1954
    %v1977 = vadd.f32 %v1947, %v1975
    %v1978 = vadd.f32 %v1948, %v1976
    %1979 = vrot.lane.b32.xlu0 %v1487, 127
    %v1980 = vpop.permute.xlu0 %1979
    %1981 = vrot.lane.b32.xlu0 %v1488, 127
    %v1982 = vpop.permute.xlu0 %1981
    %v1983 = vsel %vm197, %v1980, 0.0
    %v1984 = vsel %vm197, %v1982, 0.0
    %v1985 = vsel %vm198, %v1983, 0.0
    %v1986 = vsel %vm199, %v1984, 0.0
    %v1987 = vrot.slane %v1985, 7
    %v1988 = vrot.slane %v1986, 7
    %v1989 = vsel %vm365, %v1987, %v1988
    %v1990 = vsel %vm365, %v1988, %v1987
    %s1991 = sld [smem:[#allocation10 + $0xb]]
    %v1992 = vstv %s1991
    %v1993 = vmul.f32 %v1992, %v1990
    %v1994 = vmul.f32 %v1992, %v1989
    %v1995 = vadd.f32 %v1959, %v1993
    %v1996 = vadd.f32 %v1960, %v1994
    %s1997 = sld [smem:[#allocation10 + $0x2f]]
    %v1998 = vstv %s1997
    %v1999 = vmul.f32 %v1998, %v1990
    %v2000 = vmul.f32 %v1998, %v1989
    %v2001 = vadd.f32 %v1965, %v1999
    %v2002 = vadd.f32 %v1966, %v2000
    %s2003 = sld [smem:[#allocation10 + $0x53]]
    %v2004 = vstv %s2003
    %v2005 = vmul.f32 %v2004, %v1990
    %v2006 = vmul.f32 %v2004, %v1989
    %v2007 = vadd.f32 %v1971, %v2005
    %v2008 = vadd.f32 %v1972, %v2006
    %s2009 = sld [smem:[#allocation10 + $0x77]]
    %v2010 = vstv %s2009
    %v2011 = vmul.f32 %v2010, %v1990
    %v2012 = vmul.f32 %v2010, %v1989
    %v2013 = vadd.f32 %v1977, %v2011
    %v2014 = vadd.f32 %v1978, %v2012
    %s2015 = sld [smem:[#allocation10 + $0xe]]
    %v2016 = vstv %s2015
    %v2017 = vmul.f32 %v2016, %v1983
    %v2018 = vmul.f32 %v2016, %v1984
    %v2019 = vadd.f32 %v1995, %v2017
    %v2020 = vadd.f32 %v1996, %v2018
    %s2021 = sld [smem:[#allocation10 + $0x32]]
    %v2022 = vstv %s2021
    %v2023 = vmul.f32 %v2022, %v1983
    %v2024 = vmul.f32 %v2022, %v1984
    %v2025 = vadd.f32 %v2001, %v2023
    %v2026 = vadd.f32 %v2002, %v2024
    %s2027 = sld [smem:[#allocation10 + $0x56]]
    %v2028 = vstv %s2027
    %v2029 = vmul.f32 %v2028, %v1983
    %v2030 = vmul.f32 %v2028, %v1984
    %v2031 = vadd.f32 %v2007, %v2029
    %v2032 = vadd.f32 %v2008, %v2030
    %s2033 = sld [smem:[#allocation10 + $0x7a]]
    %v2034 = vstv %s2033
    %v2035 = vmul.f32 %v2034, %v1983
    %v2036 = vmul.f32 %v2034, %v1984
    %v2037 = vadd.f32 %v2013, %v2035
    %v2038 = vadd.f32 %v2014, %v2036
    %v2039 = vsel %vm200, %v1983, 0.0
    %v2040 = vsel %vm201, %v1984, 0.0
    %v2041 = vrot.slane %v2039, 1
    %v2042 = vrot.slane %v2040, 1
    %v2043 = vsel %vm412, %v2041, %v2042
    %v2044 = vsel %vm412, %v2042, %v2041
    %s2045 = sld [smem:[#allocation10 + $0x11]]
    %v2046 = vstv %s2045
    %v2047 = vmul.f32 %v2046, %v2043
    %v2048 = vmul.f32 %v2046, %v2044
    %v2049 = vadd.f32 %v2019, %v2047
    %v2050 = vadd.f32 %v2020, %v2048
    %s2051 = sld [smem:[#allocation10 + $0x35]]
    %v2052 = vstv %s2051
    %v2053 = vmul.f32 %v2052, %v2043
    %v2054 = vmul.f32 %v2052, %v2044
    %v2055 = vadd.f32 %v2025, %v2053
    %v2056 = vadd.f32 %v2026, %v2054
    %s2057 = sld [smem:[#allocation10 + $0x59]]
    %v2058 = vstv %s2057
    %v2059 = vmul.f32 %v2058, %v2043
    %v2060 = vmul.f32 %v2058, %v2044
    %v2061 = vadd.f32 %v2031, %v2059
    %v2062 = vadd.f32 %v2032, %v2060
    %s2063 = sld [smem:[#allocation10 + $0x7d]]
    %v2064 = vstv %s2063
    %v2065 = vmul.f32 %v2064, %v2043
    %v2066 = vmul.f32 %v2064, %v2044
    %v2067 = vadd.f32 %v2037, %v2065
    %v2068 = vadd.f32 %v2038, %v2066
    %2069 = vrot.lane.b32.xlu0 %v1517, 1
    %v2070 = vpop.permute.xlu0 %2069
    %2071 = vrot.lane.b32.xlu0 %v1518, 1
    %v2072 = vpop.permute.xlu0 %2071
    %v2073 = vsel %vm190, %v2070, 0.0
    %v2074 = vsel %vm190, %v2072, 0.0
    %v2075 = vsel %vm198, %v2073, 0.0
    %v2076 = vsel %vm199, %v2074, 0.0
    %v2077 = vrot.slane %v2075, 7
    %v2078 = vrot.slane %v2076, 7
    %v2079 = vsel %vm365, %v2077, %v2078
    %v2080 = vsel %vm365, %v2078, %v2077
    %s2081 = sld [smem:[#allocation10 + $0x12]]
    %v2082 = vstv %s2081
    %v2083 = vmul.f32 %v2082, %v2080
    %v2084 = vmul.f32 %v2082, %v2079
    %v2085 = vadd.f32 %v2049, %v2083
    %v2086 = vadd.f32 %v2050, %v2084
    %s2087 = sld [smem:[#allocation10 + $0x36]]
    %v2088 = vstv %s2087
    %v2089 = vmul.f32 %v2088, %v2080
    %v2090 = vmul.f32 %v2088, %v2079
    %v2091 = vadd.f32 %v2055, %v2089
    %v2092 = vadd.f32 %v2056, %v2090
    %s2093 = sld [smem:[#allocation10 + $0x5a]]
    %v2094 = vstv %s2093
    %v2095 = vmul.f32 %v2094, %v2080
    %v2096 = vmul.f32 %v2094, %v2079
    %v2097 = vadd.f32 %v2061, %v2095
    %v2098 = vadd.f32 %v2062, %v2096
    %s2099 = sld [smem:[#allocation10 + $0x7e]]
    %v2100 = vstv %s2099
    %v2101 = vmul.f32 %v2100, %v2080
    %v2102 = vmul.f32 %v2100, %v2079
    %v2103 = vadd.f32 %v2067, %v2101
    %v2104 = vadd.f32 %v2068, %v2102
    %s2105 = sld [smem:[#allocation10 + $0x15]]
    %v2106 = vstv %s2105
    %v2107 = vmul.f32 %v2106, %v2073
    %v2108 = vmul.f32 %v2106, %v2074
    %v2109 = vadd.f32 %v2085, %v2107
    %v2110 = vadd.f32 %v2086, %v2108
    %s2111 = sld [smem:[#allocation10 + $0x39]]
    %v2112 = vstv %s2111
    %v2113 = vmul.f32 %v2112, %v2073
    %v2114 = vmul.f32 %v2112, %v2074
    %v2115 = vadd.f32 %v2091, %v2113
    %v2116 = vadd.f32 %v2092, %v2114
    %s2117 = sld [smem:[#allocation10 + $0x5d]]
    %v2118 = vstv %s2117
    %v2119 = vmul.f32 %v2118, %v2073
    %v2120 = vmul.f32 %v2118, %v2074
    %v2121 = vadd.f32 %v2097, %v2119
    %v2122 = vadd.f32 %v2098, %v2120
    %s2123 = sld [smem:[#allocation10 + $0x81]]
    %v2124 = vstv %s2123
    %v2125 = vmul.f32 %v2124, %v2073
    %v2126 = vmul.f32 %v2124, %v2074
    %v2127 = vadd.f32 %v2103, %v2125
    %v2128 = vadd.f32 %v2104, %v2126
    %v2129 = vsel %vm200, %v2073, 0.0
    %v2130 = vsel %vm201, %v2074, 0.0
    %v2131 = vrot.slane %v2129, 1
    %v2132 = vrot.slane %v2130, 1
    %v2133 = vsel %vm412, %v2131, %v2132
    %v2134 = vsel %vm412, %v2132, %v2131
    %s2135 = sld [smem:[#allocation10 + $0x18]]
    %v2136 = vstv %s2135
    %v2137 = vmul.f32 %v2136, %v2133
    %v2138 = vmul.f32 %v2136, %v2134
    %v2139 = vadd.f32 %v2109, %v2137
    %v2140 = vadd.f32 %v2110, %v2138
    %s2141 = sld [smem:[#allocation10 + $0x3c]]
    %v2142 = vstv %s2141
    %v2143 = vmul.f32 %v2142, %v2133
    %v2144 = vmul.f32 %v2142, %v2134
    %v2145 = vadd.f32 %v2115, %v2143
    %v2146 = vadd.f32 %v2116, %v2144
    %s2147 = sld [smem:[#allocation10 + $0x60]]
    %v2148 = vstv %s2147
    %v2149 = vmul.f32 %v2148, %v2133
    %v2150 = vmul.f32 %v2148, %v2134
    %v2151 = vadd.f32 %v2121, %v2149
    %v2152 = vadd.f32 %v2122, %v2150
    %s2153 = sld [smem:[#allocation10 + $0x84]]
    %v2154 = vstv %s2153
    %v2155 = vmul.f32 %v2154, %v2133
    %v2156 = vmul.f32 %v2154, %v2134
    %v2157 = vadd.f32 %v2127, %v2155
    %v2158 = vadd.f32 %v2128, %v2156
    %v2159 = vsel %vm198, %v1517, 0.0
    %v2160 = vsel %vm199, %v1518, 0.0
    %v2161 = vrot.slane %v2159, 7
    %v2162 = vrot.slane %v2160, 7
    %v2163 = vsel %vm365, %v2161, %v2162
    %v2164 = vsel %vm365, %v2162, %v2161
    %s2165 = sld [smem:[#allocation10 + $0x13]]
    %v2166 = vstv %s2165
    %v2167 = vmul.f32 %v2166, %v2164
    %v2168 = vmul.f32 %v2166, %v2163
    %v2169 = vadd.f32 %v2139, %v2167
    %v2170 = vadd.f32 %v2140, %v2168
    %s2171 = sld [smem:[#allocation10 + $0x37]]
    %v2172 = vstv %s2171
    %v2173 = vmul.f32 %v2172, %v2164
    %v2174 = vmul.f32 %v2172, %v2163
    %v2175 = vadd.f32 %v2145, %v2173
    %v2176 = vadd.f32 %v2146, %v2174
    %s2177 = sld [smem:[#allocation10 + $0x5b]]
    %v2178 = vstv %s2177
    %v2179 = vmul.f32 %v2178, %v2164
    %v2180 = vmul.f32 %v2178, %v2163
    %v2181 = vadd.f32 %v2151, %v2179
    %v2182 = vadd.f32 %v2152, %v2180
    %s2183 = sld [smem:[#allocation10 + $0x7f]]
    %v2184 = vstv %s2183
    %v2185 = vmul.f32 %v2184, %v2164
    %v2186 = vmul.f32 %v2184, %v2163
    %v2187 = vadd.f32 %v2157, %v2185
    %v2188 = vadd.f32 %v2158, %v2186
    %s2189 = sld [smem:[#allocation10 + $0x16]]
    %v2190 = vstv %s2189
    %v2191 = vmul.f32 %v2190, %v1517
    %v2192 = vmul.f32 %v2190, %v1518
    %v2193 = vadd.f32 %v2169, %v2191
    %v2194 = vadd.f32 %v2170, %v2192
    %s2195 = sld [smem:[#allocation10 + $0x3a]]
    %v2196 = vstv %s2195
    %v2197 = vmul.f32 %v2196, %v1517
    %v2198 = vmul.f32 %v2196, %v1518
    %v2199 = vadd.f32 %v2175, %v2197
    %v2200 = vadd.f32 %v2176, %v2198
    %s2201 = sld [smem:[#allocation10 + $0x5e]]
    %v2202 = vstv %s2201
    %v2203 = vmul.f32 %v2202, %v1517
    %v2204 = vmul.f32 %v2202, %v1518
    %v2205 = vadd.f32 %v2181, %v2203
    %v2206 = vadd.f32 %v2182, %v2204
    %s2207 = sld [smem:[#allocation10 + $0x82]]
    %v2208 = vstv %s2207
    %v2209 = vmul.f32 %v2208, %v1517
    %v2210 = vmul.f32 %v2208, %v1518
    %v2211 = vadd.f32 %v2187, %v2209
    %v2212 = vadd.f32 %v2188, %v2210
    %v2213 = vsel %vm200, %v1517, 0.0
    %v2214 = vsel %vm201, %v1518, 0.0
    %v2215 = vrot.slane %v2213, 1
    %v2216 = vrot.slane %v2214, 1
    %v2217 = vsel %vm412, %v2215, %v2216
    %v2218 = vsel %vm412, %v2216, %v2215
    %s2219 = sld [smem:[#allocation10 + $0x19]]
    %v2220 = vstv %s2219
    %v2221 = vmul.f32 %v2220, %v2217
    %v2222 = vmul.f32 %v2220, %v2218
    %v2223 = vadd.f32 %v2193, %v2221
    %v2224 = vadd.f32 %v2194, %v2222
    %s2225 = sld [smem:[#allocation10 + $0x3d]]
    %v2226 = vstv %s2225
    %v2227 = vmul.f32 %v2226, %v2217
    %v2228 = vmul.f32 %v2226, %v2218
    %v2229 = vadd.f32 %v2199, %v2227
    %v2230 = vadd.f32 %v2200, %v2228
    %s2231 = sld [smem:[#allocation10 + $0x61]]
    %v2232 = vstv %s2231
    %v2233 = vmul.f32 %v2232, %v2217
    %v2234 = vmul.f32 %v2232, %v2218
    %v2235 = vadd.f32 %v2205, %v2233
    %v2236 = vadd.f32 %v2206, %v2234
    %s2237 = sld [smem:[#allocation10 + $0x85]]
    %v2238 = vstv %s2237
    %v2239 = vmul.f32 %v2238, %v2217
    %v2240 = vmul.f32 %v2238, %v2218
    %v2241 = vadd.f32 %v2211, %v2239
    %v2242 = vadd.f32 %v2212, %v2240
    %2243 = vrot.lane.b32.xlu0 %v1517, 127
    %v2244 = vpop.permute.xlu0 %2243
    %2245 = vrot.lane.b32.xlu0 %v1518, 127
    %v2246 = vpop.permute.xlu0 %2245
    %v2247 = vsel %vm197, %v2244, 0.0
    %v2248 = vsel %vm197, %v2246, 0.0
    %v2249 = vsel %vm198, %v2247, 0.0
    %v2250 = vsel %vm199, %v2248, 0.0
    %v2251 = vrot.slane %v2249, 7
    %v2252 = vrot.slane %v2250, 7
    %v2253 = vsel %vm365, %v2251, %v2252
    %v2254 = vsel %vm365, %v2252, %v2251
    %s2255 = sld [smem:[#allocation10 + $0x14]]
    %v2256 = vstv %s2255
    %v2257 = vmul.f32 %v2256, %v2254
    %v2258 = vmul.f32 %v2256, %v2253
    %v2259 = vadd.f32 %v2223, %v2257
    %v2260 = vadd.f32 %v2224, %v2258
    %s2261 = sld [smem:[#allocation10 + $0x38]]
    %v2262 = vstv %s2261
    %v2263 = vmul.f32 %v2262, %v2254
    %v2264 = vmul.f32 %v2262, %v2253
    %v2265 = vadd.f32 %v2229, %v2263
    %v2266 = vadd.f32 %v2230, %v2264
    %s2267 = sld [smem:[#allocation10 + $0x5c]]
    %v2268 = vstv %s2267
    %v2269 = vmul.f32 %v2268, %v2254
    %v2270 = vmul.f32 %v2268, %v2253
    %v2271 = vadd.f32 %v2235, %v2269
    %v2272 = vadd.f32 %v2236, %v2270
    %s2273 = sld [smem:[#allocation10 + $0x80]]
    %v2274 = vstv %s2273
    %v2275 = vmul.f32 %v2274, %v2254
    %v2276 = vmul.f32 %v2274, %v2253
    %v2277 = vadd.f32 %v2241, %v2275
    %v2278 = vadd.f32 %v2242, %v2276
    %s2279 = sld [smem:[#allocation10 + $0x17]]
    %v2280 = vstv %s2279
    %v2281 = vmul.f32 %v2280, %v2247
    %v2282 = vmul.f32 %v2280, %v2248
    %v2283 = vadd.f32 %v2259, %v2281
    %v2284 = vadd.f32 %v2260, %v2282
    %s2285 = sld [smem:[#allocation10 + $0x3b]]
    %v2286 = vstv %s2285
    %v2287 = vmul.f32 %v2286, %v2247
    %v2288 = vmul.f32 %v2286, %v2248
    %v2289 = vadd.f32 %v2265, %v2287
    %v2290 = vadd.f32 %v2266, %v2288
    %s2291 = sld [smem:[#allocation10 + $0x5f]]
    %v2292 = vstv %s2291
    %v2293 = vmul.f32 %v2292, %v2247
    %v2294 = vmul.f32 %v2292, %v2248
    %v2295 = vadd.f32 %v2271, %v2293
    %v2296 = vadd.f32 %v2272, %v2294
    %s2297 = sld [smem:[#allocation10 + $0x83]]
    %v2298 = vstv %s2297
    %v2299 = vmul.f32 %v2298, %v2247
    %v2300 = vmul.f32 %v2298, %v2248
    %v2301 = vadd.f32 %v2277, %v2299
    %v2302 = vadd.f32 %v2278, %v2300
    %v2303 = vsel %vm200, %v2247, 0.0
    %v2304 = vsel %vm201, %v2248, 0.0
    %v2305 = vrot.slane %v2303, 1
    %v2306 = vrot.slane %v2304, 1
    %v2307 = vsel %vm412, %v2305, %v2306
    %v2308 = vsel %vm412, %v2306, %v2305
    %s2309 = sld [smem:[#allocation10 + $0x1a]]
    %v2310 = vstv %s2309
    %v2311 = vmul.f32 %v2310, %v2307
    %v2312 = vmul.f32 %v2310, %v2308
    %v2313 = vadd.f32 %v2283, %v2311
    %v2314 = vadd.f32 %v2284, %v2312
    %s2315 = sld [smem:[#allocation10 + $0x3e]]
    %v2316 = vstv %s2315
    %v2317 = vmul.f32 %v2316, %v2307
    %v2318 = vmul.f32 %v2316, %v2308
    %v2319 = vadd.f32 %v2289, %v2317
    %v2320 = vadd.f32 %v2290, %v2318
    %s2321 = sld [smem:[#allocation10 + $0x62]]
    %v2322 = vstv %s2321
    %v2323 = vmul.f32 %v2322, %v2307
    %v2324 = vmul.f32 %v2322, %v2308
    %v2325 = vadd.f32 %v2295, %v2323
    %v2326 = vadd.f32 %v2296, %v2324
    %s2327 = sld [smem:[#allocation10 + $0x86]]
    %v2328 = vstv %s2327
    %v2329 = vmul.f32 %v2328, %v2307
    %v2330 = vmul.f32 %v2328, %v2308
    %v2331 = vadd.f32 %v2301, %v2329
    %v2332 = vadd.f32 %v2302, %v2330
    %2333 = vrot.lane.b32.xlu0 %v1547, 1
    %v2334 = vpop.permute.xlu0 %2333
    %2335 = vrot.lane.b32.xlu0 %v1548, 1
    %v2336 = vpop.permute.xlu0 %2335
    %v2337 = vsel %vm190, %v2334, 0.0
    %v2338 = vsel %vm190, %v2336, 0.0
    %v2339 = vsel %vm198, %v2337, 0.0
    %v2340 = vsel %vm199, %v2338, 0.0
    %v2341 = vrot.slane %v2339, 7
    %v2342 = vrot.slane %v2340, 7
    %v2343 = vsel %vm365, %v2341, %v2342
    %v2344 = vsel %vm365, %v2342, %v2341
    %s2345 = sld [smem:[#allocation10 + $0x1b]]
    %v2346 = vstv %s2345
    %v2347 = vmul.f32 %v2346, %v2344
    %v2348 = vmul.f32 %v2346, %v2343
    %v2349 = vadd.f32 %v2313, %v2347
    %v2350 = vadd.f32 %v2314, %v2348
    %s2351 = sld [smem:[#allocation10 + $0x3f]]
    %v2352 = vstv %s2351
    %v2353 = vmul.f32 %v2352, %v2344
    %v2354 = vmul.f32 %v2352, %v2343
    %v2355 = vadd.f32 %v2319, %v2353
    %v2356 = vadd.f32 %v2320, %v2354
    %s2357 = sld [smem:[#allocation10 + $0x63]]
    %v2358 = vstv %s2357
    %v2359 = vmul.f32 %v2358, %v2344
    %v2360 = vmul.f32 %v2358, %v2343
    %v2361 = vadd.f32 %v2325, %v2359
    %v2362 = vadd.f32 %v2326, %v2360
    %s2363 = sld [smem:[#allocation10 + $0x87]]
    %v2364 = vstv %s2363
    %v2365 = vmul.f32 %v2364, %v2344
    %v2366 = vmul.f32 %v2364, %v2343
    %v2367 = vadd.f32 %v2331, %v2365
    %v2368 = vadd.f32 %v2332, %v2366
    %s2369 = sld [smem:[#allocation10 + $0x1e]]
    %v2370 = vstv %s2369
    %v2371 = vmul.f32 %v2370, %v2337
    %v2372 = vmul.f32 %v2370, %v2338
    %v2373 = vadd.f32 %v2349, %v2371
    %v2374 = vadd.f32 %v2350, %v2372
    %s2375 = sld [smem:[#allocation10 + $0x42]]
    %v2376 = vstv %s2375
    %v2377 = vmul.f32 %v2376, %v2337
    %v2378 = vmul.f32 %v2376, %v2338
    %v2379 = vadd.f32 %v2355, %v2377
    %v2380 = vadd.f32 %v2356, %v2378
    %s2381 = sld [smem:[#allocation10 + $0x66]]
    %v2382 = vstv %s2381
    %v2383 = vmul.f32 %v2382, %v2337
    %v2384 = vmul.f32 %v2382, %v2338
    %v2385 = vadd.f32 %v2361, %v2383
    %v2386 = vadd.f32 %v2362, %v2384
    %s2387 = sld [smem:[#allocation10 + $0x8a]]
    %v2388 = vstv %s2387
    %v2389 = vmul.f32 %v2388, %v2337
    %v2390 = vmul.f32 %v2388, %v2338
    %v2391 = vadd.f32 %v2367, %v2389
    %v2392 = vadd.f32 %v2368, %v2390
    %v2393 = vsel %vm200, %v2337, 0.0
    %v2394 = vsel %vm201, %v2338, 0.0
    %v2395 = vrot.slane %v2393, 1
    %v2396 = vrot.slane %v2394, 1
    %v2397 = vsel %vm412, %v2395, %v2396
    %v2398 = vsel %vm412, %v2396, %v2395
    %s2399 = sld [smem:[#allocation10 + $0x21]]
    %v2400 = vstv %s2399
    %v2401 = vmul.f32 %v2400, %v2397
    %v2402 = vmul.f32 %v2400, %v2398
    %v2403 = vadd.f32 %v2373, %v2401
    %v2404 = vadd.f32 %v2374, %v2402
    %s2405 = sld [smem:[#allocation10 + $0x45]]
    %v2406 = vstv %s2405
    %v2407 = vmul.f32 %v2406, %v2397
    %v2408 = vmul.f32 %v2406, %v2398
    %v2409 = vadd.f32 %v2379, %v2407
    %v2410 = vadd.f32 %v2380, %v2408
    %s2411 = sld [smem:[#allocation10 + $0x69]]
    %v2412 = vstv %s2411
    %v2413 = vmul.f32 %v2412, %v2397
    %v2414 = vmul.f32 %v2412, %v2398
    %v2415 = vadd.f32 %v2385, %v2413
    %v2416 = vadd.f32 %v2386, %v2414
    %s2417 = sld [smem:[#allocation10 + $0x8d]]
    %v2418 = vstv %s2417
    %v2419 = vmul.f32 %v2418, %v2397
    %v2420 = vmul.f32 %v2418, %v2398
    %v2421 = vadd.f32 %v2391, %v2419
    %v2422 = vadd.f32 %v2392, %v2420
    %v2423 = vsel %vm198, %v1547, 0.0
    %v2424 = vsel %vm199, %v1548, 0.0
    %v2425 = vrot.slane %v2423, 7
    %v2426 = vrot.slane %v2424, 7
    %v2427 = vsel %vm365, %v2425, %v2426
    %v2428 = vsel %vm365, %v2426, %v2425
    %s2429 = sld [smem:[#allocation10 + $0x1c]]
    %v2430 = vstv %s2429
    %v2431 = vmul.f32 %v2430, %v2428
    %v2432 = vmul.f32 %v2430, %v2427
    %v2433 = vadd.f32 %v2403, %v2431
    %v2434 = vadd.f32 %v2404, %v2432
    %s2435 = sld [smem:[#allocation10 + $0x40]]
    %v2436 = vstv %s2435
    %v2437 = vmul.f32 %v2436, %v2428
    %v2438 = vmul.f32 %v2436, %v2427
    %v2439 = vadd.f32 %v2409, %v2437
    %v2440 = vadd.f32 %v2410, %v2438
    %s2441 = sld [smem:[#allocation10 + $0x64]]
    %v2442 = vstv %s2441
    %v2443 = vmul.f32 %v2442, %v2428
    %v2444 = vmul.f32 %v2442, %v2427
    %v2445 = vadd.f32 %v2415, %v2443
    %v2446 = vadd.f32 %v2416, %v2444
    %s2447 = sld [smem:[#allocation10 + $0x88]]
    %v2448 = vstv %s2447
    %v2449 = vmul.f32 %v2448, %v2428
    %v2450 = vmul.f32 %v2448, %v2427
    %v2451 = vadd.f32 %v2421, %v2449
    %v2452 = vadd.f32 %v2422, %v2450
    %s2453 = sld [smem:[#allocation10 + $0x1f]]
    %v2454 = vstv %s2453
    %v2455 = vmul.f32 %v2454, %v1547
    %v2456 = vmul.f32 %v2454, %v1548
    %v2457 = vadd.f32 %v2433, %v2455
    %v2458 = vadd.f32 %v2434, %v2456
    %s2459 = sld [smem:[#allocation10 + $0x43]]
    %v2460 = vstv %s2459
    %v2461 = vmul.f32 %v2460, %v1547
    %v2462 = vmul.f32 %v2460, %v1548
    %v2463 = vadd.f32 %v2439, %v2461
    %v2464 = vadd.f32 %v2440, %v2462
    %s2465 = sld [smem:[#allocation10 + $0x67]]
    %v2466 = vstv %s2465
    %v2467 = vmul.f32 %v2466, %v1547
    %v2468 = vmul.f32 %v2466, %v1548
    %v2469 = vadd.f32 %v2445, %v2467
    %v2470 = vadd.f32 %v2446, %v2468
    %s2471 = sld [smem:[#allocation10 + $0x8b]]
    %v2472 = vstv %s2471
    %v2473 = vmul.f32 %v2472, %v1547
    %v2474 = vmul.f32 %v2472, %v1548
    %v2475 = vadd.f32 %v2451, %v2473
    %v2476 = vadd.f32 %v2452, %v2474
    %v2477 = vsel %vm200, %v1547, 0.0
    %v2478 = vsel %vm201, %v1548, 0.0
    %v2479 = vrot.slane %v2477, 1
    %v2480 = vrot.slane %v2478, 1
    %v2481 = vsel %vm412, %v2479, %v2480
    %v2482 = vsel %vm412, %v2480, %v2479
    %s2483 = sld [smem:[#allocation10 + $0x22]]
    %v2484 = vstv %s2483
    %v2485 = vmul.f32 %v2484, %v2481
    %v2486 = vmul.f32 %v2484, %v2482
    %v2487 = vadd.f32 %v2457, %v2485
    %v2488 = vadd.f32 %v2458, %v2486
    %s2489 = sld [smem:[#allocation10 + $0x46]]
    %v2490 = vstv %s2489
    %v2491 = vmul.f32 %v2490, %v2481
    %v2492 = vmul.f32 %v2490, %v2482
    %v2493 = vadd.f32 %v2463, %v2491
    %v2494 = vadd.f32 %v2464, %v2492
    %s2495 = sld [smem:[#allocation10 + $0x6a]]
    %v2496 = vstv %s2495
    %v2497 = vmul.f32 %v2496, %v2481
    %v2498 = vmul.f32 %v2496, %v2482
    %v2499 = vadd.f32 %v2469, %v2497
    %v2500 = vadd.f32 %v2470, %v2498
    %s2501 = sld [smem:[#allocation10 + $0x8e]]
    %v2502 = vstv %s2501
    %v2503 = vmul.f32 %v2502, %v2481
    %v2504 = vmul.f32 %v2502, %v2482
    %v2505 = vadd.f32 %v2475, %v2503
    %v2506 = vadd.f32 %v2476, %v2504
    %2507 = vrot.lane.b32.xlu0 %v1547, 127
    %v2508 = vpop.permute.xlu0 %2507
    %2509 = vrot.lane.b32.xlu0 %v1548, 127
    %v2510 = vpop.permute.xlu0 %2509
    %v2511 = vsel %vm197, %v2508, 0.0
    %v2512 = vsel %vm197, %v2510, 0.0
    %v2513 = vsel %vm198, %v2511, 0.0
    %v2514 = vsel %vm199, %v2512, 0.0
    %v2515 = vrot.slane %v2513, 7
    %v2516 = vrot.slane %v2514, 7
    %v2517 = vsel %vm365, %v2515, %v2516
    %v2518 = vsel %vm365, %v2516, %v2515
    %s2519 = sld [smem:[#allocation10 + $0x1d]]
    %v2520 = vstv %s2519
    %v2521 = vmul.f32 %v2520, %v2518
    %v2522 = vmul.f32 %v2520, %v2517
    %v2523 = vadd.f32 %v2487, %v2521
    %v2524 = vadd.f32 %v2488, %v2522
    %s2525 = sld [smem:[#allocation10 + $0x41]]
    %v2526 = vstv %s2525
    %v2527 = vmul.f32 %v2526, %v2518
    %v2528 = vmul.f32 %v2526, %v2517
    %v2529 = vadd.f32 %v2493, %v2527
    %v2530 = vadd.f32 %v2494, %v2528
    %s2531 = sld [smem:[#allocation10 + $0x65]]
    %v2532 = vstv %s2531
    %v2533 = vmul.f32 %v2532, %v2518
    %v2534 = vmul.f32 %v2532, %v2517
    %v2535 = vadd.f32 %v2499, %v2533
    %v2536 = vadd.f32 %v2500, %v2534
    %s2537 = sld [smem:[#allocation10 + $0x89]]
    %v2538 = vstv %s2537
    %v2539 = vmul.f32 %v2538, %v2518
    %v2540 = vmul.f32 %v2538, %v2517
    %v2541 = vadd.f32 %v2505, %v2539
    %v2542 = vadd.f32 %v2506, %v2540
    %s2543 = sld [smem:[#allocation10 + $0x20]]
    %v2544 = vstv %s2543
    %v2545 = vmul.f32 %v2544, %v2511
    %v2546 = vmul.f32 %v2544, %v2512
    %v2547 = vadd.f32 %v2523, %v2545
    %v2548 = vadd.f32 %v2524, %v2546
    %s2549 = sld [smem:[#allocation10 + $0x44]]
    %v2550 = vstv %s2549
    %v2551 = vmul.f32 %v2550, %v2511
    %v2552 = vmul.f32 %v2550, %v2512
    %v2553 = vadd.f32 %v2529, %v2551
    %v2554 = vadd.f32 %v2530, %v2552
    %s2555 = sld [smem:[#allocation10 + $0x68]]
    %v2556 = vstv %s2555
    %v2557 = vmul.f32 %v2556, %v2511
    %v2558 = vmul.f32 %v2556, %v2512
    %v2559 = vadd.f32 %v2535, %v2557
    %v2560 = vadd.f32 %v2536, %v2558
    %s2561 = sld [smem:[#allocation10 + $0x8c]]
    %v2562 = vstv %s2561
    %v2563 = vmul.f32 %v2562, %v2511
    %v2564 = vmul.f32 %v2562, %v2512
    %v2565 = vadd.f32 %v2541, %v2563
    %v2566 = vadd.f32 %v2542, %v2564
    %v2567 = vsel %vm200, %v2511, 0.0
    %v2568 = vsel %vm201, %v2512, 0.0
    %v2569 = vrot.slane %v2567, 1
    %v2570 = vrot.slane %v2568, 1
    %v2571 = vsel %vm412, %v2569, %v2570
    %v2572 = vsel %vm412, %v2570, %v2569
    %s2573 = sld [smem:[#allocation10 + $0x23]]
    %v2574 = vstv %s2573
    %v2575 = vmul.f32 %v2574, %v2571
    %v2576 = vmul.f32 %v2574, %v2572
    %v2577 = vadd.f32 %v2547, %v2575
    %v2578 = vadd.f32 %v2548, %v2576
    %s2579 = sld [smem:[#allocation10 + $0x47]]
    %v2580 = vstv %s2579
    %v2581 = vmul.f32 %v2580, %v2571
    %v2582 = vmul.f32 %v2580, %v2572
    %v2583 = vadd.f32 %v2553, %v2581
    %v2584 = vadd.f32 %v2554, %v2582
    %s2585 = sld [smem:[#allocation10 + $0x6b]]
    %v2586 = vstv %s2585
    %v2587 = vmul.f32 %v2586, %v2571
    %v2588 = vmul.f32 %v2586, %v2572
    %v2589 = vadd.f32 %v2559, %v2587
    %v2590 = vadd.f32 %v2560, %v2588
    %s2591 = sld [smem:[#allocation10 + $0x8f]]
    %v2592 = vstv %s2591
    %v2593 = vmul.f32 %v2592, %v2571
    %v2594 = vmul.f32 %v2592, %v2572
    %v2595 = vadd.f32 %v2565, %v2593
    %v2596 = vadd.f32 %v2566, %v2594
    %s2597 = sld [smem:[#allocation11]]
    %v2598 = vstv %s2597
    %v2599 = vadd.f32 %v2577, %v2598
    %v2600 = vadd.f32 %v2578, %v2598
    %s2601 = sld [smem:[#allocation11 + $0x1]]
    %v2602 = vstv %s2601
    %v2603 = vadd.f32 %v2583, %v2602
    %v2604 = vadd.f32 %v2584, %v2602
    %s2605 = sld [smem:[#allocation11 + $0x2]]
    %v2606 = vstv %s2605
    %v2607 = vadd.f32 %v2589, %v2606
    %v2608 = vadd.f32 %v2590, %v2606
    %s2609 = sld [smem:[#allocation11 + $0x3]]
    %v2610 = vstv %s2609
    %v2611 = vadd.f32 %v2595, %v2610
    %v2612 = vadd.f32 %v2596, %v2610
    %2613 = vst [vmem:[#allocation2] sm:$0xff] %v2599
    %2614 = vst [vmem:[#allocation2 + $0x8] sm:$0xff] %v2600
    %2615 = vst [vmem:[%s111] sm:$0xff] %v2603
    %2616 = vst [vmem:[%s111 + $0x8] sm:$0xff] %v2604
    %2617 = vst [vmem:[%s117] sm:$0xff] %v2607
    %2618 = vst [vmem:[%s117 + $0x8] sm:$0xff] %v2608
    %2619 = vst [vmem:[%s123] sm:$0xff] %v2611
    %2620 = vst [vmem:[%s123 + $0x8] sm:$0xff] %v2612
    %v2621 = vld [vmem:[#allocation2] sm:$0xff]
    %v2622 = vld [vmem:[#allocation2 + $0x8] sm:$0xff]
    %v2623 = vld [vmem:[#allocation3] sm:$0xff]
    %v2624 = vld [vmem:[#allocation3 + $0x8] sm:$0xff]
    %v2625 = vadd.f32 %v2621, %v2623
    %v2626 = vadd.f32 %v2622, %v2624
    %2627 = vst.msk [vmem:[#allocation13] sm:$0xff] %vm105, %v2625
    %2628 = vst.msk [vmem:[#allocation13 + $0x8] sm:$0xff] %vm105, %v2626
    %v2629 = vld [vmem:[%s111] sm:$0xff]
    %v2630 = vld [vmem:[%s111 + $0x8] sm:$0xff]
    %v2631 = vld [vmem:[%s108] sm:$0xff]
    %v2632 = vld [vmem:[%s108 + $0x8] sm:$0xff]
    %v2633 = vadd.f32 %v2629, %v2631
    %v2634 = vadd.f32 %v2630, %v2632
    %s2635 = scalar_lea.vmem [#allocation13], 16
    %2636 = vst.msk [vmem:[%s2635] sm:$0xff] %vm105, %v2633
    %2637 = vst.msk [vmem:[%s2635 + $0x8] sm:$0xff] %vm105, %v2634
    %v2638 = vld [vmem:[%s117] sm:$0xff]
    %v2639 = vld [vmem:[%s117 + $0x8] sm:$0xff]
    %v2640 = vld [vmem:[%s114] sm:$0xff]
    %v2641 = vld [vmem:[%s114 + $0x8] sm:$0xff]
    %v2642 = vadd.f32 %v2638, %v2640
    %v2643 = vadd.f32 %v2639, %v2641
    %s2644 = scalar_lea.vmem [#allocation13], 32
    %2645 = vst.msk [vmem:[%s2644] sm:$0xff] %vm105, %v2642
    %2646 = vst.msk [vmem:[%s2644 + $0x8] sm:$0xff] %vm105, %v2643
    %v2647 = vld [vmem:[%s123] sm:$0xff]
    %v2648 = vld [vmem:[%s123 + $0x8] sm:$0xff]
    %v2649 = vld [vmem:[%s120] sm:$0xff]
    %v2650 = vld [vmem:[%s120 + $0x8] sm:$0xff]
    %v2651 = vadd.f32 %v2647, %v2649
    %v2652 = vadd.f32 %v2648, %v2650
    %s2653 = scalar_lea.vmem [#allocation13], 48
    %2654 = vst.msk [vmem:[%s2653] sm:$0xff] %vm105, %v2651
    %2655 = vst.msk [vmem:[%s2653 + $0x8] sm:$0xff] %vm105, %v2652
    %v2656 = vld [vmem:[#allocation2] sm:$0xff]
    %v2657 = vld [vmem:[#allocation2 + $0x8] sm:$0xff]
    %v2658 = vld [vmem:[%s126] sm:$0xff]
    %v2659 = vld [vmem:[%s126 + $0x8] sm:$0xff]
    %2662 = vrot.lane.b32.xlu0 %v2658, 16
    %v2663 = vpop.permute.xlu0 %2662
    %2664 = vrot.lane.b32.xlu0 %v2659, 16
    %v2665 = vpop.permute.xlu0 %2664
    %v2668 = vadd.f32 %v2656, %v2663
    %v2669 = vadd.f32 %v2657, %v2665
    %2672 = vrot.lane.b32.xlu0 %v2668, 112
    %v2673 = vpop.permute.xlu0 %2672
    %2674 = vrot.lane.b32.xlu0 %v2669, 112
    %v2675 = vpop.permute.xlu0 %2674
    %s2678 = scalar_lea.vmem [#allocation13], 64
    %2679 = vst.msk [vmem:[%s2678] sm:$0xff] %vm105, %v2673
    %2680 = vst.msk [vmem:[%s2678 + $0x8] sm:$0xff] %vm105, %v2675
    %v2681 = vld [vmem:[%s111] sm:$0xff]
    %v2682 = vld [vmem:[%s111 + $0x8] sm:$0xff]
    %v2683 = vld [vmem:[%s140] sm:$0xff]
    %v2684 = vld [vmem:[%s140 + $0x8] sm:$0xff]
    %2687 = vrot.lane.b32.xlu0 %v2683, 16
    %v2688 = vpop.permute.xlu0 %2687
    %2689 = vrot.lane.b32.xlu0 %v2684, 16
    %v2690 = vpop.permute.xlu0 %2689
    %v2693 = vadd.f32 %v2681, %v2688
    %v2694 = vadd.f32 %v2682, %v2690
    %2697 = vrot.lane.b32.xlu0 %v2693, 112
    %v2698 = vpop.permute.xlu0 %2697
    %2699 = vrot.lane.b32.xlu0 %v2694, 112
    %v2700 = vpop.permute.xlu0 %2699
    %s2703 = scalar_lea.vmem [#allocation13], 80
    %2704 = vst.msk [vmem:[%s2703] sm:$0xff] %vm105, %v2698
    %2705 = vst.msk [vmem:[%s2703 + $0x8] sm:$0xff] %vm105, %v2700
    %v2706 = vld [vmem:[%s117] sm:$0xff]
    %v2707 = vld [vmem:[%s117 + $0x8] sm:$0xff]
    %v2708 = vld [vmem:[%s153] sm:$0xff]
    %v2709 = vld [vmem:[%s153 + $0x8] sm:$0xff]
    %2712 = vrot.lane.b32.xlu0 %v2708, 16
    %v2713 = vpop.permute.xlu0 %2712
    %2714 = vrot.lane.b32.xlu0 %v2709, 16
    %v2715 = vpop.permute.xlu0 %2714
    %v2718 = vadd.f32 %v2706, %v2713
    %v2719 = vadd.f32 %v2707, %v2715
    %2722 = vrot.lane.b32.xlu0 %v2718, 112
    %v2723 = vpop.permute.xlu0 %2722
    %2724 = vrot.lane.b32.xlu0 %v2719, 112
    %v2725 = vpop.permute.xlu0 %2724
    %s2728 = scalar_lea.vmem [#allocation13], 96
    %2729 = vst.msk [vmem:[%s2728] sm:$0xff] %vm105, %v2723
    %2730 = vst.msk [vmem:[%s2728 + $0x8] sm:$0xff] %vm105, %v2725
    %v2731 = vld [vmem:[%s123] sm:$0xff]
    %v2732 = vld [vmem:[%s123 + $0x8] sm:$0xff]
    %v2733 = vld [vmem:[%s166] sm:$0xff]
    %v2734 = vld [vmem:[%s166 + $0x8] sm:$0xff]
    %2737 = vrot.lane.b32.xlu0 %v2733, 16
    %v2738 = vpop.permute.xlu0 %2737
    %2739 = vrot.lane.b32.xlu0 %v2734, 16
    %v2740 = vpop.permute.xlu0 %2739
    %v2743 = vadd.f32 %v2731, %v2738
    %v2744 = vadd.f32 %v2732, %v2740
    %2747 = vrot.lane.b32.xlu0 %v2743, 112
    %v2748 = vpop.permute.xlu0 %2747
    %2749 = vrot.lane.b32.xlu0 %v2744, 112
    %v2750 = vpop.permute.xlu0 %2749
    %s2753 = scalar_lea.vmem [#allocation13], 112
    %2754 = vst.msk [vmem:[%s2753] sm:$0xff] %vm105, %v2748
    %2755 = vst.msk [vmem:[%s2753 + $0x8] sm:$0xff] %vm105, %v2750
    // Predicated region
    $region58: #{tpu_custom_call.1} parent=1 // pred_check
      _
    $region59: #{tpu_custom_call.1} parent=1 // pred_check_branch
      %2757 = sbr.rel (0) target = $region61
    $region60: #{tpu_custom_call.1} parent=1 // pred_region
      %s2759 = ssub.s32 2048, 2048
      %2760 = vsyncadd [#allocation5], %s2759
      %s2761 = sshll.u32 [#allocation13], 4
      %s2762 = int_to_ptr.vmem [resolvable:$true] %s2761
      %2767 = dma.vmem_to_hbm [thread:$0]  %s2762, 2048, %s9, [#allocation5], 128, 128, 8
    $region61: #{tpu_custom_call.1} parent=1 // pred_fallthru
      _
    // Predicated region
    $region62: #{tpu_custom_call.1} parent=1 // pred_check
      _
    $region63: #{tpu_custom_call.1} parent=1 // pred_check_branch
      %2769 = sbr.rel (0) target = $region65
    $region64: #{tpu_custom_call.1} parent=1 // pred_region
      %2770 = dma.done [#allocation5], 2048
    $region65: #{tpu_custom_call.1} parent=1 // pred_fallthru
      _
    %2771 = vsyncpa [#allocation4], 1
    %2772 = vsyncpa [#allocation5], 1
    %2773 = vsyncpa [#allocation6], 1
    %2774 = vsyncpa [#allocation9], 1
    %2775 = vsyncpa [#allocation12], 1

</llo_original>
